<compile_context>
chip_gen: v6e
topology: v6e:2x2x1
jax: 0.10.0
libtpu: 0.0.40
codegen_flags: <defaults>
</compile_context>

<pallas_src>
import functools

import jax
import jax.numpy as jnp
from jax.experimental import pallas as pl
from jax.experimental.pallas import tpu as pltpu

NEG_SLOPE = 0.01  # nn.LeakyReLU default
_LANE = 128
_SUBLANE = 8


def _leaky_relu(x):
    return jnp.where(x > 0, x, NEG_SLOPE * x)


def _round_up(x, m):
    return (x + m - 1) // m * m


# --------------------------------------------------------------------------- #
# Kernel
# --------------------------------------------------------------------------- #
def _mlp_kernel(x_ref, w1_ref, b1_ref, w2_ref, b2_ref, o_ref):
    # x_ref:  (TB, D_in)       f32 (cast to bf16 here, MXU inputs are bf16)
    # w1_ref: (D_in, MID)      bf16    b1_ref: (1, MID)       f32
    # w2_ref: (MID, D_out_p)   bf16    b2_ref: (1, D_out_p)   f32
    # o_ref:  (TB, D_out_p)    caller dtype
    x = x_ref[...].astype(jnp.bfloat16)
    h = jnp.dot(x, w1_ref[...], preferred_element_type=jnp.float32)
    h += b1_ref[...]                      # implicit (1, MID) broadcast, f32
    h = _leaky_relu(h)

    # Dropout(p=0.5): identity (eval-mode forward).

    y = jnp.dot(h.astype(jnp.bfloat16), w2_ref[...],
                preferred_element_type=jnp.float32)
    y += b2_ref[...]
    o_ref[...] = _leaky_relu(y).astype(o_ref.dtype)


# --------------------------------------------------------------------------- #
# One-time parameter preparation (hoisted out of the per-call path)
# --------------------------------------------------------------------------- #
def prepare_context_encoder_params(w1, b1, w2, b2):
    """Cast weights to bf16 and lane-pad the output dim ONCE (call at init)."""
    d_in, mid = w1.shape
    d_out = w2.shape[1]
    d_out_p = _round_up(d_out, _LANE)

    w1_bf = jnp.asarray(w1, jnp.bfloat16)
    b1_2d = jnp.asarray(b1, jnp.float32).reshape(1, mid)
    if d_out_p == d_out:
        w2_bf = jnp.asarray(w2, jnp.bfloat16)
        b2_2d = jnp.asarray(b2, jnp.float32).reshape(1, d_out)
    else:
        w2_bf = jnp.zeros((mid, d_out_p), jnp.bfloat16).at[:, :d_out].set(
            jnp.asarray(w2, jnp.bfloat16))
        b2_2d = jnp.zeros((1, d_out_p), jnp.float32).at[:, :d_out].set(
            jnp.asarray(b2, jnp.float32).reshape(1, d_out))
    return {"w1": w1_bf, "b1": b1_2d, "w2": w2_bf, "b2": b2_2d,
            "d_in": d_in, "d_out": d_out}


# --------------------------------------------------------------------------- #
# Wrapper
# --------------------------------------------------------------------------- #
@functools.lru_cache(maxsize=1)
def _num_tensorcores_per_chip():
    """2 on v7x (megacore sharding via 'parallel' grid axes), else 1."""
    try:
        kind = jax.devices()[0].device_kind.lower()
    except Exception:
        return 1
    return 2 if ("v7" in kind or "7x" in kind) else 1


def _pick_batch_tile(batch, batch_tile, num_cores):
    batch_tile = max(_SUBLANE, _round_up(batch_tile, _SUBLANE))
    if batch > batch_tile:
        return batch_tile
    # Whole batch fits in one tile.
    if num_cores >= 2 and batch >= 2 * _LANE:
        # Split so both TensorCores get a 128-aligned block (v7x only).
        return _round_up(pl.cdiv(batch, 2), _LANE)
    gran = _LANE if batch >= _LANE else _SUBLANE
    return min(_round_up(batch, gran), batch_tile)


def context_encoder_forward(x, params, *, batch_tile=512):
    """Fused ContextEncoder forward.  `params` comes from
    prepare_context_encoder_params (bf16 weights, f32 biases)."""
    w1_bf, b1_2d = params["w1"], params["b1"]
    w2_bf, b2_2d = params["w2"], params["b2"]
    d_out = params["d_out"]

    batch, d_in = x.shape
    assert d_in == params["d_in"], (d_in, params["d_in"])
    mid = w1_bf.shape[1]
    d_out_p = w2_bf.shape[1]

    tb = _pick_batch_tile(batch, batch_tile, _num_tensorcores_per_chip())
    grid = (pl.cdiv(batch, tb),)

    out_dtype = x.dtype
    x_bytes = jnp.dtype(x.dtype).itemsize
    out_bytes = jnp.dtype(out_dtype).itemsize

    # ---- explicit VMEM budget -------------------------------------------- #
    vmem_est = (
        2 * tb * d_in * x_bytes          # x blocks (double-buffered)
        + 2 * d_in * mid * 2             # w1 bf16 (2 pipeline bufs, DMA'd once)
        + 2 * mid * d_out_p * 2          # w2 bf16
        + 2 * (mid + d_out_p) * 4        # biases (f32)
        + 2 * tb * d_out_p * out_bytes   # output blocks
        + tb * mid * 4                   # layer-1 activation (f32)
    )
    # Always set explicitly: v5e's scoped default is 16 MiB; cap at 48 MiB to
    # leave Mosaic scratch headroom under v7x's 64 MiB physical VMEM.
    vmem_limit = int(min(48 << 20, max(24 << 20, 2 * vmem_est)))

    out = pl.pallas_call(
        _mlp_kernel,
        out_shape=jax.ShapeDtypeStruct((batch, d_out_p), out_dtype),
        grid_spec=pltpu.PrefetchScalarGridSpec(
            num_scalar_prefetch=0,
            grid=grid,
            in_specs=[
                pl.BlockSpec((tb, d_in), lambda i: (i, 0)),
                pl.BlockSpec((d_in, mid), lambda i: (0, 0)),
                pl.BlockSpec((1, mid), lambda i: (0, 0)),
                pl.BlockSpec((mid, d_out_p), lambda i: (0, 0)),
                pl.BlockSpec((1, d_out_p), lambda i: (0, 0)),
            ],
            out_specs=pl.BlockSpec((tb, d_out_p), lambda i: (i, 0)),
        ),
        compiler_params=pltpu.CompilerParams(
            dimension_semantics=("parallel",),
            vmem_limit_bytes=vmem_limit,
        ),
    )(x, w1_bf, b1_2d, w2_bf, b2_2d)

    if d_out_p != d_out:
        out = out[:, :d_out]
    return out


# --------------------------------------------------------------------------- #
# References
# --------------------------------------------------------------------------- #
def reference_forward_f32(x, w1, b1, w2, b2):
    h = _leaky_relu(x @ w1 + b1)
    return _leaky_relu(h @ w2 + b2)


def reference_forward_bf16(x, w1, b1, w2, b2):
    """Mirrors the kernel's precision: bf16 MXU inputs, f32 accumulate/epilogue."""
    h = jnp.dot(x.astype(jnp.bfloat16), w1.astype(jnp.bfloat16),
                preferred_element_type=jnp.float32) + b1
    h = _leaky_relu(h)
    y = jnp.dot(h.astype(jnp.bfloat16), w2.astype(jnp.bfloat16),
                preferred_element_type=jnp.float32) + b2
    return _leaky_relu(y)


if __name__ == "__main__":
    # Real module dimensions: Linear(1864 -> 1024) -> Linear(1024 -> 2*64).
    INPUT_DIM = 1864
    HIDDEN = 64
    MID = 1024
    D_OUT = 2 * HIDDEN  # 128 (already lane-aligned)

    key = jax.random.PRNGKey(0)
    kx, k1, k2, k3, k4 = jax.random.split(key, 5)

    # PyTorch-Linear-like init scale (bound = 1/sqrt(fan_in)).
    w1 = jax.random.uniform(k1, (INPUT_DIM, MID), jnp.float32, -1.0, 1.0) / jnp.sqrt(INPUT_DIM)
    b1 = jax.random.uniform(k2, (MID,), jnp.float32, -1.0, 1.0) / jnp.sqrt(INPUT_DIM)
    w2 = jax.random.uniform(k3, (MID, D_OUT), jnp.float32, -1.0, 1.0) / jnp.sqrt(MID)
    b2 = jax.random.uniform(k4, (D_OUT,), jnp.float32, -1.0, 1.0) / jnp.sqrt(MID)

    # One-time weight preparation (hoisted out of the per-call path).
    params = prepare_context_encoder_params(w1, b1, w2, b2)

    # (B, batch_tile): a small single-block case and a multi-grid-step case.
    for B, bt in ((8, 512), (512, 256)):
        xb = jax.random.normal(jax.random.fold_in(kx, B), (B, INPUT_DIM), jnp.float32)
        out = jax.block_until_ready(context_encoder_forward(xb, params, batch_tile=bt))
        assert out.shape == (B, D_OUT), out.shape

        ref_bf16 = reference_forward_bf16(xb, w1, b1, w2, b2)
        ref_f32 = reference_forward_f32(xb, w1, b1, w2, b2)
        assert jnp.allclose(out, ref_bf16, atol=2e-3, rtol=2e-3), \
            "mismatch vs precision-matched (bf16 MXU) reference"
        assert jnp.allclose(out, ref_f32, atol=5e-2, rtol=5e-2), \
            "mismatch vs f32 reference"

    print("KERNEL_OK")
</pallas_src>

<mosaic_0001>
module attributes {stable_mosaic.version = 11 : i64} {
  func.func @_mlp_kernel(%arg0: i32, %arg1: memref<8x1864xf32, #tpu.memory_space<vmem>>, %arg2: memref<1864x1024xbf16, #tpu.memory_space<vmem>>, %arg3: memref<1x1024xf32, #tpu.memory_space<vmem>>, %arg4: memref<1024x128xbf16, #tpu.memory_space<vmem>>, %arg5: memref<1x128xf32, #tpu.memory_space<vmem>>, %arg6: memref<8x128xf32, #tpu.memory_space<vmem>>) attributes {dimension_semantics = [#tpu.dimension_semantics<parallel>], iteration_bounds = array<i64: 1>, scalar_prefetch = 0 : i64, scratch_operands = 0 : i64, tpu.core_type = #tpu.core_type<tc>, window_params = [{transform_indices = @transform_0, window_bounds = array<i64: 8, 1864>}, {pipeline_mode = #tpu.pipeline_mode<synchronous>, transform_indices = @transform_1, window_bounds = array<i64: 1864, 1024>}, {pipeline_mode = #tpu.pipeline_mode<synchronous>, transform_indices = @transform_2, window_bounds = array<i64: 1, 1024>}, {pipeline_mode = #tpu.pipeline_mode<synchronous>, transform_indices = @transform_3, window_bounds = array<i64: 1024, 128>}, {pipeline_mode = #tpu.pipeline_mode<synchronous>, transform_indices = @transform_4, window_bounds = array<i64: 1, 128>}, {transform_indices = @transform_5, window_bounds = array<i64: 8, 128>}]} {
    %c0 = arith.constant 0 : index
    %c0_0 = arith.constant 0 : index
    %0 = vector.load %arg1[%c0, %c0_0] : memref<8x1864xf32, #tpu.memory_space<vmem>>, vector<8x1864xf32>
    %1 = arith.truncf %0 : vector<8x1864xf32> to vector<8x1864xbf16>
    %c0_1 = arith.constant 0 : index
    %c0_2 = arith.constant 0 : index
    %2 = vector.load %arg2[%c0_1, %c0_2] : memref<1864x1024xbf16, #tpu.memory_space<vmem>>, vector<1864x1024xbf16>
    %cst = arith.constant dense<0.000000e+00> : vector<8x1024xf32>
    %3 = tpu.matmul %1, %2, %cst {dimension_numbers = #tpu.dot_dimension_numbers<[1], [0], [0], [1], [0, 0, 1, 1], [], []>} : vector<8x1864xbf16>, vector<1864x1024xbf16>, vector<8x1024xf32> -> vector<8x1024xf32>
    %c0_3 = arith.constant 0 : index
    %c0_4 = arith.constant 0 : index
    %4 = vector.load %arg3[%c0_3, %c0_4] : memref<1x1024xf32, #tpu.memory_space<vmem>>, vector<1x1024xf32>
    %5 = vector.broadcast %4 : vector<1x1024xf32> to vector<8x1024xf32>
    %6 = arith.addf %3, %5 : vector<8x1024xf32>
    %cst_5 = arith.constant 0.000000e+00 : f32
    %7 = vector.broadcast %cst_5 : f32 to vector<8x1024xf32>
    %8 = arith.cmpf ogt, %6, %7 : vector<8x1024xf32>
    %cst_6 = arith.constant 0.00999999977 : f32
    %9 = vector.broadcast %cst_6 : f32 to vector<8x1024xf32>
    %10 = arith.mulf %9, %6 : vector<8x1024xf32>
    %11 = arith.select %8, %6, %10 : vector<8x1024xi1>, vector<8x1024xf32>
    %12 = arith.truncf %11 : vector<8x1024xf32> to vector<8x1024xbf16>
    %c0_7 = arith.constant 0 : index
    %c0_8 = arith.constant 0 : index
    %13 = vector.load %arg4[%c0_7, %c0_8] : memref<1024x128xbf16, #tpu.memory_space<vmem>>, vector<1024x128xbf16>
    %cst_9 = arith.constant dense<0.000000e+00> : vector<8x128xf32>
    %14 = tpu.matmul %12, %13, %cst_9 {dimension_numbers = #tpu.dot_dimension_numbers<[1], [0], [0], [1], [0, 0, 1, 1], [], []>} : vector<8x1024xbf16>, vector<1024x128xbf16>, vector<8x128xf32> -> vector<8x128xf32>
    %c0_10 = arith.constant 0 : index
    %c0_11 = arith.constant 0 : index
    %15 = vector.load %arg5[%c0_10, %c0_11] : memref<1x128xf32, #tpu.memory_space<vmem>>, vector<1x128xf32>
    %16 = vector.broadcast %15 : vector<1x128xf32> to vector<8x128xf32>
    %17 = arith.addf %14, %16 : vector<8x128xf32>
    %cst_12 = arith.constant 0.000000e+00 : f32
    %18 = vector.broadcast %cst_12 : f32 to vector<8x128xf32>
    %19 = arith.cmpf ogt, %17, %18 : vector<8x128xf32>
    %cst_13 = arith.constant 0.00999999977 : f32
    %20 = vector.broadcast %cst_13 : f32 to vector<8x128xf32>
    %21 = arith.mulf %20, %17 : vector<8x128xf32>
    %22 = arith.select %19, %17, %21 : vector<8x128xi1>, vector<8x128xf32>
    %c0_14 = arith.constant 0 : index
    %c0_15 = arith.constant 0 : index
    %23 = vector.load %arg6[%c0_14, %c0_15] : memref<8x128xf32, #tpu.memory_space<vmem>>, vector<8x128xf32>
    tpu.vector_store %arg6[%c0_14, %c0_15], %22 {strides = array<i32>} : memref<8x128xf32, #tpu.memory_space<vmem>>, vector<8x128xf32>,
    return
  }
  func.func @transform_0(%arg0: i32) -> (i32, i32) {
    %c0_i32 = arith.constant 0 : i32
    %c0_i32_0 = arith.constant 0 : i32
    return %arg0, %c0_i32 : i32, i32
  }
  func.func @transform_1(%arg0: i32) -> (i32, i32) {
    %c0_i32 = arith.constant 0 : i32
    %c0_i32_0 = arith.constant 0 : i32
    %c0_i32_1 = arith.constant 0 : i32
    return %c0_i32, %c0_i32_0 : i32, i32
  }
  func.func @transform_2(%arg0: i32) -> (i32, i32) {
    %c0_i32 = arith.constant 0 : i32
    %c0_i32_0 = arith.constant 0 : i32
    %c0_i32_1 = arith.constant 0 : i32
    return %c0_i32, %c0_i32_0 : i32, i32
  }
  func.func @transform_3(%arg0: i32) -> (i32, i32) {
    %c0_i32 = arith.constant 0 : i32
    %c0_i32_0 = arith.constant 0 : i32
    %c0_i32_1 = arith.constant 0 : i32
    return %c0_i32, %c0_i32_0 : i32, i32
  }
  func.func @transform_4(%arg0: i32) -> (i32, i32) {
    %c0_i32 = arith.constant 0 : i32
    %c0_i32_0 = arith.constant 0 : i32
    %c0_i32_1 = arith.constant 0 : i32
    return %c0_i32, %c0_i32_0 : i32, i32
  }
  func.func @transform_5(%arg0: i32) -> (i32, i32) {
    %c0_i32 = arith.constant 0 : i32
    %c0_i32_0 = arith.constant 0 : i32
    return %arg0, %c0_i32 : i32, i32
  }
}

</mosaic_0001>

<llo_original>
// kernel: tpu_custom_call.1
$region0: #{tpu_custom_call.1}
  #allocation0 [shape = 'u32[]', space=smem, size = 0x4, offset = 0x4, fixed_abs, tag = 'smem constant byte address 0x4 - core index']
  #allocation1 [shape = 'u32[144,128]{1,0:T(1,128)}', space=vmem, size = 0x12000, scoped, tag = 'internal scratch']
  %s0 = inlined_call_operand.hbm [shape: f32[8,1864], index: 0, kind: input, shape index: {}]
  %s1 = inlined_call_operand.hbm [shape: bf16[1864,1024], index: 1, kind: input, shape index: {}]
  %s2 = inlined_call_operand.hbm [shape: f32[1,1024], index: 2, kind: input, shape index: {}]
  %s3 = inlined_call_operand.hbm [shape: bf16[1024,128], index: 3, kind: input, shape index: {}]
  %s4 = inlined_call_operand.hbm [shape: f32[1,128], index: 4, kind: input, shape index: {}]
  %s5 = inlined_call_operand.hbm [shape: f32[8,128], index: 5, kind: output, shape index: {}]
  %s6 = sld [smem:[#allocation0]]
  $region50: #{tpu_custom_call.1} parent=0
    _
  %s8 = ssub.s32 1, %s6
  %s9 = scalar_select 0, %s8, %s6
  $region1: #{tpu_custom_call.1} parent=0
    #allocation2 [shape = 'u8[61440]{0}', space=vmem, size = 0xf000, scoped, tag = 'input window, operand 0, single buffered']
    #allocation3 [shape = 's32[1]{0}', space=sflag, size = 0x4, scoped, tag = 'scoped memory for tpu_custom_call.1']
    #allocation4 [shape = 's32[1]{0}', space=sflag, size = 0x4, scoped, tag = 'scoped memory for tpu_custom_call.1']
    #allocation5 [shape = 'u8[3817472]{0}', space=vmem, size = 0x3a4000, scoped, tag = 'input window, operand 1, single buffered']
    #allocation6 [shape = 's32[1]{0}', space=sflag, size = 0x4, scoped, tag = 'scoped memory for tpu_custom_call.1']
    #allocation7 [shape = 'u8[4096]{0}', space=vmem, size = 0x1000, scoped, tag = 'input window, operand 2, single buffered']
    #allocation8 [shape = 'u8[262144]{0}', space=vmem, size = 0x40000, scoped, tag = 'input window, operand 3, single buffered']
    #allocation9 [shape = 's32[1]{0}', space=sflag, size = 0x4, scoped, tag = 'scoped memory for tpu_custom_call.1']
    #allocation10 [shape = 'u8[512]{0}', space=vmem, size = 0x400, scoped, tag = 'input window, operand 4, single buffered']
    #allocation11 [shape = 'u8[4096]{0}', space=vmem, size = 0x1000, scoped, tag = 'output window, operand 0, single buffered']
    %10 = vsyncpa [#allocation3], 0
    %11 = vsyncpa [#allocation6], 0
    %12 = vsyncpa [#allocation9], 0
    %13 = vsyncpa [#allocation4], 0
    // Predicated region
    $region2: #{tpu_custom_call.1} parent=1 // pred_check
      _
    $region3: #{tpu_custom_call.1} parent=1 // pred_check_branch
      %15 = sbr.rel (0) target = $region5
    $region4: #{tpu_custom_call.1} parent=1 // pred_region
      %s17 = ssub.s32 1920, 1920
      %18 = vsyncadd [#allocation3], %s17
      %s20 = sshll.u32 [#allocation2], 4
      %s21 = int_to_ptr.vmem [resolvable:$true] %s20
      %23 = dma.hbm_to_vmem [thread:$0]  %s0, 1920, %s21, [#allocation3]
    $region5: #{tpu_custom_call.1} parent=1 // pred_fallthru
      _
    // Predicated region
    $region6: #{tpu_custom_call.1} parent=1 // pred_check
      _
    $region7: #{tpu_custom_call.1} parent=1 // pred_check_branch
      %25 = sbr.rel (0) target = $region9
    $region8: #{tpu_custom_call.1} parent=1 // pred_region
      %s27 = ssub.s32 119296, 119296
      %28 = vsyncadd [#allocation6], %s27
      %s29 = sshll.u32 [#allocation5], 4
      %s30 = int_to_ptr.vmem [resolvable:$true] %s29
      %35 = dma.hbm_to_vmem [thread:$0]  %s1, 119296, %s30, [#allocation6], 512, 512, 32
    $region9: #{tpu_custom_call.1} parent=1 // pred_fallthru
      _
    // Predicated region
    $region10: #{tpu_custom_call.1} parent=1 // pred_check
      _
    $region11: #{tpu_custom_call.1} parent=1 // pred_check_branch
      %37 = sbr.rel (0) target = $region13
    $region12: #{tpu_custom_call.1} parent=1 // pred_region
      %s39 = ssub.s32 128, 128
      %40 = vsyncadd [#allocation6], %s39
      %s42 = sshll.u32 [#allocation7], 4
      %s43 = int_to_ptr.vmem [resolvable:$true] %s42
      %45 = dma.hbm_to_vmem [thread:$0]  %s2, 128, %s43, [#allocation6]
    $region13: #{tpu_custom_call.1} parent=1 // pred_fallthru
      _
    // Predicated region
    $region14: #{tpu_custom_call.1} parent=1 // pred_check
      _
    $region15: #{tpu_custom_call.1} parent=1 // pred_check_branch
      %47 = sbr.rel (0) target = $region17
    $region16: #{tpu_custom_call.1} parent=1 // pred_region
      %s49 = ssub.s32 8192, 8192
      %50 = vsyncadd [#allocation9], %s49
      %s51 = sshll.u32 [#allocation8], 4
      %s52 = int_to_ptr.vmem [resolvable:$true] %s51
      %57 = dma.hbm_to_vmem [thread:$0]  %s3, 8192, %s52, [#allocation9], 64, 64, 4
    $region17: #{tpu_custom_call.1} parent=1 // pred_fallthru
      _
    // Predicated region
    $region18: #{tpu_custom_call.1} parent=1 // pred_check
      _
    $region19: #{tpu_custom_call.1} parent=1 // pred_check_branch
      %59 = sbr.rel (0) target = $region21
    $region20: #{tpu_custom_call.1} parent=1 // pred_region
      %s61 = ssub.s32 16, 16
      %62 = vsyncadd [#allocation9], %s61
      %s64 = sshll.u32 [#allocation10], 4
      %s65 = int_to_ptr.vmem [resolvable:$true] %s64
      %67 = dma.hbm_to_vmem [thread:$0]  %s4, 16, %s65, [#allocation9]
    $region21: #{tpu_custom_call.1} parent=1 // pred_fallthru
      _
    // Predicated region
    $region22: #{tpu_custom_call.1} parent=1 // pred_check
      _
    $region23: #{tpu_custom_call.1} parent=1 // pred_check_branch
      %69 = sbr.rel (0) target = $region25
    $region24: #{tpu_custom_call.1} parent=1 // pred_region
      %70 = dma.done [#allocation3], 1920
    $region25: #{tpu_custom_call.1} parent=1 // pred_fallthru
      _
    // Predicated region
    $region26: #{tpu_custom_call.1} parent=1 // pred_check
      _
    $region27: #{tpu_custom_call.1} parent=1 // pred_check_branch
      %72 = sbr.rel (0) target = $region29
    $region28: #{tpu_custom_call.1} parent=1 // pred_region
      %73 = dma.done [#allocation6], 119296
    $region29: #{tpu_custom_call.1} parent=1 // pred_fallthru
      _
    // Predicated region
    $region30: #{tpu_custom_call.1} parent=1 // pred_check
      _
    $region31: #{tpu_custom_call.1} parent=1 // pred_check_branch
      %75 = sbr.rel (0) target = $region33
    $region32: #{tpu_custom_call.1} parent=1 // pred_region
      %76 = dma.done [#allocation6], 128
    $region33: #{tpu_custom_call.1} parent=1 // pred_fallthru
      _
    // Predicated region
    $region34: #{tpu_custom_call.1} parent=1 // pred_check
      _
    $region35: #{tpu_custom_call.1} parent=1 // pred_check_branch
      %78 = sbr.rel (0) target = $region37
    $region36: #{tpu_custom_call.1} parent=1 // pred_region
      %79 = dma.done [#allocation9], 8192
    $region37: #{tpu_custom_call.1} parent=1 // pred_fallthru
      _
    // Predicated region
    $region38: #{tpu_custom_call.1} parent=1 // pred_check
      _
    $region39: #{tpu_custom_call.1} parent=1 // pred_check_branch
      %81 = sbr.rel (0) target = $region41
    $region40: #{tpu_custom_call.1} parent=1 // pred_region
      %82 = dma.done [#allocation9], 16
    $region41: #{tpu_custom_call.1} parent=1 // pred_fallthru
      _
    %v84 = vld [vmem:[#allocation2] sm:$0xff]
    %v85 = vld [vmem:[#allocation2 + $0x8] sm:$0xff]
    %v86 = vld [vmem:[#allocation2 + $0x10] sm:$0xff]
    %v87 = vld [vmem:[#allocation2 + $0x18] sm:$0xff]
    %v88 = vld [vmem:[#allocation2 + $0x20] sm:$0xff]
    %v89 = vld [vmem:[#allocation2 + $0x28] sm:$0xff]
    %v90 = vld [vmem:[#allocation2 + $0x30] sm:$0xff]
    %v91 = vld [vmem:[#allocation2 + $0x38] sm:$0xff]
    %v92 = vld [vmem:[#allocation2 + $0x40] sm:$0xff]
    %v93 = vld [vmem:[#allocation2 + $0x48] sm:$0xff]
    %v94 = vld [vmem:[#allocation2 + $0x50] sm:$0xff]
    %v95 = vld [vmem:[#allocation2 + $0x58] sm:$0xff]
    %v96 = vld [vmem:[#allocation2 + $0x60] sm:$0xff]
    %v97 = vld [vmem:[#allocation2 + $0x68] sm:$0xff]
    %v98 = vld [vmem:[#allocation2 + $0x70] sm:$0xff]
    %v99 = vpack.c.bf16 %v84, %v84
    %v100 = vpack.c.bf16 %v85, %v85
    %v101 = vpack.c.bf16 %v86, %v86
    %v102 = vpack.c.bf16 %v87, %v87
    %v103 = vpack.c.bf16 %v88, %v88
    %v104 = vpack.c.bf16 %v89, %v89
    %v105 = vpack.c.bf16 %v90, %v90
    %v106 = vpack.c.bf16 %v91, %v91
    %v107 = vpack.c.bf16 %v92, %v92
    %v108 = vpack.c.bf16 %v93, %v93
    %v109 = vpack.c.bf16 %v94, %v94
    %v110 = vpack.c.bf16 %v95, %v95
    %v111 = vpack.c.bf16 %v96, %v96
    %v112 = vpack.c.bf16 %v97, %v97
    %v113 = vpack.c.bf16 %v98, %v98
    %v114 = vld [vmem:[#allocation5] sm:$0xff]
    %v115 = vld [vmem:[#allocation5 + $0x8] sm:$0xff]
    %v116 = vld [vmem:[#allocation5 + $0x10] sm:$0xff]
    %v117 = vld [vmem:[#allocation5 + $0x18] sm:$0xff]
    %v118 = vld [vmem:[#allocation5 + $0x20] sm:$0xff]
    %v119 = vld [vmem:[#allocation5 + $0x28] sm:$0xff]
    %v120 = vld [vmem:[#allocation5 + $0x30] sm:$0xff]
    %v121 = vld [vmem:[#allocation5 + $0x38] sm:$0xff]
    %v122 = vld [vmem:[#allocation5 + $0x40] sm:$0xff]
    %v123 = vld [vmem:[#allocation5 + $0x48] sm:$0xff]
    %v124 = vld [vmem:[#allocation5 + $0x50] sm:$0xff]
    %v125 = vld [vmem:[#allocation5 + $0x58] sm:$0xff]
    %v126 = vld [vmem:[#allocation5 + $0x60] sm:$0xff]
    %v127 = vld [vmem:[#allocation5 + $0x68] sm:$0xff]
    %v128 = vld [vmem:[#allocation5 + $0x70] sm:$0xff]
    %v129 = vld [vmem:[#allocation5 + $0x78] sm:$0xff]
    %v130 = vld [vmem:[#allocation5 + $0x80] sm:$0xff]
    %v131 = vld [vmem:[#allocation5 + $0x88] sm:$0xff]
    %v132 = vld [vmem:[#allocation5 + $0x90] sm:$0xff]
    %v133 = vld [vmem:[#allocation5 + $0x98] sm:$0xff]
    %v134 = vld [vmem:[#allocation5 + $0xa0] sm:$0xff]
    %v135 = vld [vmem:[#allocation5 + $0xa8] sm:$0xff]
    %v136 = vld [vmem:[#allocation5 + $0xb0] sm:$0xff]
    %v137 = vld [vmem:[#allocation5 + $0xb8] sm:$0xff]
    %v138 = vld [vmem:[#allocation5 + $0xc0] sm:$0xff]
    %v139 = vld [vmem:[#allocation5 + $0xc8] sm:$0xff]
    %v140 = vld [vmem:[#allocation5 + $0xd0] sm:$0xff]
    %v141 = vld [vmem:[#allocation5 + $0xd8] sm:$0xff]
    %v142 = vld [vmem:[#allocation5 + $0xe0] sm:$0xff]
    %v143 = vld [vmem:[#allocation5 + $0xe8] sm:$0xff]
    %v144 = vld [vmem:[#allocation5 + $0xf0] sm:$0xff]
    %v145 = vld [vmem:[#allocation5 + $0xf8] sm:$0xff]
    %v146 = vld [vmem:[#allocation5 + $0x100] sm:$0xff]
    %v147 = vld [vmem:[#allocation5 + $0x108] sm:$0xff]
    %v148 = vld [vmem:[#allocation5 + $0x110] sm:$0xff]
    %v149 = vld [vmem:[#allocation5 + $0x118] sm:$0xff]
    %v150 = vld [vmem:[#allocation5 + $0x120] sm:$0xff]
    %v151 = vld [vmem:[#allocation5 + $0x128] sm:$0xff]
    %v152 = vld [vmem:[#allocation5 + $0x130] sm:$0xff]
    %v153 = vld [vmem:[#allocation5 + $0x138] sm:$0xff]
    %v154 = vld [vmem:[#allocation5 + $0x140] sm:$0xff]
    %v155 = vld [vmem:[#allocation5 + $0x148] sm:$0xff]
    %v156 = vld [vmem:[#allocation5 + $0x150] sm:$0xff]
    %v157 = vld [vmem:[#allocation5 + $0x158] sm:$0xff]
    %v158 = vld [vmem:[#allocation5 + $0x160] sm:$0xff]
    %v159 = vld [vmem:[#allocation5 + $0x168] sm:$0xff]
    %v160 = vld [vmem:[#allocation5 + $0x170] sm:$0xff]
    %v161 = vld [vmem:[#allocation5 + $0x178] sm:$0xff]
    %v162 = vld [vmem:[#allocation5 + $0x180] sm:$0xff]
    %v163 = vld [vmem:[#allocation5 + $0x188] sm:$0xff]
    %v164 = vld [vmem:[#allocation5 + $0x190] sm:$0xff]
    %v165 = vld [vmem:[#allocation5 + $0x198] sm:$0xff]
    %v166 = vld [vmem:[#allocation5 + $0x1a0] sm:$0xff]
    %v167 = vld [vmem:[#allocation5 + $0x1a8] sm:$0xff]
    %v168 = vld [vmem:[#allocation5 + $0x1b0] sm:$0xff]
    %v169 = vld [vmem:[#allocation5 + $0x1b8] sm:$0xff]
    %v170 = vld [vmem:[#allocation5 + $0x1c0] sm:$0xff]
    %v171 = vld [vmem:[#allocation5 + $0x1c8] sm:$0xff]
    %v172 = vld [vmem:[#allocation5 + $0x1d0] sm:$0xff]
    %v173 = vld [vmem:[#allocation5 + $0x1d8] sm:$0xff]
    %v174 = vld [vmem:[#allocation5 + $0x1e0] sm:$0xff]
    %v175 = vld [vmem:[#allocation5 + $0x1e8] sm:$0xff]
    %v176 = vld [vmem:[#allocation5 + $0x1f0] sm:$0xff]
    %v177 = vld [vmem:[#allocation5 + $0x1f8] sm:$0xff]
    %v178 = vld [vmem:[#allocation5 + $0x200] sm:$0xff]
    %v179 = vld [vmem:[#allocation5 + $0x208] sm:$0xff]
    %v180 = vld [vmem:[#allocation5 + $0x210] sm:$0xff]
    %v181 = vld [vmem:[#allocation5 + $0x218] sm:$0xff]
    %v182 = vld [vmem:[#allocation5 + $0x220] sm:$0xff]
    %v183 = vld [vmem:[#allocation5 + $0x228] sm:$0xff]
    %v184 = vld [vmem:[#allocation5 + $0x230] sm:$0xff]
    %v185 = vld [vmem:[#allocation5 + $0x238] sm:$0xff]
    %v186 = vld [vmem:[#allocation5 + $0x240] sm:$0xff]
    %v187 = vld [vmem:[#allocation5 + $0x248] sm:$0xff]
    %v188 = vld [vmem:[#allocation5 + $0x250] sm:$0xff]
    %v189 = vld [vmem:[#allocation5 + $0x258] sm:$0xff]
    %v190 = vld [vmem:[#allocation5 + $0x260] sm:$0xff]
    %v191 = vld [vmem:[#allocation5 + $0x268] sm:$0xff]
    %v192 = vld [vmem:[#allocation5 + $0x270] sm:$0xff]
    %v193 = vld [vmem:[#allocation5 + $0x278] sm:$0xff]
    %v194 = vld [vmem:[#allocation5 + $0x280] sm:$0xff]
    %v195 = vld [vmem:[#allocation5 + $0x288] sm:$0xff]
    %v196 = vld [vmem:[#allocation5 + $0x290] sm:$0xff]
    %v197 = vld [vmem:[#allocation5 + $0x298] sm:$0xff]
    %v198 = vld [vmem:[#allocation5 + $0x2a0] sm:$0xff]
    %v199 = vld [vmem:[#allocation5 + $0x2a8] sm:$0xff]
    %v200 = vld [vmem:[#allocation5 + $0x2b0] sm:$0xff]
    %v201 = vld [vmem:[#allocation5 + $0x2b8] sm:$0xff]
    %v202 = vld [vmem:[#allocation5 + $0x2c0] sm:$0xff]
    %v203 = vld [vmem:[#allocation5 + $0x2c8] sm:$0xff]
    %v204 = vld [vmem:[#allocation5 + $0x2d0] sm:$0xff]
    %v205 = vld [vmem:[#allocation5 + $0x2d8] sm:$0xff]
    %v206 = vld [vmem:[#allocation5 + $0x2e0] sm:$0xff]
    %v207 = vld [vmem:[#allocation5 + $0x2e8] sm:$0xff]
    %v208 = vld [vmem:[#allocation5 + $0x2f0] sm:$0xff]
    %v209 = vld [vmem:[#allocation5 + $0x2f8] sm:$0xff]
    %v210 = vld [vmem:[#allocation5 + $0x300] sm:$0xff]
    %v211 = vld [vmem:[#allocation5 + $0x308] sm:$0xff]
    %v212 = vld [vmem:[#allocation5 + $0x310] sm:$0xff]
    %v213 = vld [vmem:[#allocation5 + $0x318] sm:$0xff]
    %v214 = vld [vmem:[#allocation5 + $0x320] sm:$0xff]
    %v215 = vld [vmem:[#allocation5 + $0x328] sm:$0xff]
    %v216 = vld [vmem:[#allocation5 + $0x330] sm:$0xff]
    %v217 = vld [vmem:[#allocation5 + $0x338] sm:$0xff]
    %v218 = vld [vmem:[#allocation5 + $0x340] sm:$0xff]
    %v219 = vld [vmem:[#allocation5 + $0x348] sm:$0xff]
    %v220 = vld [vmem:[#allocation5 + $0x350] sm:$0xff]
    %v221 = vld [vmem:[#allocation5 + $0x358] sm:$0xff]
    %v222 = vld [vmem:[#allocation5 + $0x360] sm:$0xff]
    %v223 = vld [vmem:[#allocation5 + $0x368] sm:$0xff]
    %v224 = vld [vmem:[#allocation5 + $0x370] sm:$0xff]
    %v225 = vld [vmem:[#allocation5 + $0x378] sm:$0xff]
    %v226 = vld [vmem:[#allocation5 + $0x380] sm:$0xff]
    %v227 = vld [vmem:[#allocation5 + $0x388] sm:$0xff]
    %v228 = vld [vmem:[#allocation5 + $0x390] sm:$0xff]
    %v229 = vld [vmem:[#allocation5 + $0x398] sm:$0xff]
    %v230 = vld [vmem:[#allocation5 + $0x3a0] sm:$0xff]
    %v231 = vld [vmem:[#allocation5 + $0x3a8] sm:$0xff]
    %v232 = vld [vmem:[#allocation5 + $0x3b0] sm:$0xff]
    %v233 = vld [vmem:[#allocation5 + $0x3b8] sm:$0xff]
    %v234 = vld [vmem:[#allocation5 + $0x3c0] sm:$0xff]
    %v235 = vld [vmem:[#allocation5 + $0x3c8] sm:$0xff]
    %v236 = vld [vmem:[#allocation5 + $0x3d0] sm:$0xff]
    %v237 = vld [vmem:[#allocation5 + $0x3d8] sm:$0xff]
    %v238 = vld [vmem:[#allocation5 + $0x3e0] sm:$0xff]
    %v239 = vld [vmem:[#allocation5 + $0x3e8] sm:$0xff]
    %v240 = vld [vmem:[#allocation5 + $0x3f0] sm:$0xff]
    %v241 = vld [vmem:[#allocation5 + $0x3f8] sm:$0xff]
    %v242 = vld [vmem:[#allocation5 + $0x400] sm:$0xff]
    %v243 = vld [vmem:[#allocation5 + $0x408] sm:$0xff]
    %v244 = vld [vmem:[#allocation5 + $0x410] sm:$0xff]
    %v245 = vld [vmem:[#allocation5 + $0x418] sm:$0xff]
    %v246 = vld [vmem:[#allocation5 + $0x420] sm:$0xff]
    %v247 = vld [vmem:[#allocation5 + $0x428] sm:$0xff]
    %v248 = vld [vmem:[#allocation5 + $0x430] sm:$0xff]
    %v249 = vld [vmem:[#allocation5 + $0x438] sm:$0xff]
    %v250 = vld [vmem:[#allocation5 + $0x440] sm:$0xff]
    %v251 = vld [vmem:[#allocation5 + $0x448] sm:$0xff]
    %v252 = vld [vmem:[#allocation5 + $0x450] sm:$0xff]
    %v253 = vld [vmem:[#allocation5 + $0x458] sm:$0xff]
    %v254 = vld [vmem:[#allocation5 + $0x460] sm:$0xff]
    %v255 = vld [vmem:[#allocation5 + $0x468] sm:$0xff]
    %v256 = vld [vmem:[#allocation5 + $0x470] sm:$0xff]
    %v257 = vld [vmem:[#allocation5 + $0x478] sm:$0xff]
    %v258 = vld [vmem:[#allocation5 + $0x480] sm:$0xff]
    %v259 = vld [vmem:[#allocation5 + $0x488] sm:$0xff]
    %v260 = vld [vmem:[#allocation5 + $0x490] sm:$0xff]
    %v261 = vld [vmem:[#allocation5 + $0x498] sm:$0xff]
    %v262 = vld [vmem:[#allocation5 + $0x4a0] sm:$0xff]
    %v263 = vld [vmem:[#allocation5 + $0x4a8] sm:$0xff]
    %v264 = vld [vmem:[#allocation5 + $0x4b0] sm:$0xff]
    %v265 = vld [vmem:[#allocation5 + $0x4b8] sm:$0xff]
    %v266 = vld [vmem:[#allocation5 + $0x4c0] sm:$0xff]
    %v267 = vld [vmem:[#allocation5 + $0x4c8] sm:$0xff]
    %v268 = vld [vmem:[#allocation5 + $0x4d0] sm:$0xff]
    %v269 = vld [vmem:[#allocation5 + $0x4d8] sm:$0xff]
    %v270 = vld [vmem:[#allocation5 + $0x4e0] sm:$0xff]
    %v271 = vld [vmem:[#allocation5 + $0x4e8] sm:$0xff]
    %v272 = vld [vmem:[#allocation5 + $0x4f0] sm:$0xff]
    %v273 = vld [vmem:[#allocation5 + $0x4f8] sm:$0xff]
    %v274 = vld [vmem:[#allocation5 + $0x500] sm:$0xff]
    %v275 = vld [vmem:[#allocation5 + $0x508] sm:$0xff]
    %v276 = vld [vmem:[#allocation5 + $0x510] sm:$0xff]
    %v277 = vld [vmem:[#allocation5 + $0x518] sm:$0xff]
    %v278 = vld [vmem:[#allocation5 + $0x520] sm:$0xff]
    %v279 = vld [vmem:[#allocation5 + $0x528] sm:$0xff]
    %v280 = vld [vmem:[#allocation5 + $0x530] sm:$0xff]
    %v281 = vld [vmem:[#allocation5 + $0x538] sm:$0xff]
    %v282 = vld [vmem:[#allocation5 + $0x540] sm:$0xff]
    %v283 = vld [vmem:[#allocation5 + $0x548] sm:$0xff]
    %v284 = vld [vmem:[#allocation5 + $0x550] sm:$0xff]
    %v285 = vld [vmem:[#allocation5 + $0x558] sm:$0xff]
    %v286 = vld [vmem:[#allocation5 + $0x560] sm:$0xff]
    %v287 = vld [vmem:[#allocation5 + $0x568] sm:$0xff]
    %v288 = vld [vmem:[#allocation5 + $0x570] sm:$0xff]
    %v289 = vld [vmem:[#allocation5 + $0x578] sm:$0xff]
    %v290 = vld [vmem:[#allocation5 + $0x580] sm:$0xff]
    %v291 = vld [vmem:[#allocation5 + $0x588] sm:$0xff]
    %v292 = vld [vmem:[#allocation5 + $0x590] sm:$0xff]
    %v293 = vld [vmem:[#allocation5 + $0x598] sm:$0xff]
    %v294 = vld [vmem:[#allocation5 + $0x5a0] sm:$0xff]
    %v295 = vld [vmem:[#allocation5 + $0x5a8] sm:$0xff]
    %v296 = vld [vmem:[#allocation5 + $0x5b0] sm:$0xff]
    %v297 = vld [vmem:[#allocation5 + $0x5b8] sm:$0xff]
    %v298 = vld [vmem:[#allocation5 + $0x5c0] sm:$0xff]
    %v299 = vld [vmem:[#allocation5 + $0x5c8] sm:$0xff]
    %v300 = vld [vmem:[#allocation5 + $0x5d0] sm:$0xff]
    %v301 = vld [vmem:[#allocation5 + $0x5d8] sm:$0xff]
    %v302 = vld [vmem:[#allocation5 + $0x5e0] sm:$0xff]
    %v303 = vld [vmem:[#allocation5 + $0x5e8] sm:$0xff]
    %v304 = vld [vmem:[#allocation5 + $0x5f0] sm:$0xff]
    %v305 = vld [vmem:[#allocation5 + $0x5f8] sm:$0xff]
    %v306 = vld [vmem:[#allocation5 + $0x600] sm:$0xff]
    %v307 = vld [vmem:[#allocation5 + $0x608] sm:$0xff]
    %v308 = vld [vmem:[#allocation5 + $0x610] sm:$0xff]
    %v309 = vld [vmem:[#allocation5 + $0x618] sm:$0xff]
    %v310 = vld [vmem:[#allocation5 + $0x620] sm:$0xff]
    %v311 = vld [vmem:[#allocation5 + $0x628] sm:$0xff]
    %v312 = vld [vmem:[#allocation5 + $0x630] sm:$0xff]
    %v313 = vld [vmem:[#allocation5 + $0x638] sm:$0xff]
    %v314 = vld [vmem:[#allocation5 + $0x640] sm:$0xff]
    %v315 = vld [vmem:[#allocation5 + $0x648] sm:$0xff]
    %v316 = vld [vmem:[#allocation5 + $0x650] sm:$0xff]
    %v317 = vld [vmem:[#allocation5 + $0x658] sm:$0xff]
    %v318 = vld [vmem:[#allocation5 + $0x660] sm:$0xff]
    %v319 = vld [vmem:[#allocation5 + $0x668] sm:$0xff]
    %v320 = vld [vmem:[#allocation5 + $0x670] sm:$0xff]
    %v321 = vld [vmem:[#allocation5 + $0x678] sm:$0xff]
    %v322 = vld [vmem:[#allocation5 + $0x680] sm:$0xff]
    %v323 = vld [vmem:[#allocation5 + $0x688] sm:$0xff]
    %v324 = vld [vmem:[#allocation5 + $0x690] sm:$0xff]
    %v325 = vld [vmem:[#allocation5 + $0x698] sm:$0xff]
    %v326 = vld [vmem:[#allocation5 + $0x6a0] sm:$0xff]
    %v327 = vld [vmem:[#allocation5 + $0x6a8] sm:$0xff]
    %v328 = vld [vmem:[#allocation5 + $0x6b0] sm:$0xff]
    %v329 = vld [vmem:[#allocation5 + $0x6b8] sm:$0xff]
    %v330 = vld [vmem:[#allocation5 + $0x6c0] sm:$0xff]
    %v331 = vld [vmem:[#allocation5 + $0x6c8] sm:$0xff]
    %v332 = vld [vmem:[#allocation5 + $0x6d0] sm:$0xff]
    %v333 = vld [vmem:[#allocation5 + $0x6d8] sm:$0xff]
    %v334 = vld [vmem:[#allocation5 + $0x6e0] sm:$0xff]
    %v335 = vld [vmem:[#allocation5 + $0x6e8] sm:$0xff]
    %v336 = vld [vmem:[#allocation5 + $0x6f0] sm:$0xff]
    %v337 = vld [vmem:[#allocation5 + $0x6f8] sm:$0xff]
    %v338 = vld [vmem:[#allocation5 + $0x700] sm:$0xff]
    %v339 = vld [vmem:[#allocation5 + $0x708] sm:$0xff]
    %v340 = vld [vmem:[#allocation5 + $0x710] sm:$0xff]
    %v341 = vld [vmem:[#allocation5 + $0x718] sm:$0xff]
    %v342 = vld [vmem:[#allocation5 + $0x720] sm:$0xff]
    %v343 = vld [vmem:[#allocation5 + $0x728] sm:$0xff]
    %v344 = vld [vmem:[#allocation5 + $0x730] sm:$0xff]
    %v345 = vld [vmem:[#allocation5 + $0x738] sm:$0xff]
    %v346 = vld [vmem:[#allocation5 + $0x740] sm:$0xff]
    %v347 = vld [vmem:[#allocation5 + $0x748] sm:$0xff]
    %v348 = vld [vmem:[#allocation5 + $0x750] sm:$0xff]
    %v349 = vld [vmem:[#allocation5 + $0x758] sm:$0xff]
    %v350 = vld [vmem:[#allocation5 + $0x760] sm:$0xff]
    %v351 = vld [vmem:[#allocation5 + $0x768] sm:$0xff]
    %v352 = vld [vmem:[#allocation5 + $0x770] sm:$0xff]
    %v353 = vld [vmem:[#allocation5 + $0x778] sm:$0xff]
    %v354 = vld [vmem:[#allocation5 + $0x780] sm:$0xff]
    %v355 = vld [vmem:[#allocation5 + $0x788] sm:$0xff]
    %v356 = vld [vmem:[#allocation5 + $0x790] sm:$0xff]
    %v357 = vld [vmem:[#allocation5 + $0x798] sm:$0xff]
    %v358 = vld [vmem:[#allocation5 + $0x7a0] sm:$0xff]
    %v359 = vld [vmem:[#allocation5 + $0x7a8] sm:$0xff]
    %v360 = vld [vmem:[#allocation5 + $0x7b0] sm:$0xff]
    %v361 = vld [vmem:[#allocation5 + $0x7b8] sm:$0xff]
    %v362 = vld [vmem:[#allocation5 + $0x7c0] sm:$0xff]
    %v363 = vld [vmem:[#allocation5 + $0x7c8] sm:$0xff]
    %v364 = vld [vmem:[#allocation5 + $0x7d0] sm:$0xff]
    %v365 = vld [vmem:[#allocation5 + $0x7d8] sm:$0xff]
    %v366 = vld [vmem:[#allocation5 + $0x7e0] sm:$0xff]
    %v367 = vld [vmem:[#allocation5 + $0x7e8] sm:$0xff]
    %v368 = vld [vmem:[#allocation5 + $0x7f0] sm:$0xff]
    %v369 = vld [vmem:[#allocation5 + $0x7f8] sm:$0xff]
    %v370 = vld [vmem:[#allocation5 + $0x800] sm:$0xff]
    %v371 = vld [vmem:[#allocation5 + $0x808] sm:$0xff]
    %v372 = vld [vmem:[#allocation5 + $0x810] sm:$0xff]
    %v373 = vld [vmem:[#allocation5 + $0x818] sm:$0xff]
    %v374 = vld [vmem:[#allocation5 + $0x820] sm:$0xff]
    %v375 = vld [vmem:[#allocation5 + $0x828] sm:$0xff]
    %v376 = vld [vmem:[#allocation5 + $0x830] sm:$0xff]
    %v377 = vld [vmem:[#allocation5 + $0x838] sm:$0xff]
    %v378 = vld [vmem:[#allocation5 + $0x840] sm:$0xff]
    %v379 = vld [vmem:[#allocation5 + $0x848] sm:$0xff]
    %v380 = vld [vmem:[#allocation5 + $0x850] sm:$0xff]
    %v381 = vld [vmem:[#allocation5 + $0x858] sm:$0xff]
    %v382 = vld [vmem:[#allocation5 + $0x860] sm:$0xff]
    %v383 = vld [vmem:[#allocation5 + $0x868] sm:$0xff]
    %v384 = vld [vmem:[#allocation5 + $0x870] sm:$0xff]
    %v385 = vld [vmem:[#allocation5 + $0x878] sm:$0xff]
    %v386 = vld [vmem:[#allocation5 + $0x880] sm:$0xff]
    %v387 = vld [vmem:[#allocation5 + $0x888] sm:$0xff]
    %v388 = vld [vmem:[#allocation5 + $0x890] sm:$0xff]
    %v389 = vld [vmem:[#allocation5 + $0x898] sm:$0xff]
    %v390 = vld [vmem:[#allocation5 + $0x8a0] sm:$0xff]
    %v391 = vld [vmem:[#allocation5 + $0x8a8] sm:$0xff]
    %v392 = vld [vmem:[#allocation5 + $0x8b0] sm:$0xff]
    %v393 = vld [vmem:[#allocation5 + $0x8b8] sm:$0xff]
    %v394 = vld [vmem:[#allocation5 + $0x8c0] sm:$0xff]
    %v395 = vld [vmem:[#allocation5 + $0x8c8] sm:$0xff]
    %v396 = vld [vmem:[#allocation5 + $0x8d0] sm:$0xff]
    %v397 = vld [vmem:[#allocation5 + $0x8d8] sm:$0xff]
    %v398 = vld [vmem:[#allocation5 + $0x8e0] sm:$0xff]
    %v399 = vld [vmem:[#allocation5 + $0x8e8] sm:$0xff]
    %v400 = vld [vmem:[#allocation5 + $0x8f0] sm:$0xff]
    %v401 = vld [vmem:[#allocation5 + $0x8f8] sm:$0xff]
    %v402 = vld [vmem:[#allocation5 + $0x900] sm:$0xff]
    %v403 = vld [vmem:[#allocation5 + $0x908] sm:$0xff]
    %v404 = vld [vmem:[#allocation5 + $0x910] sm:$0xff]
    %v405 = vld [vmem:[#allocation5 + $0x918] sm:$0xff]
    %v406 = vld [vmem:[#allocation5 + $0x920] sm:$0xff]
    %v407 = vld [vmem:[#allocation5 + $0x928] sm:$0xff]
    %v408 = vld [vmem:[#allocation5 + $0x930] sm:$0xff]
    %v409 = vld [vmem:[#allocation5 + $0x938] sm:$0xff]
    %v410 = vld [vmem:[#allocation5 + $0x940] sm:$0xff]
    %v411 = vld [vmem:[#allocation5 + $0x948] sm:$0xff]
    %v412 = vld [vmem:[#allocation5 + $0x950] sm:$0xff]
    %v413 = vld [vmem:[#allocation5 + $0x958] sm:$0xff]
    %v414 = vld [vmem:[#allocation5 + $0x960] sm:$0xff]
    %v415 = vld [vmem:[#allocation5 + $0x968] sm:$0xff]
    %v416 = vld [vmem:[#allocation5 + $0x970] sm:$0xff]
    %v417 = vld [vmem:[#allocation5 + $0x978] sm:$0xff]
    %v418 = vld [vmem:[#allocation5 + $0x980] sm:$0xff]
    %v419 = vld [vmem:[#allocation5 + $0x988] sm:$0xff]
    %v420 = vld [vmem:[#allocation5 + $0x990] sm:$0xff]
    %v421 = vld [vmem:[#allocation5 + $0x998] sm:$0xff]
    %v422 = vld [vmem:[#allocation5 + $0x9a0] sm:$0xff]
    %v423 = vld [vmem:[#allocation5 + $0x9a8] sm:$0xff]
    %v424 = vld [vmem:[#allocation5 + $0x9b0] sm:$0xff]
    %v425 = vld [vmem:[#allocation5 + $0x9b8] sm:$0xff]
    %v426 = vld [vmem:[#allocation5 + $0x9c0] sm:$0xff]
    %v427 = vld [vmem:[#allocation5 + $0x9c8] sm:$0xff]
    %v428 = vld [vmem:[#allocation5 + $0x9d0] sm:$0xff]
    %v429 = vld [vmem:[#allocation5 + $0x9d8] sm:$0xff]
    %v430 = vld [vmem:[#allocation5 + $0x9e0] sm:$0xff]
    %v431 = vld [vmem:[#allocation5 + $0x9e8] sm:$0xff]
    %v432 = vld [vmem:[#allocation5 + $0x9f0] sm:$0xff]
    %v433 = vld [vmem:[#allocation5 + $0x9f8] sm:$0xff]
    %v434 = vld [vmem:[#allocation5 + $0xa00] sm:$0xff]
    %v435 = vld [vmem:[#allocation5 + $0xa08] sm:$0xff]
    %v436 = vld [vmem:[#allocation5 + $0xa10] sm:$0xff]
    %v437 = vld [vmem:[#allocation5 + $0xa18] sm:$0xff]
    %v438 = vld [vmem:[#allocation5 + $0xa20] sm:$0xff]
    %v439 = vld [vmem:[#allocation5 + $0xa28] sm:$0xff]
    %v440 = vld [vmem:[#allocation5 + $0xa30] sm:$0xff]
    %v441 = vld [vmem:[#allocation5 + $0xa38] sm:$0xff]
    %v442 = vld [vmem:[#allocation5 + $0xa40] sm:$0xff]
    %v443 = vld [vmem:[#allocation5 + $0xa48] sm:$0xff]
    %v444 = vld [vmem:[#allocation5 + $0xa50] sm:$0xff]
    %v445 = vld [vmem:[#allocation5 + $0xa58] sm:$0xff]
    %v446 = vld [vmem:[#allocation5 + $0xa60] sm:$0xff]
    %v447 = vld [vmem:[#allocation5 + $0xa68] sm:$0xff]
    %v448 = vld [vmem:[#allocation5 + $0xa70] sm:$0xff]
    %v449 = vld [vmem:[#allocation5 + $0xa78] sm:$0xff]
    %v450 = vld [vmem:[#allocation5 + $0xa80] sm:$0xff]
    %v451 = vld [vmem:[#allocation5 + $0xa88] sm:$0xff]
    %v452 = vld [vmem:[#allocation5 + $0xa90] sm:$0xff]
    %v453 = vld [vmem:[#allocation5 + $0xa98] sm:$0xff]
    %v454 = vld [vmem:[#allocation5 + $0xaa0] sm:$0xff]
    %v455 = vld [vmem:[#allocation5 + $0xaa8] sm:$0xff]
    %v456 = vld [vmem:[#allocation5 + $0xab0] sm:$0xff]
    %v457 = vld [vmem:[#allocation5 + $0xab8] sm:$0xff]
    %v458 = vld [vmem:[#allocation5 + $0xac0] sm:$0xff]
    %v459 = vld [vmem:[#allocation5 + $0xac8] sm:$0xff]
    %v460 = vld [vmem:[#allocation5 + $0xad0] sm:$0xff]
    %v461 = vld [vmem:[#allocation5 + $0xad8] sm:$0xff]
    %v462 = vld [vmem:[#allocation5 + $0xae0] sm:$0xff]
    %v463 = vld [vmem:[#allocation5 + $0xae8] sm:$0xff]
    %v464 = vld [vmem:[#allocation5 + $0xaf0] sm:$0xff]
    %v465 = vld [vmem:[#allocation5 + $0xaf8] sm:$0xff]
    %v466 = vld [vmem:[#allocation5 + $0xb00] sm:$0xff]
    %v467 = vld [vmem:[#allocation5 + $0xb08] sm:$0xff]
    %v468 = vld [vmem:[#allocation5 + $0xb10] sm:$0xff]
    %v469 = vld [vmem:[#allocation5 + $0xb18] sm:$0xff]
    %v470 = vld [vmem:[#allocation5 + $0xb20] sm:$0xff]
    %v471 = vld [vmem:[#allocation5 + $0xb28] sm:$0xff]
    %v472 = vld [vmem:[#allocation5 + $0xb30] sm:$0xff]
    %v473 = vld [vmem:[#allocation5 + $0xb38] sm:$0xff]
    %v474 = vld [vmem:[#allocation5 + $0xb40] sm:$0xff]
    %v475 = vld [vmem:[#allocation5 + $0xb48] sm:$0xff]
    %v476 = vld [vmem:[#allocation5 + $0xb50] sm:$0xff]
    %v477 = vld [vmem:[#allocation5 + $0xb58] sm:$0xff]
    %v478 = vld [vmem:[#allocation5 + $0xb60] sm:$0xff]
    %v479 = vld [vmem:[#allocation5 + $0xb68] sm:$0xff]
    %v480 = vld [vmem:[#allocation5 + $0xb70] sm:$0xff]
    %v481 = vld [vmem:[#allocation5 + $0xb78] sm:$0xff]
    %v482 = vld [vmem:[#allocation5 + $0xb80] sm:$0xff]
    %v483 = vld [vmem:[#allocation5 + $0xb88] sm:$0xff]
    %v484 = vld [vmem:[#allocation5 + $0xb90] sm:$0xff]
    %v485 = vld [vmem:[#allocation5 + $0xb98] sm:$0xff]
    %v486 = vld [vmem:[#allocation5 + $0xba0] sm:$0xff]
    %v487 = vld [vmem:[#allocation5 + $0xba8] sm:$0xff]
    %v488 = vld [vmem:[#allocation5 + $0xbb0] sm:$0xff]
    %v489 = vld [vmem:[#allocation5 + $0xbb8] sm:$0xff]
    %v490 = vld [vmem:[#allocation5 + $0xbc0] sm:$0xff]
    %v491 = vld [vmem:[#allocation5 + $0xbc8] sm:$0xff]
    %v492 = vld [vmem:[#allocation5 + $0xbd0] sm:$0xff]
    %v493 = vld [vmem:[#allocation5 + $0xbd8] sm:$0xff]
    %v494 = vld [vmem:[#allocation5 + $0xbe0] sm:$0xff]
    %v495 = vld [vmem:[#allocation5 + $0xbe8] sm:$0xff]
    %v496 = vld [vmem:[#allocation5 + $0xbf0] sm:$0xff]
    %v497 = vld [vmem:[#allocation5 + $0xbf8] sm:$0xff]
    %v498 = vld [vmem:[#allocation5 + $0xc00] sm:$0xff]
    %v499 = vld [vmem:[#allocation5 + $0xc08] sm:$0xff]
    %v500 = vld [vmem:[#allocation5 + $0xc10] sm:$0xff]
    %v501 = vld [vmem:[#allocation5 + $0xc18] sm:$0xff]
    %v502 = vld [vmem:[#allocation5 + $0xc20] sm:$0xff]
    %v503 = vld [vmem:[#allocation5 + $0xc28] sm:$0xff]
    %v504 = vld [vmem:[#allocation5 + $0xc30] sm:$0xff]
    %v505 = vld [vmem:[#allocation5 + $0xc38] sm:$0xff]
    %v506 = vld [vmem:[#allocation5 + $0xc40] sm:$0xff]
    %v507 = vld [vmem:[#allocation5 + $0xc48] sm:$0xff]
    %v508 = vld [vmem:[#allocation5 + $0xc50] sm:$0xff]
    %v509 = vld [vmem:[#allocation5 + $0xc58] sm:$0xff]
    %v510 = vld [vmem:[#allocation5 + $0xc60] sm:$0xff]
    %v511 = vld [vmem:[#allocation5 + $0xc68] sm:$0xff]
    %v512 = vld [vmem:[#allocation5 + $0xc70] sm:$0xff]
    %v513 = vld [vmem:[#allocation5 + $0xc78] sm:$0xff]
    %v514 = vld [vmem:[#allocation5 + $0xc80] sm:$0xff]
    %v515 = vld [vmem:[#allocation5 + $0xc88] sm:$0xff]
    %v516 = vld [vmem:[#allocation5 + $0xc90] sm:$0xff]
    %v517 = vld [vmem:[#allocation5 + $0xc98] sm:$0xff]
    %v518 = vld [vmem:[#allocation5 + $0xca0] sm:$0xff]
    %v519 = vld [vmem:[#allocation5 + $0xca8] sm:$0xff]
    %v520 = vld [vmem:[#allocation5 + $0xcb0] sm:$0xff]
    %v521 = vld [vmem:[#allocation5 + $0xcb8] sm:$0xff]
    %v522 = vld [vmem:[#allocation5 + $0xcc0] sm:$0xff]
    %v523 = vld [vmem:[#allocation5 + $0xcc8] sm:$0xff]
    %v524 = vld [vmem:[#allocation5 + $0xcd0] sm:$0xff]
    %v525 = vld [vmem:[#allocation5 + $0xcd8] sm:$0xff]
    %v526 = vld [vmem:[#allocation5 + $0xce0] sm:$0xff]
    %v527 = vld [vmem:[#allocation5 + $0xce8] sm:$0xff]
    %v528 = vld [vmem:[#allocation5 + $0xcf0] sm:$0xff]
    %v529 = vld [vmem:[#allocation5 + $0xcf8] sm:$0xff]
    %v530 = vld [vmem:[#allocation5 + $0xd00] sm:$0xff]
    %v531 = vld [vmem:[#allocation5 + $0xd08] sm:$0xff]
    %v532 = vld [vmem:[#allocation5 + $0xd10] sm:$0xff]
    %v533 = vld [vmem:[#allocation5 + $0xd18] sm:$0xff]
    %v534 = vld [vmem:[#allocation5 + $0xd20] sm:$0xff]
    %v535 = vld [vmem:[#allocation5 + $0xd28] sm:$0xff]
    %v536 = vld [vmem:[#allocation5 + $0xd30] sm:$0xff]
    %v537 = vld [vmem:[#allocation5 + $0xd38] sm:$0xff]
    %v538 = vld [vmem:[#allocation5 + $0xd40] sm:$0xff]
    %v539 = vld [vmem:[#allocation5 + $0xd48] sm:$0xff]
    %v540 = vld [vmem:[#allocation5 + $0xd50] sm:$0xff]
    %v541 = vld [vmem:[#allocation5 + $0xd58] sm:$0xff]
    %v542 = vld [vmem:[#allocation5 + $0xd60] sm:$0xff]
    %v543 = vld [vmem:[#allocation5 + $0xd68] sm:$0xff]
    %v544 = vld [vmem:[#allocation5 + $0xd70] sm:$0xff]
    %v545 = vld [vmem:[#allocation5 + $0xd78] sm:$0xff]
    %v546 = vld [vmem:[#allocation5 + $0xd80] sm:$0xff]
    %v547 = vld [vmem:[#allocation5 + $0xd88] sm:$0xff]
    %v548 = vld [vmem:[#allocation5 + $0xd90] sm:$0xff]
    %v549 = vld [vmem:[#allocation5 + $0xd98] sm:$0xff]
    %v550 = vld [vmem:[#allocation5 + $0xda0] sm:$0xff]
    %v551 = vld [vmem:[#allocation5 + $0xda8] sm:$0xff]
    %v552 = vld [vmem:[#allocation5 + $0xdb0] sm:$0xff]
    %v553 = vld [vmem:[#allocation5 + $0xdb8] sm:$0xff]
    %v554 = vld [vmem:[#allocation5 + $0xdc0] sm:$0xff]
    %v555 = vld [vmem:[#allocation5 + $0xdc8] sm:$0xff]
    %v556 = vld [vmem:[#allocation5 + $0xdd0] sm:$0xff]
    %v557 = vld [vmem:[#allocation5 + $0xdd8] sm:$0xff]
    %v558 = vld [vmem:[#allocation5 + $0xde0] sm:$0xff]
    %v559 = vld [vmem:[#allocation5 + $0xde8] sm:$0xff]
    %v560 = vld [vmem:[#allocation5 + $0xdf0] sm:$0xff]
    %v561 = vld [vmem:[#allocation5 + $0xdf8] sm:$0xff]
    %v562 = vld [vmem:[#allocation5 + $0xe00] sm:$0xff]
    %v563 = vld [vmem:[#allocation5 + $0xe08] sm:$0xff]
    %v564 = vld [vmem:[#allocation5 + $0xe10] sm:$0xff]
    %v565 = vld [vmem:[#allocation5 + $0xe18] sm:$0xff]
    %v566 = vld [vmem:[#allocation5 + $0xe20] sm:$0xff]
    %v567 = vld [vmem:[#allocation5 + $0xe28] sm:$0xff]
    %v568 = vld [vmem:[#allocation5 + $0xe30] sm:$0xff]
    %v569 = vld [vmem:[#allocation5 + $0xe38] sm:$0xff]
    %v570 = vld [vmem:[#allocation5 + $0xe40] sm:$0xff]
    %v571 = vld [vmem:[#allocation5 + $0xe48] sm:$0xff]
    %v572 = vld [vmem:[#allocation5 + $0xe50] sm:$0xff]
    %v573 = vld [vmem:[#allocation5 + $0xe58] sm:$0xff]
    %v574 = vld [vmem:[#allocation5 + $0xe60] sm:$0xff]
    %v575 = vld [vmem:[#allocation5 + $0xe68] sm:$0xff]
    %v576 = vld [vmem:[#allocation5 + $0xe70] sm:$0xff]
    %v577 = vld [vmem:[#allocation5 + $0xe78] sm:$0xff]
    %v578 = vld [vmem:[#allocation5 + $0xe80] sm:$0xff]
    %v579 = vld [vmem:[#allocation5 + $0xe88] sm:$0xff]
    %v580 = vld [vmem:[#allocation5 + $0xe90] sm:$0xff]
    %v581 = vld [vmem:[#allocation5 + $0xe98] sm:$0xff]
    %v582 = vld [vmem:[#allocation5 + $0xea0] sm:$0xff]
    %v583 = vld [vmem:[#allocation5 + $0xea8] sm:$0xff]
    %v584 = vld [vmem:[#allocation5 + $0xeb0] sm:$0xff]
    %v585 = vld [vmem:[#allocation5 + $0xeb8] sm:$0xff]
    %v586 = vld [vmem:[#allocation5 + $0xec0] sm:$0xff]
    %v587 = vld [vmem:[#allocation5 + $0xec8] sm:$0xff]
    %v588 = vld [vmem:[#allocation5 + $0xed0] sm:$0xff]
    %v589 = vld [vmem:[#allocation5 + $0xed8] sm:$0xff]
    %v590 = vld [vmem:[#allocation5 + $0xee0] sm:$0xff]
    %v591 = vld [vmem:[#allocation5 + $0xee8] sm:$0xff]
    %v592 = vld [vmem:[#allocation5 + $0xef0] sm:$0xff]
    %v593 = vld [vmem:[#allocation5 + $0xef8] sm:$0xff]
    %v594 = vld [vmem:[#allocation5 + $0xf00] sm:$0xff]
    %v595 = vld [vmem:[#allocation5 + $0xf08] sm:$0xff]
    %v596 = vld [vmem:[#allocation5 + $0xf10] sm:$0xff]
    %v597 = vld [vmem:[#allocation5 + $0xf18] sm:$0xff]
    %v598 = vld [vmem:[#allocation5 + $0xf20] sm:$0xff]
    %v599 = vld [vmem:[#allocation5 + $0xf28] sm:$0xff]
    %v600 = vld [vmem:[#allocation5 + $0xf30] sm:$0xff]
    %v601 = vld [vmem:[#allocation5 + $0xf38] sm:$0xff]
    %v602 = vld [vmem:[#allocation5 + $0xf40] sm:$0xff]
    %v603 = vld [vmem:[#allocation5 + $0xf48] sm:$0xff]
    %v604 = vld [vmem:[#allocation5 + $0xf50] sm:$0xff]
    %v605 = vld [vmem:[#allocation5 + $0xf58] sm:$0xff]
    %v606 = vld [vmem:[#allocation5 + $0xf60] sm:$0xff]
    %v607 = vld [vmem:[#allocation5 + $0xf68] sm:$0xff]
    %v608 = vld [vmem:[#allocation5 + $0xf70] sm:$0xff]
    %v609 = vld [vmem:[#allocation5 + $0xf78] sm:$0xff]
    %v610 = vld [vmem:[#allocation5 + $0xf80] sm:$0xff]
    %v611 = vld [vmem:[#allocation5 + $0xf88] sm:$0xff]
    %v612 = vld [vmem:[#allocation5 + $0xf90] sm:$0xff]
    %v613 = vld [vmem:[#allocation5 + $0xf98] sm:$0xff]
    %v614 = vld [vmem:[#allocation5 + $0xfa0] sm:$0xff]
    %v615 = vld [vmem:[#allocation5 + $0xfa8] sm:$0xff]
    %v616 = vld [vmem:[#allocation5 + $0xfb0] sm:$0xff]
    %v617 = vld [vmem:[#allocation5 + $0xfb8] sm:$0xff]
    %v618 = vld [vmem:[#allocation5 + $0xfc0] sm:$0xff]
    %v619 = vld [vmem:[#allocation5 + $0xfc8] sm:$0xff]
    %v620 = vld [vmem:[#allocation5 + $0xfd0] sm:$0xff]
    %v621 = vld [vmem:[#allocation5 + $0xfd8] sm:$0xff]
    %v622 = vld [vmem:[#allocation5 + $0xfe0] sm:$0xff]
    %v623 = vld [vmem:[#allocation5 + $0xfe8] sm:$0xff]
    %v624 = vld [vmem:[#allocation5 + $0xff0] sm:$0xff]
    %v625 = vld [vmem:[#allocation5 + $0xff8] sm:$0xff]
    %v626 = vld [vmem:[#allocation5 + $0x1000] sm:$0xff]
    %v627 = vld [vmem:[#allocation5 + $0x1008] sm:$0xff]
    %v628 = vld [vmem:[#allocation5 + $0x1010] sm:$0xff]
    %v629 = vld [vmem:[#allocation5 + $0x1018] sm:$0xff]
    %v630 = vld [vmem:[#allocation5 + $0x1020] sm:$0xff]
    %v631 = vld [vmem:[#allocation5 + $0x1028] sm:$0xff]
    %v632 = vld [vmem:[#allocation5 + $0x1030] sm:$0xff]
    %v633 = vld [vmem:[#allocation5 + $0x1038] sm:$0xff]
    %v634 = vld [vmem:[#allocation5 + $0x1040] sm:$0xff]
    %v635 = vld [vmem:[#allocation5 + $0x1048] sm:$0xff]
    %v636 = vld [vmem:[#allocation5 + $0x1050] sm:$0xff]
    %v637 = vld [vmem:[#allocation5 + $0x1058] sm:$0xff]
    %v638 = vld [vmem:[#allocation5 + $0x1060] sm:$0xff]
    %v639 = vld [vmem:[#allocation5 + $0x1068] sm:$0xff]
    %v640 = vld [vmem:[#allocation5 + $0x1070] sm:$0xff]
    %v641 = vld [vmem:[#allocation5 + $0x1078] sm:$0xff]
    %v642 = vld [vmem:[#allocation5 + $0x1080] sm:$0xff]
    %v643 = vld [vmem:[#allocation5 + $0x1088] sm:$0xff]
    %v644 = vld [vmem:[#allocation5 + $0x1090] sm:$0xff]
    %v645 = vld [vmem:[#allocation5 + $0x1098] sm:$0xff]
    %v646 = vld [vmem:[#allocation5 + $0x10a0] sm:$0xff]
    %v647 = vld [vmem:[#allocation5 + $0x10a8] sm:$0xff]
    %v648 = vld [vmem:[#allocation5 + $0x10b0] sm:$0xff]
    %v649 = vld [vmem:[#allocation5 + $0x10b8] sm:$0xff]
    %v650 = vld [vmem:[#allocation5 + $0x10c0] sm:$0xff]
    %v651 = vld [vmem:[#allocation5 + $0x10c8] sm:$0xff]
    %v652 = vld [vmem:[#allocation5 + $0x10d0] sm:$0xff]
    %v653 = vld [vmem:[#allocation5 + $0x10d8] sm:$0xff]
    %v654 = vld [vmem:[#allocation5 + $0x10e0] sm:$0xff]
    %v655 = vld [vmem:[#allocation5 + $0x10e8] sm:$0xff]
    %v656 = vld [vmem:[#allocation5 + $0x10f0] sm:$0xff]
    %v657 = vld [vmem:[#allocation5 + $0x10f8] sm:$0xff]
    %v658 = vld [vmem:[#allocation5 + $0x1100] sm:$0xff]
    %v659 = vld [vmem:[#allocation5 + $0x1108] sm:$0xff]
    %v660 = vld [vmem:[#allocation5 + $0x1110] sm:$0xff]
    %v661 = vld [vmem:[#allocation5 + $0x1118] sm:$0xff]
    %v662 = vld [vmem:[#allocation5 + $0x1120] sm:$0xff]
    %v663 = vld [vmem:[#allocation5 + $0x1128] sm:$0xff]
    %v664 = vld [vmem:[#allocation5 + $0x1130] sm:$0xff]
    %v665 = vld [vmem:[#allocation5 + $0x1138] sm:$0xff]
    %v666 = vld [vmem:[#allocation5 + $0x1140] sm:$0xff]
    %v667 = vld [vmem:[#allocation5 + $0x1148] sm:$0xff]
    %v668 = vld [vmem:[#allocation5 + $0x1150] sm:$0xff]
    %v669 = vld [vmem:[#allocation5 + $0x1158] sm:$0xff]
    %v670 = vld [vmem:[#allocation5 + $0x1160] sm:$0xff]
    %v671 = vld [vmem:[#allocation5 + $0x1168] sm:$0xff]
    %v672 = vld [vmem:[#allocation5 + $0x1170] sm:$0xff]
    %v673 = vld [vmem:[#allocation5 + $0x1178] sm:$0xff]
    %v674 = vld [vmem:[#allocation5 + $0x1180] sm:$0xff]
    %v675 = vld [vmem:[#allocation5 + $0x1188] sm:$0xff]
    %v676 = vld [vmem:[#allocation5 + $0x1190] sm:$0xff]
    %v677 = vld [vmem:[#allocation5 + $0x1198] sm:$0xff]
    %v678 = vld [vmem:[#allocation5 + $0x11a0] sm:$0xff]
    %v679 = vld [vmem:[#allocation5 + $0x11a8] sm:$0xff]
    %v680 = vld [vmem:[#allocation5 + $0x11b0] sm:$0xff]
    %v681 = vld [vmem:[#allocation5 + $0x11b8] sm:$0xff]
    %v682 = vld [vmem:[#allocation5 + $0x11c0] sm:$0xff]
    %v683 = vld [vmem:[#allocation5 + $0x11c8] sm:$0xff]
    %v684 = vld [vmem:[#allocation5 + $0x11d0] sm:$0xff]
    %v685 = vld [vmem:[#allocation5 + $0x11d8] sm:$0xff]
    %v686 = vld [vmem:[#allocation5 + $0x11e0] sm:$0xff]
    %v687 = vld [vmem:[#allocation5 + $0x11e8] sm:$0xff]
    %v688 = vld [vmem:[#allocation5 + $0x11f0] sm:$0xff]
    %v689 = vld [vmem:[#allocation5 + $0x11f8] sm:$0xff]
    %v690 = vld [vmem:[#allocation5 + $0x1200] sm:$0xff]
    %v691 = vld [vmem:[#allocation5 + $0x1208] sm:$0xff]
    %v692 = vld [vmem:[#allocation5 + $0x1210] sm:$0xff]
    %v693 = vld [vmem:[#allocation5 + $0x1218] sm:$0xff]
    %v694 = vld [vmem:[#allocation5 + $0x1220] sm:$0xff]
    %v695 = vld [vmem:[#allocation5 + $0x1228] sm:$0xff]
    %v696 = vld [vmem:[#allocation5 + $0x1230] sm:$0xff]
    %v697 = vld [vmem:[#allocation5 + $0x1238] sm:$0xff]
    %v698 = vld [vmem:[#allocation5 + $0x1240] sm:$0xff]
    %v699 = vld [vmem:[#allocation5 + $0x1248] sm:$0xff]
    %v700 = vld [vmem:[#allocation5 + $0x1250] sm:$0xff]
    %v701 = vld [vmem:[#allocation5 + $0x1258] sm:$0xff]
    %v702 = vld [vmem:[#allocation5 + $0x1260] sm:$0xff]
    %v703 = vld [vmem:[#allocation5 + $0x1268] sm:$0xff]
    %v704 = vld [vmem:[#allocation5 + $0x1270] sm:$0xff]
    %v705 = vld [vmem:[#allocation5 + $0x1278] sm:$0xff]
    %v706 = vld [vmem:[#allocation5 + $0x1280] sm:$0xff]
    %v707 = vld [vmem:[#allocation5 + $0x1288] sm:$0xff]
    %v708 = vld [vmem:[#allocation5 + $0x1290] sm:$0xff]
    %v709 = vld [vmem:[#allocation5 + $0x1298] sm:$0xff]
    %v710 = vld [vmem:[#allocation5 + $0x12a0] sm:$0xff]
    %v711 = vld [vmem:[#allocation5 + $0x12a8] sm:$0xff]
    %v712 = vld [vmem:[#allocation5 + $0x12b0] sm:$0xff]
    %v713 = vld [vmem:[#allocation5 + $0x12b8] sm:$0xff]
    %v714 = vld [vmem:[#allocation5 + $0x12c0] sm:$0xff]
    %v715 = vld [vmem:[#allocation5 + $0x12c8] sm:$0xff]
    %v716 = vld [vmem:[#allocation5 + $0x12d0] sm:$0xff]
    %v717 = vld [vmem:[#allocation5 + $0x12d8] sm:$0xff]
    %v718 = vld [vmem:[#allocation5 + $0x12e0] sm:$0xff]
    %v719 = vld [vmem:[#allocation5 + $0x12e8] sm:$0xff]
    %v720 = vld [vmem:[#allocation5 + $0x12f0] sm:$0xff]
    %v721 = vld [vmem:[#allocation5 + $0x12f8] sm:$0xff]
    %v722 = vld [vmem:[#allocation5 + $0x1300] sm:$0xff]
    %v723 = vld [vmem:[#allocation5 + $0x1308] sm:$0xff]
    %v724 = vld [vmem:[#allocation5 + $0x1310] sm:$0xff]
    %v725 = vld [vmem:[#allocation5 + $0x1318] sm:$0xff]
    %v726 = vld [vmem:[#allocation5 + $0x1320] sm:$0xff]
    %v727 = vld [vmem:[#allocation5 + $0x1328] sm:$0xff]
    %v728 = vld [vmem:[#allocation5 + $0x1330] sm:$0xff]
    %v729 = vld [vmem:[#allocation5 + $0x1338] sm:$0xff]
    %v730 = vld [vmem:[#allocation5 + $0x1340] sm:$0xff]
    %v731 = vld [vmem:[#allocation5 + $0x1348] sm:$0xff]
    %v732 = vld [vmem:[#allocation5 + $0x1350] sm:$0xff]
    %v733 = vld [vmem:[#allocation5 + $0x1358] sm:$0xff]
    %v734 = vld [vmem:[#allocation5 + $0x1360] sm:$0xff]
    %v735 = vld [vmem:[#allocation5 + $0x1368] sm:$0xff]
    %v736 = vld [vmem:[#allocation5 + $0x1370] sm:$0xff]
    %v737 = vld [vmem:[#allocation5 + $0x1378] sm:$0xff]
    %v738 = vld [vmem:[#allocation5 + $0x1380] sm:$0xff]
    %v739 = vld [vmem:[#allocation5 + $0x1388] sm:$0xff]
    %v740 = vld [vmem:[#allocation5 + $0x1390] sm:$0xff]
    %v741 = vld [vmem:[#allocation5 + $0x1398] sm:$0xff]
    %v742 = vld [vmem:[#allocation5 + $0x13a0] sm:$0xff]
    %v743 = vld [vmem:[#allocation5 + $0x13a8] sm:$0xff]
    %v744 = vld [vmem:[#allocation5 + $0x13b0] sm:$0xff]
    %v745 = vld [vmem:[#allocation5 + $0x13b8] sm:$0xff]
    %v746 = vld [vmem:[#allocation5 + $0x13c0] sm:$0xff]
    %v747 = vld [vmem:[#allocation5 + $0x13c8] sm:$0xff]
    %v748 = vld [vmem:[#allocation5 + $0x13d0] sm:$0xff]
    %v749 = vld [vmem:[#allocation5 + $0x13d8] sm:$0xff]
    %v750 = vld [vmem:[#allocation5 + $0x13e0] sm:$0xff]
    %v751 = vld [vmem:[#allocation5 + $0x13e8] sm:$0xff]
    %v752 = vld [vmem:[#allocation5 + $0x13f0] sm:$0xff]
    %v753 = vld [vmem:[#allocation5 + $0x13f8] sm:$0xff]
    %v754 = vld [vmem:[#allocation5 + $0x1400] sm:$0xff]
    %v755 = vld [vmem:[#allocation5 + $0x1408] sm:$0xff]
    %v756 = vld [vmem:[#allocation5 + $0x1410] sm:$0xff]
    %v757 = vld [vmem:[#allocation5 + $0x1418] sm:$0xff]
    %v758 = vld [vmem:[#allocation5 + $0x1420] sm:$0xff]
    %v759 = vld [vmem:[#allocation5 + $0x1428] sm:$0xff]
    %v760 = vld [vmem:[#allocation5 + $0x1430] sm:$0xff]
    %v761 = vld [vmem:[#allocation5 + $0x1438] sm:$0xff]
    %v762 = vld [vmem:[#allocation5 + $0x1440] sm:$0xff]
    %v763 = vld [vmem:[#allocation5 + $0x1448] sm:$0xff]
    %v764 = vld [vmem:[#allocation5 + $0x1450] sm:$0xff]
    %v765 = vld [vmem:[#allocation5 + $0x1458] sm:$0xff]
    %v766 = vld [vmem:[#allocation5 + $0x1460] sm:$0xff]
    %v767 = vld [vmem:[#allocation5 + $0x1468] sm:$0xff]
    %v768 = vld [vmem:[#allocation5 + $0x1470] sm:$0xff]
    %v769 = vld [vmem:[#allocation5 + $0x1478] sm:$0xff]
    %v770 = vld [vmem:[#allocation5 + $0x1480] sm:$0xff]
    %v771 = vld [vmem:[#allocation5 + $0x1488] sm:$0xff]
    %v772 = vld [vmem:[#allocation5 + $0x1490] sm:$0xff]
    %v773 = vld [vmem:[#allocation5 + $0x1498] sm:$0xff]
    %v774 = vld [vmem:[#allocation5 + $0x14a0] sm:$0xff]
    %v775 = vld [vmem:[#allocation5 + $0x14a8] sm:$0xff]
    %v776 = vld [vmem:[#allocation5 + $0x14b0] sm:$0xff]
    %v777 = vld [vmem:[#allocation5 + $0x14b8] sm:$0xff]
    %v778 = vld [vmem:[#allocation5 + $0x14c0] sm:$0xff]
    %v779 = vld [vmem:[#allocation5 + $0x14c8] sm:$0xff]
    %v780 = vld [vmem:[#allocation5 + $0x14d0] sm:$0xff]
    %v781 = vld [vmem:[#allocation5 + $0x14d8] sm:$0xff]
    %v782 = vld [vmem:[#allocation5 + $0x14e0] sm:$0xff]
    %v783 = vld [vmem:[#allocation5 + $0x14e8] sm:$0xff]
    %v784 = vld [vmem:[#allocation5 + $0x14f0] sm:$0xff]
    %v785 = vld [vmem:[#allocation5 + $0x14f8] sm:$0xff]
    %v786 = vld [vmem:[#allocation5 + $0x1500] sm:$0xff]
    %v787 = vld [vmem:[#allocation5 + $0x1508] sm:$0xff]
    %v788 = vld [vmem:[#allocation5 + $0x1510] sm:$0xff]
    %v789 = vld [vmem:[#allocation5 + $0x1518] sm:$0xff]
    %v790 = vld [vmem:[#allocation5 + $0x1520] sm:$0xff]
    %v791 = vld [vmem:[#allocation5 + $0x1528] sm:$0xff]
    %v792 = vld [vmem:[#allocation5 + $0x1530] sm:$0xff]
    %v793 = vld [vmem:[#allocation5 + $0x1538] sm:$0xff]
    %v794 = vld [vmem:[#allocation5 + $0x1540] sm:$0xff]
    %v795 = vld [vmem:[#allocation5 + $0x1548] sm:$0xff]
    %v796 = vld [vmem:[#allocation5 + $0x1550] sm:$0xff]
    %v797 = vld [vmem:[#allocation5 + $0x1558] sm:$0xff]
    %v798 = vld [vmem:[#allocation5 + $0x1560] sm:$0xff]
    %v799 = vld [vmem:[#allocation5 + $0x1568] sm:$0xff]
    %v800 = vld [vmem:[#allocation5 + $0x1570] sm:$0xff]
    %v801 = vld [vmem:[#allocation5 + $0x1578] sm:$0xff]
    %v802 = vld [vmem:[#allocation5 + $0x1580] sm:$0xff]
    %v803 = vld [vmem:[#allocation5 + $0x1588] sm:$0xff]
    %v804 = vld [vmem:[#allocation5 + $0x1590] sm:$0xff]
    %v805 = vld [vmem:[#allocation5 + $0x1598] sm:$0xff]
    %v806 = vld [vmem:[#allocation5 + $0x15a0] sm:$0xff]
    %v807 = vld [vmem:[#allocation5 + $0x15a8] sm:$0xff]
    %v808 = vld [vmem:[#allocation5 + $0x15b0] sm:$0xff]
    %v809 = vld [vmem:[#allocation5 + $0x15b8] sm:$0xff]
    %v810 = vld [vmem:[#allocation5 + $0x15c0] sm:$0xff]
    %v811 = vld [vmem:[#allocation5 + $0x15c8] sm:$0xff]
    %v812 = vld [vmem:[#allocation5 + $0x15d0] sm:$0xff]
    %v813 = vld [vmem:[#allocation5 + $0x15d8] sm:$0xff]
    %v814 = vld [vmem:[#allocation5 + $0x15e0] sm:$0xff]
    %v815 = vld [vmem:[#allocation5 + $0x15e8] sm:$0xff]
    %v816 = vld [vmem:[#allocation5 + $0x15f0] sm:$0xff]
    %v817 = vld [vmem:[#allocation5 + $0x15f8] sm:$0xff]
    %v818 = vld [vmem:[#allocation5 + $0x1600] sm:$0xff]
    %v819 = vld [vmem:[#allocation5 + $0x1608] sm:$0xff]
    %v820 = vld [vmem:[#allocation5 + $0x1610] sm:$0xff]
    %v821 = vld [vmem:[#allocation5 + $0x1618] sm:$0xff]
    %v822 = vld [vmem:[#allocation5 + $0x1620] sm:$0xff]
    %v823 = vld [vmem:[#allocation5 + $0x1628] sm:$0xff]
    %v824 = vld [vmem:[#allocation5 + $0x1630] sm:$0xff]
    %v825 = vld [vmem:[#allocation5 + $0x1638] sm:$0xff]
    %v826 = vld [vmem:[#allocation5 + $0x1640] sm:$0xff]
    %v827 = vld [vmem:[#allocation5 + $0x1648] sm:$0xff]
    %v828 = vld [vmem:[#allocation5 + $0x1650] sm:$0xff]
    %v829 = vld [vmem:[#allocation5 + $0x1658] sm:$0xff]
    %v830 = vld [vmem:[#allocation5 + $0x1660] sm:$0xff]
    %v831 = vld [vmem:[#allocation5 + $0x1668] sm:$0xff]
    %v832 = vld [vmem:[#allocation5 + $0x1670] sm:$0xff]
    %v833 = vld [vmem:[#allocation5 + $0x1678] sm:$0xff]
    %v834 = vld [vmem:[#allocation5 + $0x1680] sm:$0xff]
    %v835 = vld [vmem:[#allocation5 + $0x1688] sm:$0xff]
    %v836 = vld [vmem:[#allocation5 + $0x1690] sm:$0xff]
    %v837 = vld [vmem:[#allocation5 + $0x1698] sm:$0xff]
    %v838 = vld [vmem:[#allocation5 + $0x16a0] sm:$0xff]
    %v839 = vld [vmem:[#allocation5 + $0x16a8] sm:$0xff]
    %v840 = vld [vmem:[#allocation5 + $0x16b0] sm:$0xff]
    %v841 = vld [vmem:[#allocation5 + $0x16b8] sm:$0xff]
    %v842 = vld [vmem:[#allocation5 + $0x16c0] sm:$0xff]
    %v843 = vld [vmem:[#allocation5 + $0x16c8] sm:$0xff]
    %v844 = vld [vmem:[#allocation5 + $0x16d0] sm:$0xff]
    %v845 = vld [vmem:[#allocation5 + $0x16d8] sm:$0xff]
    %v846 = vld [vmem:[#allocation5 + $0x16e0] sm:$0xff]
    %v847 = vld [vmem:[#allocation5 + $0x16e8] sm:$0xff]
    %v848 = vld [vmem:[#allocation5 + $0x16f0] sm:$0xff]
    %v849 = vld [vmem:[#allocation5 + $0x16f8] sm:$0xff]
    %v850 = vld [vmem:[#allocation5 + $0x1700] sm:$0xff]
    %v851 = vld [vmem:[#allocation5 + $0x1708] sm:$0xff]
    %v852 = vld [vmem:[#allocation5 + $0x1710] sm:$0xff]
    %v853 = vld [vmem:[#allocation5 + $0x1718] sm:$0xff]
    %v854 = vld [vmem:[#allocation5 + $0x1720] sm:$0xff]
    %v855 = vld [vmem:[#allocation5 + $0x1728] sm:$0xff]
    %v856 = vld [vmem:[#allocation5 + $0x1730] sm:$0xff]
    %v857 = vld [vmem:[#allocation5 + $0x1738] sm:$0xff]
    %v858 = vld [vmem:[#allocation5 + $0x1740] sm:$0xff]
    %v859 = vld [vmem:[#allocation5 + $0x1748] sm:$0xff]
    %v860 = vld [vmem:[#allocation5 + $0x1750] sm:$0xff]
    %v861 = vld [vmem:[#allocation5 + $0x1758] sm:$0xff]
    %v862 = vld [vmem:[#allocation5 + $0x1760] sm:$0xff]
    %v863 = vld [vmem:[#allocation5 + $0x1768] sm:$0xff]
    %v864 = vld [vmem:[#allocation5 + $0x1770] sm:$0xff]
    %v865 = vld [vmem:[#allocation5 + $0x1778] sm:$0xff]
    %v866 = vld [vmem:[#allocation5 + $0x1780] sm:$0xff]
    %v867 = vld [vmem:[#allocation5 + $0x1788] sm:$0xff]
    %v868 = vld [vmem:[#allocation5 + $0x1790] sm:$0xff]
    %v869 = vld [vmem:[#allocation5 + $0x1798] sm:$0xff]
    %v870 = vld [vmem:[#allocation5 + $0x17a0] sm:$0xff]
    %v871 = vld [vmem:[#allocation5 + $0x17a8] sm:$0xff]
    %v872 = vld [vmem:[#allocation5 + $0x17b0] sm:$0xff]
    %v873 = vld [vmem:[#allocation5 + $0x17b8] sm:$0xff]
    %v874 = vld [vmem:[#allocation5 + $0x17c0] sm:$0xff]
    %v875 = vld [vmem:[#allocation5 + $0x17c8] sm:$0xff]
    %v876 = vld [vmem:[#allocation5 + $0x17d0] sm:$0xff]
    %v877 = vld [vmem:[#allocation5 + $0x17d8] sm:$0xff]
    %v878 = vld [vmem:[#allocation5 + $0x17e0] sm:$0xff]
    %v879 = vld [vmem:[#allocation5 + $0x17e8] sm:$0xff]
    %v880 = vld [vmem:[#allocation5 + $0x17f0] sm:$0xff]
    %v881 = vld [vmem:[#allocation5 + $0x17f8] sm:$0xff]
    %v882 = vld [vmem:[#allocation5 + $0x1800] sm:$0xff]
    %v883 = vld [vmem:[#allocation5 + $0x1808] sm:$0xff]
    %v884 = vld [vmem:[#allocation5 + $0x1810] sm:$0xff]
    %v885 = vld [vmem:[#allocation5 + $0x1818] sm:$0xff]
    %v886 = vld [vmem:[#allocation5 + $0x1820] sm:$0xff]
    %v887 = vld [vmem:[#allocation5 + $0x1828] sm:$0xff]
    %v888 = vld [vmem:[#allocation5 + $0x1830] sm:$0xff]
    %v889 = vld [vmem:[#allocation5 + $0x1838] sm:$0xff]
    %v890 = vld [vmem:[#allocation5 + $0x1840] sm:$0xff]
    %v891 = vld [vmem:[#allocation5 + $0x1848] sm:$0xff]
    %v892 = vld [vmem:[#allocation5 + $0x1850] sm:$0xff]
    %v893 = vld [vmem:[#allocation5 + $0x1858] sm:$0xff]
    %v894 = vld [vmem:[#allocation5 + $0x1860] sm:$0xff]
    %v895 = vld [vmem:[#allocation5 + $0x1868] sm:$0xff]
    %v896 = vld [vmem:[#allocation5 + $0x1870] sm:$0xff]
    %v897 = vld [vmem:[#allocation5 + $0x1878] sm:$0xff]
    %v898 = vld [vmem:[#allocation5 + $0x1880] sm:$0xff]
    %v899 = vld [vmem:[#allocation5 + $0x1888] sm:$0xff]
    %v900 = vld [vmem:[#allocation5 + $0x1890] sm:$0xff]
    %v901 = vld [vmem:[#allocation5 + $0x1898] sm:$0xff]
    %v902 = vld [vmem:[#allocation5 + $0x18a0] sm:$0xff]
    %v903 = vld [vmem:[#allocation5 + $0x18a8] sm:$0xff]
    %v904 = vld [vmem:[#allocation5 + $0x18b0] sm:$0xff]
    %v905 = vld [vmem:[#allocation5 + $0x18b8] sm:$0xff]
    %v906 = vld [vmem:[#allocation5 + $0x18c0] sm:$0xff]
    %v907 = vld [vmem:[#allocation5 + $0x18c8] sm:$0xff]
    %v908 = vld [vmem:[#allocation5 + $0x18d0] sm:$0xff]
    %v909 = vld [vmem:[#allocation5 + $0x18d8] sm:$0xff]
    %v910 = vld [vmem:[#allocation5 + $0x18e0] sm:$0xff]
    %v911 = vld [vmem:[#allocation5 + $0x18e8] sm:$0xff]
    %v912 = vld [vmem:[#allocation5 + $0x18f0] sm:$0xff]
    %v913 = vld [vmem:[#allocation5 + $0x18f8] sm:$0xff]
    %v914 = vld [vmem:[#allocation5 + $0x1900] sm:$0xff]
    %v915 = vld [vmem:[#allocation5 + $0x1908] sm:$0xff]
    %v916 = vld [vmem:[#allocation5 + $0x1910] sm:$0xff]
    %v917 = vld [vmem:[#allocation5 + $0x1918] sm:$0xff]
    %v918 = vld [vmem:[#allocation5 + $0x1920] sm:$0xff]
    %v919 = vld [vmem:[#allocation5 + $0x1928] sm:$0xff]
    %v920 = vld [vmem:[#allocation5 + $0x1930] sm:$0xff]
    %v921 = vld [vmem:[#allocation5 + $0x1938] sm:$0xff]
    %v922 = vld [vmem:[#allocation5 + $0x1940] sm:$0xff]
    %v923 = vld [vmem:[#allocation5 + $0x1948] sm:$0xff]
    %v924 = vld [vmem:[#allocation5 + $0x1950] sm:$0xff]
    %v925 = vld [vmem:[#allocation5 + $0x1958] sm:$0xff]
    %v926 = vld [vmem:[#allocation5 + $0x1960] sm:$0xff]
    %v927 = vld [vmem:[#allocation5 + $0x1968] sm:$0xff]
    %v928 = vld [vmem:[#allocation5 + $0x1970] sm:$0xff]
    %v929 = vld [vmem:[#allocation5 + $0x1978] sm:$0xff]
    %v930 = vld [vmem:[#allocation5 + $0x1980] sm:$0xff]
    %v931 = vld [vmem:[#allocation5 + $0x1988] sm:$0xff]
    %v932 = vld [vmem:[#allocation5 + $0x1990] sm:$0xff]
    %v933 = vld [vmem:[#allocation5 + $0x1998] sm:$0xff]
    %v934 = vld [vmem:[#allocation5 + $0x19a0] sm:$0xff]
    %v935 = vld [vmem:[#allocation5 + $0x19a8] sm:$0xff]
    %v936 = vld [vmem:[#allocation5 + $0x19b0] sm:$0xff]
    %v937 = vld [vmem:[#allocation5 + $0x19b8] sm:$0xff]
    %v938 = vld [vmem:[#allocation5 + $0x19c0] sm:$0xff]
    %v939 = vld [vmem:[#allocation5 + $0x19c8] sm:$0xff]
    %v940 = vld [vmem:[#allocation5 + $0x19d0] sm:$0xff]
    %v941 = vld [vmem:[#allocation5 + $0x19d8] sm:$0xff]
    %v942 = vld [vmem:[#allocation5 + $0x19e0] sm:$0xff]
    %v943 = vld [vmem:[#allocation5 + $0x19e8] sm:$0xff]
    %v944 = vld [vmem:[#allocation5 + $0x19f0] sm:$0xff]
    %v945 = vld [vmem:[#allocation5 + $0x19f8] sm:$0xff]
    %v946 = vld [vmem:[#allocation5 + $0x1a00] sm:$0xff]
    %v947 = vld [vmem:[#allocation5 + $0x1a08] sm:$0xff]
    %v948 = vld [vmem:[#allocation5 + $0x1a10] sm:$0xff]
    %v949 = vld [vmem:[#allocation5 + $0x1a18] sm:$0xff]
    %v950 = vld [vmem:[#allocation5 + $0x1a20] sm:$0xff]
    %v951 = vld [vmem:[#allocation5 + $0x1a28] sm:$0xff]
    %v952 = vld [vmem:[#allocation5 + $0x1a30] sm:$0xff]
    %v953 = vld [vmem:[#allocation5 + $0x1a38] sm:$0xff]
    %v954 = vld [vmem:[#allocation5 + $0x1a40] sm:$0xff]
    %v955 = vld [vmem:[#allocation5 + $0x1a48] sm:$0xff]
    %v956 = vld [vmem:[#allocation5 + $0x1a50] sm:$0xff]
    %v957 = vld [vmem:[#allocation5 + $0x1a58] sm:$0xff]
    %v958 = vld [vmem:[#allocation5 + $0x1a60] sm:$0xff]
    %v959 = vld [vmem:[#allocation5 + $0x1a68] sm:$0xff]
    %v960 = vld [vmem:[#allocation5 + $0x1a70] sm:$0xff]
    %v961 = vld [vmem:[#allocation5 + $0x1a78] sm:$0xff]
    %v962 = vld [vmem:[#allocation5 + $0x1a80] sm:$0xff]
    %v963 = vld [vmem:[#allocation5 + $0x1a88] sm:$0xff]
    %v964 = vld [vmem:[#allocation5 + $0x1a90] sm:$0xff]
    %v965 = vld [vmem:[#allocation5 + $0x1a98] sm:$0xff]
    %v966 = vld [vmem:[#allocation5 + $0x1aa0] sm:$0xff]
    %v967 = vld [vmem:[#allocation5 + $0x1aa8] sm:$0xff]
    %v968 = vld [vmem:[#allocation5 + $0x1ab0] sm:$0xff]
    %v969 = vld [vmem:[#allocation5 + $0x1ab8] sm:$0xff]
    %v970 = vld [vmem:[#allocation5 + $0x1ac0] sm:$0xff]
    %v971 = vld [vmem:[#allocation5 + $0x1ac8] sm:$0xff]
    %v972 = vld [vmem:[#allocation5 + $0x1ad0] sm:$0xff]
    %v973 = vld [vmem:[#allocation5 + $0x1ad8] sm:$0xff]
    %v974 = vld [vmem:[#allocation5 + $0x1ae0] sm:$0xff]
    %v975 = vld [vmem:[#allocation5 + $0x1ae8] sm:$0xff]
    %v976 = vld [vmem:[#allocation5 + $0x1af0] sm:$0xff]
    %v977 = vld [vmem:[#allocation5 + $0x1af8] sm:$0xff]
    %v978 = vld [vmem:[#allocation5 + $0x1b00] sm:$0xff]
    %v979 = vld [vmem:[#allocation5 + $0x1b08] sm:$0xff]
    %v980 = vld [vmem:[#allocation5 + $0x1b10] sm:$0xff]
    %v981 = vld [vmem:[#allocation5 + $0x1b18] sm:$0xff]
    %v982 = vld [vmem:[#allocation5 + $0x1b20] sm:$0xff]
    %v983 = vld [vmem:[#allocation5 + $0x1b28] sm:$0xff]
    %v984 = vld [vmem:[#allocation5 + $0x1b30] sm:$0xff]
    %v985 = vld [vmem:[#allocation5 + $0x1b38] sm:$0xff]
    %v986 = vld [vmem:[#allocation5 + $0x1b40] sm:$0xff]
    %v987 = vld [vmem:[#allocation5 + $0x1b48] sm:$0xff]
    %v988 = vld [vmem:[#allocation5 + $0x1b50] sm:$0xff]
    %v989 = vld [vmem:[#allocation5 + $0x1b58] sm:$0xff]
    %v990 = vld [vmem:[#allocation5 + $0x1b60] sm:$0xff]
    %v991 = vld [vmem:[#allocation5 + $0x1b68] sm:$0xff]
    %v992 = vld [vmem:[#allocation5 + $0x1b70] sm:$0xff]
    %v993 = vld [vmem:[#allocation5 + $0x1b78] sm:$0xff]
    %v994 = vld [vmem:[#allocation5 + $0x1b80] sm:$0xff]
    %v995 = vld [vmem:[#allocation5 + $0x1b88] sm:$0xff]
    %v996 = vld [vmem:[#allocation5 + $0x1b90] sm:$0xff]
    %v997 = vld [vmem:[#allocation5 + $0x1b98] sm:$0xff]
    %v998 = vld [vmem:[#allocation5 + $0x1ba0] sm:$0xff]
    %v999 = vld [vmem:[#allocation5 + $0x1ba8] sm:$0xff]
    %v1000 = vld [vmem:[#allocation5 + $0x1bb0] sm:$0xff]
    %v1001 = vld [vmem:[#allocation5 + $0x1bb8] sm:$0xff]
    %v1002 = vld [vmem:[#allocation5 + $0x1bc0] sm:$0xff]
    %v1003 = vld [vmem:[#allocation5 + $0x1bc8] sm:$0xff]
    %v1004 = vld [vmem:[#allocation5 + $0x1bd0] sm:$0xff]
    %v1005 = vld [vmem:[#allocation5 + $0x1bd8] sm:$0xff]
    %v1006 = vld [vmem:[#allocation5 + $0x1be0] sm:$0xff]
    %v1007 = vld [vmem:[#allocation5 + $0x1be8] sm:$0xff]
    %v1008 = vld [vmem:[#allocation5 + $0x1bf0] sm:$0xff]
    %v1009 = vld [vmem:[#allocation5 + $0x1bf8] sm:$0xff]
    %v1010 = vld [vmem:[#allocation5 + $0x1c00] sm:$0xff]
    %v1011 = vld [vmem:[#allocation5 + $0x1c08] sm:$0xff]
    %v1012 = vld [vmem:[#allocation5 + $0x1c10] sm:$0xff]
    %v1013 = vld [vmem:[#allocation5 + $0x1c18] sm:$0xff]
    %v1014 = vld [vmem:[#allocation5 + $0x1c20] sm:$0xff]
    %v1015 = vld [vmem:[#allocation5 + $0x1c28] sm:$0xff]
    %v1016 = vld [vmem:[#allocation5 + $0x1c30] sm:$0xff]
    %v1017 = vld [vmem:[#allocation5 + $0x1c38] sm:$0xff]
    %v1018 = vld [vmem:[#allocation5 + $0x1c40] sm:$0xff]
    %v1019 = vld [vmem:[#allocation5 + $0x1c48] sm:$0xff]
    %v1020 = vld [vmem:[#allocation5 + $0x1c50] sm:$0xff]
    %v1021 = vld [vmem:[#allocation5 + $0x1c58] sm:$0xff]
    %v1022 = vld [vmem:[#allocation5 + $0x1c60] sm:$0xff]
    %v1023 = vld [vmem:[#allocation5 + $0x1c68] sm:$0xff]
    %v1024 = vld [vmem:[#allocation5 + $0x1c70] sm:$0xff]
    %v1025 = vld [vmem:[#allocation5 + $0x1c78] sm:$0xff]
    %v1026 = vld [vmem:[#allocation5 + $0x1c80] sm:$0xff]
    %v1027 = vld [vmem:[#allocation5 + $0x1c88] sm:$0xff]
    %v1028 = vld [vmem:[#allocation5 + $0x1c90] sm:$0xff]
    %v1029 = vld [vmem:[#allocation5 + $0x1c98] sm:$0xff]
    %v1030 = vld [vmem:[#allocation5 + $0x1ca0] sm:$0xff]
    %v1031 = vld [vmem:[#allocation5 + $0x1ca8] sm:$0xff]
    %v1032 = vld [vmem:[#allocation5 + $0x1cb0] sm:$0xff]
    %v1033 = vld [vmem:[#allocation5 + $0x1cb8] sm:$0xff]
    %v1034 = vld [vmem:[#allocation5 + $0x1cc0] sm:$0xff]
    %v1035 = vld [vmem:[#allocation5 + $0x1cc8] sm:$0xff]
    %v1036 = vld [vmem:[#allocation5 + $0x1cd0] sm:$0xff]
    %v1037 = vld [vmem:[#allocation5 + $0x1cd8] sm:$0xff]
    %v1038 = vld [vmem:[#allocation5 + $0x1ce0] sm:$0xff]
    %v1039 = vld [vmem:[#allocation5 + $0x1ce8] sm:$0xff]
    %v1040 = vld [vmem:[#allocation5 + $0x1cf0] sm:$0xff]
    %v1041 = vld [vmem:[#allocation5 + $0x1cf8] sm:$0xff]
    %v1042 = vld [vmem:[#allocation5 + $0x1d00] sm:$0xff]
    %v1043 = vld [vmem:[#allocation5 + $0x1d08] sm:$0xff]
    %v1044 = vld [vmem:[#allocation5 + $0x1d10] sm:$0xff]
    %v1045 = vld [vmem:[#allocation5 + $0x1d18] sm:$0xff]
    %v1046 = vld [vmem:[#allocation7] sm:$0xff]
    %v1048 = vlaneseq
    %v1049 = vshrl.u32 %v1048, 7
    %v1050 = vsub.s32 0, %v1049
    %v1051 = vrot.slane %v1046, %v1050
    %v1052 = vlaneseq
    %v1053 = vshrl.u32 %v1052, 7
    %v1054 = vsub.s32 1, %v1053
    %v1055 = vrot.slane %v1046, %v1054
    %v1056 = vlaneseq
    %v1057 = vshrl.u32 %v1056, 7
    %v1058 = vsub.s32 2, %v1057
    %v1059 = vrot.slane %v1046, %v1058
    %v1060 = vlaneseq
    %v1061 = vshrl.u32 %v1060, 7
    %v1062 = vsub.s32 3, %v1061
    %v1063 = vrot.slane %v1046, %v1062
    %v1064 = vlaneseq
    %v1065 = vshrl.u32 %v1064, 7
    %v1066 = vsub.s32 4, %v1065
    %v1067 = vrot.slane %v1046, %v1066
    %v1068 = vlaneseq
    %v1069 = vshrl.u32 %v1068, 7
    %v1070 = vsub.s32 5, %v1069
    %v1071 = vrot.slane %v1046, %v1070
    %v1072 = vlaneseq
    %v1073 = vshrl.u32 %v1072, 7
    %v1074 = vsub.s32 6, %v1073
    %v1075 = vrot.slane %v1046, %v1074
    %v1076 = vlaneseq
    %v1077 = vshrl.u32 %v1076, 7
    %v1078 = vsub.s32 7, %v1077
    %v1079 = vrot.slane %v1046, %v1078
    %v2020 = vunpack.c.l.b16 %v114
    %v2021 = vunpack.c.h.b16 %v114
    %v2022 = vunpack.c.l.b16 %v115
    %v2023 = vunpack.c.h.b16 %v115
    %v2024 = vunpack.c.l.b16 %v116
    %v2025 = vunpack.c.h.b16 %v116
    %v2026 = vunpack.c.l.b16 %v117
    %v2027 = vunpack.c.h.b16 %v117
    %v2028 = vunpack.c.l.b16 %v118
    %v2029 = vunpack.c.h.b16 %v118
    %v2030 = vunpack.c.l.b16 %v119
    %v2031 = vunpack.c.h.b16 %v119
    %v2032 = vunpack.c.l.b16 %v120
    %v2033 = vunpack.c.h.b16 %v120
    %v2034 = vunpack.c.l.b16 %v121
    %v2035 = vunpack.c.h.b16 %v121
    %v2036 = vunpack.c.l.b16 %v122
    %v2037 = vunpack.c.h.b16 %v122
    %v2038 = vunpack.c.l.b16 %v123
    %v2039 = vunpack.c.h.b16 %v123
    %v2040 = vunpack.c.l.b16 %v124
    %v2041 = vunpack.c.h.b16 %v124
    %v2042 = vunpack.c.l.b16 %v125
    %v2043 = vunpack.c.h.b16 %v125
    %v2044 = vunpack.c.l.b16 %v126
    %v2045 = vunpack.c.h.b16 %v126
    %v2046 = vunpack.c.l.b16 %v127
    %v2047 = vunpack.c.h.b16 %v127
    %v2048 = vunpack.c.l.b16 %v128
    %v2049 = vunpack.c.h.b16 %v128
    %v2050 = vunpack.c.l.b16 %v129
    %v2051 = vunpack.c.h.b16 %v129
    %v2052 = vunpack.c.l.b16 %v130
    %v2053 = vunpack.c.h.b16 %v130
    %v2054 = vunpack.c.l.b16 %v131
    %v2055 = vunpack.c.h.b16 %v131
    %v2056 = vunpack.c.l.b16 %v132
    %v2057 = vunpack.c.h.b16 %v132
    %v2058 = vunpack.c.l.b16 %v133
    %v2059 = vunpack.c.h.b16 %v133
    %v2060 = vunpack.c.l.b16 %v134
    %v2061 = vunpack.c.h.b16 %v134
    %v2062 = vunpack.c.l.b16 %v135
    %v2063 = vunpack.c.h.b16 %v135
    %v2064 = vunpack.c.l.b16 %v136
    %v2065 = vunpack.c.h.b16 %v136
    %v2066 = vunpack.c.l.b16 %v137
    %v2067 = vunpack.c.h.b16 %v137
    %v2068 = vunpack.c.l.b16 %v138
    %v2069 = vunpack.c.h.b16 %v138
    %v2070 = vunpack.c.l.b16 %v139
    %v2071 = vunpack.c.h.b16 %v139
    %v2072 = vunpack.c.l.b16 %v140
    %v2073 = vunpack.c.h.b16 %v140
    %v2074 = vunpack.c.l.b16 %v141
    %v2075 = vunpack.c.h.b16 %v141
    %v2076 = vunpack.c.l.b16 %v142
    %v2077 = vunpack.c.h.b16 %v142
    %v2078 = vunpack.c.l.b16 %v143
    %v2079 = vunpack.c.h.b16 %v143
    %v2080 = vunpack.c.l.b16 %v144
    %v2081 = vunpack.c.h.b16 %v144
    %v2082 = vunpack.c.l.b16 %v145
    %v2083 = vunpack.c.h.b16 %v145
    %v2084 = vunpack.c.l.b16 %v146
    %v2085 = vunpack.c.h.b16 %v146
    %v2086 = vunpack.c.l.b16 %v147
    %v2087 = vunpack.c.h.b16 %v147
    %v2088 = vunpack.c.l.b16 %v148
    %v2089 = vunpack.c.h.b16 %v148
    %v2090 = vunpack.c.l.b16 %v149
    %v2091 = vunpack.c.h.b16 %v149
    %v2092 = vunpack.c.l.b16 %v150
    %v2093 = vunpack.c.h.b16 %v150
    %v2094 = vunpack.c.l.b16 %v151
    %v2095 = vunpack.c.h.b16 %v151
    %v2096 = vunpack.c.l.b16 %v152
    %v2097 = vunpack.c.h.b16 %v152
    %v2098 = vunpack.c.l.b16 %v153
    %v2099 = vunpack.c.h.b16 %v153
    %v2100 = vunpack.c.l.b16 %v154
    %v2101 = vunpack.c.h.b16 %v154
    %v2102 = vunpack.c.l.b16 %v155
    %v2103 = vunpack.c.h.b16 %v155
    %v2104 = vunpack.c.l.b16 %v156
    %v2105 = vunpack.c.h.b16 %v156
    %v2106 = vunpack.c.l.b16 %v157
    %v2107 = vunpack.c.h.b16 %v157
    %v2108 = vunpack.c.l.b16 %v158
    %v2109 = vunpack.c.h.b16 %v158
    %v2110 = vunpack.c.l.b16 %v159
    %v2111 = vunpack.c.h.b16 %v159
    %v2112 = vunpack.c.l.b16 %v160
    %v2113 = vunpack.c.h.b16 %v160
    %v2114 = vunpack.c.l.b16 %v161
    %v2115 = vunpack.c.h.b16 %v161
    %v2116 = vunpack.c.l.b16 %v162
    %v2117 = vunpack.c.h.b16 %v162
    %v2118 = vunpack.c.l.b16 %v163
    %v2119 = vunpack.c.h.b16 %v163
    %v2120 = vunpack.c.l.b16 %v164
    %v2121 = vunpack.c.h.b16 %v164
    %v2122 = vunpack.c.l.b16 %v165
    %v2123 = vunpack.c.h.b16 %v165
    %v2124 = vunpack.c.l.b16 %v166
    %v2125 = vunpack.c.h.b16 %v166
    %v2126 = vunpack.c.l.b16 %v167
    %v2127 = vunpack.c.h.b16 %v167
    %v2128 = vunpack.c.l.b16 %v168
    %v2129 = vunpack.c.h.b16 %v168
    %v2130 = vunpack.c.l.b16 %v169
    %v2131 = vunpack.c.h.b16 %v169
    %v2132 = vunpack.c.l.b16 %v170
    %v2133 = vunpack.c.h.b16 %v170
    %v2134 = vunpack.c.l.b16 %v171
    %v2135 = vunpack.c.h.b16 %v171
    %v2136 = vunpack.c.l.b16 %v172
    %v2137 = vunpack.c.h.b16 %v172
    %v2138 = vunpack.c.l.b16 %v173
    %v2139 = vunpack.c.h.b16 %v173
    %v2140 = vunpack.c.l.b16 %v174
    %v2141 = vunpack.c.h.b16 %v174
    %v2142 = vunpack.c.l.b16 %v175
    %v2143 = vunpack.c.h.b16 %v175
    %v2144 = vunpack.c.l.b16 %v176
    %v2145 = vunpack.c.h.b16 %v176
    %v2146 = vunpack.c.l.b16 %v177
    %v2147 = vunpack.c.h.b16 %v177
    %v2148 = vunpack.c.l.b16 %v178
    %v2149 = vunpack.c.h.b16 %v178
    %v2150 = vunpack.c.l.b16 %v179
    %v2151 = vunpack.c.h.b16 %v179
    %v2152 = vunpack.c.l.b16 %v180
    %v2153 = vunpack.c.h.b16 %v180
    %v2154 = vunpack.c.l.b16 %v181
    %v2155 = vunpack.c.h.b16 %v181
    %v2156 = vunpack.c.l.b16 %v182
    %v2157 = vunpack.c.h.b16 %v182
    %v2158 = vunpack.c.l.b16 %v183
    %v2159 = vunpack.c.h.b16 %v183
    %v2160 = vunpack.c.l.b16 %v184
    %v2161 = vunpack.c.h.b16 %v184
    %v2162 = vunpack.c.l.b16 %v185
    %v2163 = vunpack.c.h.b16 %v185
    %v2164 = vunpack.c.l.b16 %v186
    %v2165 = vunpack.c.h.b16 %v186
    %v2166 = vunpack.c.l.b16 %v187
    %v2167 = vunpack.c.h.b16 %v187
    %v2168 = vunpack.c.l.b16 %v188
    %v2169 = vunpack.c.h.b16 %v188
    %v2170 = vunpack.c.l.b16 %v189
    %v2171 = vunpack.c.h.b16 %v189
    %v2172 = vunpack.c.l.b16 %v190
    %v2173 = vunpack.c.h.b16 %v190
    %v2174 = vunpack.c.l.b16 %v191
    %v2175 = vunpack.c.h.b16 %v191
    %v2176 = vunpack.c.l.b16 %v192
    %v2177 = vunpack.c.h.b16 %v192
    %v2178 = vunpack.c.l.b16 %v193
    %v2179 = vunpack.c.h.b16 %v193
    %v2180 = vunpack.c.l.b16 %v194
    %v2181 = vunpack.c.h.b16 %v194
    %v2182 = vunpack.c.l.b16 %v195
    %v2183 = vunpack.c.h.b16 %v195
    %v2184 = vunpack.c.l.b16 %v196
    %v2185 = vunpack.c.h.b16 %v196
    %v2186 = vunpack.c.l.b16 %v197
    %v2187 = vunpack.c.h.b16 %v197
    %v2188 = vunpack.c.l.b16 %v198
    %v2189 = vunpack.c.h.b16 %v198
    %v2190 = vunpack.c.l.b16 %v199
    %v2191 = vunpack.c.h.b16 %v199
    %v2192 = vunpack.c.l.b16 %v200
    %v2193 = vunpack.c.h.b16 %v200
    %v2194 = vunpack.c.l.b16 %v201
    %v2195 = vunpack.c.h.b16 %v201
    %v2196 = vunpack.c.l.b16 %v202
    %v2197 = vunpack.c.h.b16 %v202
    %v2198 = vunpack.c.l.b16 %v203
    %v2199 = vunpack.c.h.b16 %v203
    %v2200 = vunpack.c.l.b16 %v204
    %v2201 = vunpack.c.h.b16 %v204
    %v2202 = vunpack.c.l.b16 %v205
    %v2203 = vunpack.c.h.b16 %v205
    %v2204 = vunpack.c.l.b16 %v206
    %v2205 = vunpack.c.h.b16 %v206
    %v2206 = vunpack.c.l.b16 %v207
    %v2207 = vunpack.c.h.b16 %v207
    %v2208 = vunpack.c.l.b16 %v208
    %v2209 = vunpack.c.h.b16 %v208
    %v2210 = vunpack.c.l.b16 %v209
    %v2211 = vunpack.c.h.b16 %v209
    %v2212 = vunpack.c.l.b16 %v210
    %v2213 = vunpack.c.h.b16 %v210
    %v2214 = vunpack.c.l.b16 %v211
    %v2215 = vunpack.c.h.b16 %v211
    %v2216 = vunpack.c.l.b16 %v212
    %v2217 = vunpack.c.h.b16 %v212
    %v2218 = vunpack.c.l.b16 %v213
    %v2219 = vunpack.c.h.b16 %v213
    %v2220 = vunpack.c.l.b16 %v214
    %v2221 = vunpack.c.h.b16 %v214
    %v2222 = vunpack.c.l.b16 %v215
    %v2223 = vunpack.c.h.b16 %v215
    %v2224 = vunpack.c.l.b16 %v216
    %v2225 = vunpack.c.h.b16 %v216
    %v2226 = vunpack.c.l.b16 %v217
    %v2227 = vunpack.c.h.b16 %v217
    %v2228 = vunpack.c.l.b16 %v218
    %v2229 = vunpack.c.h.b16 %v218
    %v2230 = vunpack.c.l.b16 %v219
    %v2231 = vunpack.c.h.b16 %v219
    %v2232 = vunpack.c.l.b16 %v220
    %v2233 = vunpack.c.h.b16 %v220
    %v2234 = vunpack.c.l.b16 %v221
    %v2235 = vunpack.c.h.b16 %v221
    %v2236 = vunpack.c.l.b16 %v222
    %v2237 = vunpack.c.h.b16 %v222
    %v2238 = vunpack.c.l.b16 %v223
    %v2239 = vunpack.c.h.b16 %v223
    %v2240 = vunpack.c.l.b16 %v224
    %v2241 = vunpack.c.h.b16 %v224
    %v2242 = vunpack.c.l.b16 %v225
    %v2243 = vunpack.c.h.b16 %v225
    %v2244 = vunpack.c.l.b16 %v226
    %v2245 = vunpack.c.h.b16 %v226
    %v2246 = vunpack.c.l.b16 %v227
    %v2247 = vunpack.c.h.b16 %v227
    %v2248 = vunpack.c.l.b16 %v228
    %v2249 = vunpack.c.h.b16 %v228
    %v2250 = vunpack.c.l.b16 %v229
    %v2251 = vunpack.c.h.b16 %v229
    %v2252 = vunpack.c.l.b16 %v230
    %v2253 = vunpack.c.h.b16 %v230
    %v2254 = vunpack.c.l.b16 %v231
    %v2255 = vunpack.c.h.b16 %v231
    %v2256 = vunpack.c.l.b16 %v232
    %v2257 = vunpack.c.h.b16 %v232
    %v2258 = vunpack.c.l.b16 %v233
    %v2259 = vunpack.c.h.b16 %v233
    %v2260 = vunpack.c.l.b16 %v234
    %v2261 = vunpack.c.h.b16 %v234
    %v2262 = vunpack.c.l.b16 %v235
    %v2263 = vunpack.c.h.b16 %v235
    %v2264 = vunpack.c.l.b16 %v236
    %v2265 = vunpack.c.h.b16 %v236
    %v2266 = vunpack.c.l.b16 %v237
    %v2267 = vunpack.c.h.b16 %v237
    %v2268 = vunpack.c.l.b16 %v238
    %v2269 = vunpack.c.h.b16 %v238
    %v2270 = vunpack.c.l.b16 %v239
    %v2271 = vunpack.c.h.b16 %v239
    %v2272 = vunpack.c.l.b16 %v240
    %v2273 = vunpack.c.h.b16 %v240
    %v2274 = vunpack.c.l.b16 %v241
    %v2275 = vunpack.c.h.b16 %v241
    %v2276 = vunpack.c.l.b16 %v242
    %v2277 = vunpack.c.h.b16 %v242
    %v2278 = vunpack.c.l.b16 %v243
    %v2279 = vunpack.c.h.b16 %v243
    %v2280 = vunpack.c.l.b16 %v244
    %v2281 = vunpack.c.h.b16 %v244
    %v2282 = vunpack.c.l.b16 %v245
    %v2283 = vunpack.c.h.b16 %v245
    %v2284 = vunpack.c.l.b16 %v246
    %v2285 = vunpack.c.h.b16 %v246
    %v2286 = vunpack.c.l.b16 %v247
    %v2287 = vunpack.c.h.b16 %v247
    %v2288 = vunpack.c.l.b16 %v248
    %v2289 = vunpack.c.h.b16 %v248
    %v2290 = vunpack.c.l.b16 %v249
    %v2291 = vunpack.c.h.b16 %v249
    %v2292 = vunpack.c.l.b16 %v250
    %v2293 = vunpack.c.h.b16 %v250
    %v2294 = vunpack.c.l.b16 %v251
    %v2295 = vunpack.c.h.b16 %v251
    %v2296 = vunpack.c.l.b16 %v252
    %v2297 = vunpack.c.h.b16 %v252
    %v2298 = vunpack.c.l.b16 %v253
    %v2299 = vunpack.c.h.b16 %v253
    %v2300 = vunpack.c.l.b16 %v254
    %v2301 = vunpack.c.h.b16 %v254
    %v2302 = vunpack.c.l.b16 %v255
    %v2303 = vunpack.c.h.b16 %v255
    %v2304 = vunpack.c.l.b16 %v256
    %v2305 = vunpack.c.h.b16 %v256
    %v2306 = vunpack.c.l.b16 %v257
    %v2307 = vunpack.c.h.b16 %v257
    %v2308 = vunpack.c.l.b16 %v258
    %v2309 = vunpack.c.h.b16 %v258
    %v2310 = vunpack.c.l.b16 %v259
    %v2311 = vunpack.c.h.b16 %v259
    %v2312 = vunpack.c.l.b16 %v260
    %v2313 = vunpack.c.h.b16 %v260
    %v2314 = vunpack.c.l.b16 %v261
    %v2315 = vunpack.c.h.b16 %v261
    %v2316 = vunpack.c.l.b16 %v262
    %v2317 = vunpack.c.h.b16 %v262
    %v2318 = vunpack.c.l.b16 %v263
    %v2319 = vunpack.c.h.b16 %v263
    %v2320 = vunpack.c.l.b16 %v264
    %v2321 = vunpack.c.h.b16 %v264
    %v2322 = vunpack.c.l.b16 %v265
    %v2323 = vunpack.c.h.b16 %v265
    %v2324 = vunpack.c.l.b16 %v266
    %v2325 = vunpack.c.h.b16 %v266
    %v2326 = vunpack.c.l.b16 %v267
    %v2327 = vunpack.c.h.b16 %v267
    %v2328 = vunpack.c.l.b16 %v268
    %v2329 = vunpack.c.h.b16 %v268
    %v2330 = vunpack.c.l.b16 %v269
    %v2331 = vunpack.c.h.b16 %v269
    %v2332 = vunpack.c.l.b16 %v270
    %v2333 = vunpack.c.h.b16 %v270
    %v2334 = vunpack.c.l.b16 %v271
    %v2335 = vunpack.c.h.b16 %v271
    %v2336 = vunpack.c.l.b16 %v272
    %v2337 = vunpack.c.h.b16 %v272
    %v2338 = vunpack.c.l.b16 %v273
    %v2339 = vunpack.c.h.b16 %v273
    %v2340 = vunpack.c.l.b16 %v274
    %v2341 = vunpack.c.h.b16 %v274
    %v2342 = vunpack.c.l.b16 %v275
    %v2343 = vunpack.c.h.b16 %v275
    %v2344 = vunpack.c.l.b16 %v276
    %v2345 = vunpack.c.h.b16 %v276
    %v2346 = vunpack.c.l.b16 %v277
    %v2347 = vunpack.c.h.b16 %v277
    %v2348 = vunpack.c.l.b16 %v278
    %v2349 = vunpack.c.h.b16 %v278
    %v2350 = vunpack.c.l.b16 %v279
    %v2351 = vunpack.c.h.b16 %v279
    %v2352 = vunpack.c.l.b16 %v280
    %v2353 = vunpack.c.h.b16 %v280
    %v2354 = vunpack.c.l.b16 %v281
    %v2355 = vunpack.c.h.b16 %v281
    %v2356 = vunpack.c.l.b16 %v282
    %v2357 = vunpack.c.h.b16 %v282
    %v2358 = vunpack.c.l.b16 %v283
    %v2359 = vunpack.c.h.b16 %v283
    %v2360 = vunpack.c.l.b16 %v284
    %v2361 = vunpack.c.h.b16 %v284
    %v2362 = vunpack.c.l.b16 %v285
    %v2363 = vunpack.c.h.b16 %v285
    %v2364 = vunpack.c.l.b16 %v286
    %v2365 = vunpack.c.h.b16 %v286
    %v2366 = vunpack.c.l.b16 %v287
    %v2367 = vunpack.c.h.b16 %v287
    %v2368 = vunpack.c.l.b16 %v288
    %v2369 = vunpack.c.h.b16 %v288
    %v2370 = vunpack.c.l.b16 %v289
    %v2371 = vunpack.c.h.b16 %v289
    %v2372 = vunpack.c.l.b16 %v290
    %v2373 = vunpack.c.h.b16 %v290
    %v2374 = vunpack.c.l.b16 %v291
    %v2375 = vunpack.c.h.b16 %v291
    %v2376 = vunpack.c.l.b16 %v292
    %v2377 = vunpack.c.h.b16 %v292
    %v2378 = vunpack.c.l.b16 %v293
    %v2379 = vunpack.c.h.b16 %v293
    %v2380 = vunpack.c.l.b16 %v294
    %v2381 = vunpack.c.h.b16 %v294
    %v2382 = vunpack.c.l.b16 %v295
    %v2383 = vunpack.c.h.b16 %v295
    %v2384 = vunpack.c.l.b16 %v296
    %v2385 = vunpack.c.h.b16 %v296
    %v2386 = vunpack.c.l.b16 %v297
    %v2387 = vunpack.c.h.b16 %v297
    %v2388 = vunpack.c.l.b16 %v298
    %v2389 = vunpack.c.h.b16 %v298
    %v2390 = vunpack.c.l.b16 %v299
    %v2391 = vunpack.c.h.b16 %v299
    %v2392 = vunpack.c.l.b16 %v300
    %v2393 = vunpack.c.h.b16 %v300
    %v2394 = vunpack.c.l.b16 %v301
    %v2395 = vunpack.c.h.b16 %v301
    %v2396 = vunpack.c.l.b16 %v302
    %v2397 = vunpack.c.h.b16 %v302
    %v2398 = vunpack.c.l.b16 %v303
    %v2399 = vunpack.c.h.b16 %v303
    %v2400 = vunpack.c.l.b16 %v304
    %v2401 = vunpack.c.h.b16 %v304
    %v2402 = vunpack.c.l.b16 %v305
    %v2403 = vunpack.c.h.b16 %v305
    %v2404 = vunpack.c.l.b16 %v306
    %v2405 = vunpack.c.h.b16 %v306
    %v2406 = vunpack.c.l.b16 %v307
    %v2407 = vunpack.c.h.b16 %v307
    %v2408 = vunpack.c.l.b16 %v308
    %v2409 = vunpack.c.h.b16 %v308
    %v2410 = vunpack.c.l.b16 %v309
    %v2411 = vunpack.c.h.b16 %v309
    %v2412 = vunpack.c.l.b16 %v310
    %v2413 = vunpack.c.h.b16 %v310
    %v2414 = vunpack.c.l.b16 %v311
    %v2415 = vunpack.c.h.b16 %v311
    %v2416 = vunpack.c.l.b16 %v312
    %v2417 = vunpack.c.h.b16 %v312
    %v2418 = vunpack.c.l.b16 %v313
    %v2419 = vunpack.c.h.b16 %v313
    %v2420 = vunpack.c.l.b16 %v314
    %v2421 = vunpack.c.h.b16 %v314
    %v2422 = vunpack.c.l.b16 %v315
    %v2423 = vunpack.c.h.b16 %v315
    %v2424 = vunpack.c.l.b16 %v316
    %v2425 = vunpack.c.h.b16 %v316
    %v2426 = vunpack.c.l.b16 %v317
    %v2427 = vunpack.c.h.b16 %v317
    %v2428 = vunpack.c.l.b16 %v318
    %v2429 = vunpack.c.h.b16 %v318
    %v2430 = vunpack.c.l.b16 %v319
    %v2431 = vunpack.c.h.b16 %v319
    %v2432 = vunpack.c.l.b16 %v320
    %v2433 = vunpack.c.h.b16 %v320
    %v2434 = vunpack.c.l.b16 %v321
    %v2435 = vunpack.c.h.b16 %v321
    %v2436 = vunpack.c.l.b16 %v322
    %v2437 = vunpack.c.h.b16 %v322
    %v2438 = vunpack.c.l.b16 %v323
    %v2439 = vunpack.c.h.b16 %v323
    %v2440 = vunpack.c.l.b16 %v324
    %v2441 = vunpack.c.h.b16 %v324
    %v2442 = vunpack.c.l.b16 %v325
    %v2443 = vunpack.c.h.b16 %v325
    %v2444 = vunpack.c.l.b16 %v326
    %v2445 = vunpack.c.h.b16 %v326
    %v2446 = vunpack.c.l.b16 %v327
    %v2447 = vunpack.c.h.b16 %v327
    %v2448 = vunpack.c.l.b16 %v328
    %v2449 = vunpack.c.h.b16 %v328
    %v2450 = vunpack.c.l.b16 %v329
    %v2451 = vunpack.c.h.b16 %v329
    %v2452 = vunpack.c.l.b16 %v330
    %v2453 = vunpack.c.h.b16 %v330
    %v2454 = vunpack.c.l.b16 %v331
    %v2455 = vunpack.c.h.b16 %v331
    %v2456 = vunpack.c.l.b16 %v332
    %v2457 = vunpack.c.h.b16 %v332
    %v2458 = vunpack.c.l.b16 %v333
    %v2459 = vunpack.c.h.b16 %v333
    %v2460 = vunpack.c.l.b16 %v334
    %v2461 = vunpack.c.h.b16 %v334
    %v2462 = vunpack.c.l.b16 %v335
    %v2463 = vunpack.c.h.b16 %v335
    %v2464 = vunpack.c.l.b16 %v336
    %v2465 = vunpack.c.h.b16 %v336
    %v2466 = vunpack.c.l.b16 %v337
    %v2467 = vunpack.c.h.b16 %v337
    %v2468 = vunpack.c.l.b16 %v338
    %v2469 = vunpack.c.h.b16 %v338
    %v2470 = vunpack.c.l.b16 %v339
    %v2471 = vunpack.c.h.b16 %v339
    %v2472 = vunpack.c.l.b16 %v340
    %v2473 = vunpack.c.h.b16 %v340
    %v2474 = vunpack.c.l.b16 %v341
    %v2475 = vunpack.c.h.b16 %v341
    %v2476 = vunpack.c.l.b16 %v342
    %v2477 = vunpack.c.h.b16 %v342
    %v2478 = vunpack.c.l.b16 %v343
    %v2479 = vunpack.c.h.b16 %v343
    %v2480 = vunpack.c.l.b16 %v344
    %v2481 = vunpack.c.h.b16 %v344
    %v2482 = vunpack.c.l.b16 %v345
    %v2483 = vunpack.c.h.b16 %v345
    %v2484 = vunpack.c.l.b16 %v346
    %v2485 = vunpack.c.h.b16 %v346
    %v2486 = vunpack.c.l.b16 %v347
    %v2487 = vunpack.c.h.b16 %v347
    %v2488 = vunpack.c.l.b16 %v348
    %v2489 = vunpack.c.h.b16 %v348
    %v2490 = vunpack.c.l.b16 %v349
    %v2491 = vunpack.c.h.b16 %v349
    %v2492 = vunpack.c.l.b16 %v350
    %v2493 = vunpack.c.h.b16 %v350
    %v2494 = vunpack.c.l.b16 %v351
    %v2495 = vunpack.c.h.b16 %v351
    %v2496 = vunpack.c.l.b16 %v352
    %v2497 = vunpack.c.h.b16 %v352
    %v2498 = vunpack.c.l.b16 %v353
    %v2499 = vunpack.c.h.b16 %v353
    %v2500 = vunpack.c.l.b16 %v354
    %v2501 = vunpack.c.h.b16 %v354
    %v2502 = vunpack.c.l.b16 %v355
    %v2503 = vunpack.c.h.b16 %v355
    %v2504 = vunpack.c.l.b16 %v356
    %v2505 = vunpack.c.h.b16 %v356
    %v2506 = vunpack.c.l.b16 %v357
    %v2507 = vunpack.c.h.b16 %v357
    %v2508 = vunpack.c.l.b16 %v358
    %v2509 = vunpack.c.h.b16 %v358
    %v2510 = vunpack.c.l.b16 %v359
    %v2511 = vunpack.c.h.b16 %v359
    %v2512 = vunpack.c.l.b16 %v360
    %v2513 = vunpack.c.h.b16 %v360
    %v2514 = vunpack.c.l.b16 %v361
    %v2515 = vunpack.c.h.b16 %v361
    %v2516 = vunpack.c.l.b16 %v362
    %v2517 = vunpack.c.h.b16 %v362
    %v2518 = vunpack.c.l.b16 %v363
    %v2519 = vunpack.c.h.b16 %v363
    %v2520 = vunpack.c.l.b16 %v364
    %v2521 = vunpack.c.h.b16 %v364
    %v2522 = vunpack.c.l.b16 %v365
    %v2523 = vunpack.c.h.b16 %v365
    %v2524 = vunpack.c.l.b16 %v366
    %v2525 = vunpack.c.h.b16 %v366
    %v2526 = vunpack.c.l.b16 %v367
    %v2527 = vunpack.c.h.b16 %v367
    %v2528 = vunpack.c.l.b16 %v368
    %v2529 = vunpack.c.h.b16 %v368
    %v2530 = vunpack.c.l.b16 %v369
    %v2531 = vunpack.c.h.b16 %v369
    %v2532 = vunpack.c.l.b16 %v370
    %v2533 = vunpack.c.h.b16 %v370
    %v2534 = vunpack.c.l.b16 %v371
    %v2535 = vunpack.c.h.b16 %v371
    %v2536 = vunpack.c.l.b16 %v372
    %v2537 = vunpack.c.h.b16 %v372
    %v2538 = vunpack.c.l.b16 %v373
    %v2539 = vunpack.c.h.b16 %v373
    %v2540 = vunpack.c.l.b16 %v374
    %v2541 = vunpack.c.h.b16 %v374
    %v2542 = vunpack.c.l.b16 %v375
    %v2543 = vunpack.c.h.b16 %v375
    %v2544 = vunpack.c.l.b16 %v376
    %v2545 = vunpack.c.h.b16 %v376
    %v2546 = vunpack.c.l.b16 %v377
    %v2547 = vunpack.c.h.b16 %v377
    %v2548 = vunpack.c.l.b16 %v378
    %v2549 = vunpack.c.h.b16 %v378
    %v2550 = vunpack.c.l.b16 %v379
    %v2551 = vunpack.c.h.b16 %v379
    %v2552 = vunpack.c.l.b16 %v380
    %v2553 = vunpack.c.h.b16 %v380
    %v2554 = vunpack.c.l.b16 %v381
    %v2555 = vunpack.c.h.b16 %v381
    %v2556 = vunpack.c.l.b16 %v382
    %v2557 = vunpack.c.h.b16 %v382
    %v2558 = vunpack.c.l.b16 %v383
    %v2559 = vunpack.c.h.b16 %v383
    %v2560 = vunpack.c.l.b16 %v384
    %v2561 = vunpack.c.h.b16 %v384
    %v2562 = vunpack.c.l.b16 %v385
    %v2563 = vunpack.c.h.b16 %v385
    %v2564 = vunpack.c.l.b16 %v386
    %v2565 = vunpack.c.h.b16 %v386
    %v2566 = vunpack.c.l.b16 %v387
    %v2567 = vunpack.c.h.b16 %v387
    %v2568 = vunpack.c.l.b16 %v388
    %v2569 = vunpack.c.h.b16 %v388
    %v2570 = vunpack.c.l.b16 %v389
    %v2571 = vunpack.c.h.b16 %v389
    %v2572 = vunpack.c.l.b16 %v390
    %v2573 = vunpack.c.h.b16 %v390
    %v2574 = vunpack.c.l.b16 %v391
    %v2575 = vunpack.c.h.b16 %v391
    %v2576 = vunpack.c.l.b16 %v392
    %v2577 = vunpack.c.h.b16 %v392
    %v2578 = vunpack.c.l.b16 %v393
    %v2579 = vunpack.c.h.b16 %v393
    %v2580 = vunpack.c.l.b16 %v394
    %v2581 = vunpack.c.h.b16 %v394
    %v2582 = vunpack.c.l.b16 %v395
    %v2583 = vunpack.c.h.b16 %v395
    %v2584 = vunpack.c.l.b16 %v396
    %v2585 = vunpack.c.h.b16 %v396
    %v2586 = vunpack.c.l.b16 %v397
    %v2587 = vunpack.c.h.b16 %v397
    %v2588 = vunpack.c.l.b16 %v398
    %v2589 = vunpack.c.h.b16 %v398
    %v2590 = vunpack.c.l.b16 %v399
    %v2591 = vunpack.c.h.b16 %v399
    %v2592 = vunpack.c.l.b16 %v400
    %v2593 = vunpack.c.h.b16 %v400
    %v2594 = vunpack.c.l.b16 %v401
    %v2595 = vunpack.c.h.b16 %v401
    %v2596 = vunpack.c.l.b16 %v402
    %v2597 = vunpack.c.h.b16 %v402
    %v2598 = vunpack.c.l.b16 %v403
    %v2599 = vunpack.c.h.b16 %v403
    %v2600 = vunpack.c.l.b16 %v404
    %v2601 = vunpack.c.h.b16 %v404
    %v2602 = vunpack.c.l.b16 %v405
    %v2603 = vunpack.c.h.b16 %v405
    %v2604 = vunpack.c.l.b16 %v406
    %v2605 = vunpack.c.h.b16 %v406
    %v2606 = vunpack.c.l.b16 %v407
    %v2607 = vunpack.c.h.b16 %v407
    %v2608 = vunpack.c.l.b16 %v408
    %v2609 = vunpack.c.h.b16 %v408
    %v2610 = vunpack.c.l.b16 %v409
    %v2611 = vunpack.c.h.b16 %v409
    %v2612 = vunpack.c.l.b16 %v410
    %v2613 = vunpack.c.h.b16 %v410
    %v2614 = vunpack.c.l.b16 %v411
    %v2615 = vunpack.c.h.b16 %v411
    %v2616 = vunpack.c.l.b16 %v412
    %v2617 = vunpack.c.h.b16 %v412
    %v2618 = vunpack.c.l.b16 %v413
    %v2619 = vunpack.c.h.b16 %v413
    %v2620 = vunpack.c.l.b16 %v414
    %v2621 = vunpack.c.h.b16 %v414
    %v2622 = vunpack.c.l.b16 %v415
    %v2623 = vunpack.c.h.b16 %v415
    %v2624 = vunpack.c.l.b16 %v416
    %v2625 = vunpack.c.h.b16 %v416
    %v2626 = vunpack.c.l.b16 %v417
    %v2627 = vunpack.c.h.b16 %v417
    %v2628 = vunpack.c.l.b16 %v418
    %v2629 = vunpack.c.h.b16 %v418
    %v2630 = vunpack.c.l.b16 %v419
    %v2631 = vunpack.c.h.b16 %v419
    %v2632 = vunpack.c.l.b16 %v420
    %v2633 = vunpack.c.h.b16 %v420
    %v2634 = vunpack.c.l.b16 %v421
    %v2635 = vunpack.c.h.b16 %v421
    %v2636 = vunpack.c.l.b16 %v422
    %v2637 = vunpack.c.h.b16 %v422
    %v2638 = vunpack.c.l.b16 %v423
    %v2639 = vunpack.c.h.b16 %v423
    %v2640 = vunpack.c.l.b16 %v424
    %v2641 = vunpack.c.h.b16 %v424
    %v2642 = vunpack.c.l.b16 %v425
    %v2643 = vunpack.c.h.b16 %v425
    %v2644 = vunpack.c.l.b16 %v426
    %v2645 = vunpack.c.h.b16 %v426
    %v2646 = vunpack.c.l.b16 %v427
    %v2647 = vunpack.c.h.b16 %v427
    %v2648 = vunpack.c.l.b16 %v428
    %v2649 = vunpack.c.h.b16 %v428
    %v2650 = vunpack.c.l.b16 %v429
    %v2651 = vunpack.c.h.b16 %v429
    %v2652 = vunpack.c.l.b16 %v430
    %v2653 = vunpack.c.h.b16 %v430
    %v2654 = vunpack.c.l.b16 %v431
    %v2655 = vunpack.c.h.b16 %v431
    %v2656 = vunpack.c.l.b16 %v432
    %v2657 = vunpack.c.h.b16 %v432
    %v2658 = vunpack.c.l.b16 %v433
    %v2659 = vunpack.c.h.b16 %v433
    %v2660 = vunpack.c.l.b16 %v434
    %v2661 = vunpack.c.h.b16 %v434
    %v2662 = vunpack.c.l.b16 %v435
    %v2663 = vunpack.c.h.b16 %v435
    %v2664 = vunpack.c.l.b16 %v436
    %v2665 = vunpack.c.h.b16 %v436
    %v2666 = vunpack.c.l.b16 %v437
    %v2667 = vunpack.c.h.b16 %v437
    %v2668 = vunpack.c.l.b16 %v438
    %v2669 = vunpack.c.h.b16 %v438
    %v2670 = vunpack.c.l.b16 %v439
    %v2671 = vunpack.c.h.b16 %v439
    %v2672 = vunpack.c.l.b16 %v440
    %v2673 = vunpack.c.h.b16 %v440
    %v2674 = vunpack.c.l.b16 %v441
    %v2675 = vunpack.c.h.b16 %v441
    %v2676 = vunpack.c.l.b16 %v442
    %v2677 = vunpack.c.h.b16 %v442
    %v2678 = vunpack.c.l.b16 %v443
    %v2679 = vunpack.c.h.b16 %v443
    %v2680 = vunpack.c.l.b16 %v444
    %v2681 = vunpack.c.h.b16 %v444
    %v2682 = vunpack.c.l.b16 %v445
    %v2683 = vunpack.c.h.b16 %v445
    %v2684 = vunpack.c.l.b16 %v446
    %v2685 = vunpack.c.h.b16 %v446
    %v2686 = vunpack.c.l.b16 %v447
    %v2687 = vunpack.c.h.b16 %v447
    %v2688 = vunpack.c.l.b16 %v448
    %v2689 = vunpack.c.h.b16 %v448
    %v2690 = vunpack.c.l.b16 %v449
    %v2691 = vunpack.c.h.b16 %v449
    %v2692 = vunpack.c.l.b16 %v450
    %v2693 = vunpack.c.h.b16 %v450
    %v2694 = vunpack.c.l.b16 %v451
    %v2695 = vunpack.c.h.b16 %v451
    %v2696 = vunpack.c.l.b16 %v452
    %v2697 = vunpack.c.h.b16 %v452
    %v2698 = vunpack.c.l.b16 %v453
    %v2699 = vunpack.c.h.b16 %v453
    %v2700 = vunpack.c.l.b16 %v454
    %v2701 = vunpack.c.h.b16 %v454
    %v2702 = vunpack.c.l.b16 %v455
    %v2703 = vunpack.c.h.b16 %v455
    %v2704 = vunpack.c.l.b16 %v456
    %v2705 = vunpack.c.h.b16 %v456
    %v2706 = vunpack.c.l.b16 %v457
    %v2707 = vunpack.c.h.b16 %v457
    %v2708 = vunpack.c.l.b16 %v458
    %v2709 = vunpack.c.h.b16 %v458
    %v2710 = vunpack.c.l.b16 %v459
    %v2711 = vunpack.c.h.b16 %v459
    %v2712 = vunpack.c.l.b16 %v460
    %v2713 = vunpack.c.h.b16 %v460
    %v2714 = vunpack.c.l.b16 %v461
    %v2715 = vunpack.c.h.b16 %v461
    %v2716 = vunpack.c.l.b16 %v462
    %v2717 = vunpack.c.h.b16 %v462
    %v2718 = vunpack.c.l.b16 %v463
    %v2719 = vunpack.c.h.b16 %v463
    %v2720 = vunpack.c.l.b16 %v464
    %v2721 = vunpack.c.h.b16 %v464
    %v2722 = vunpack.c.l.b16 %v465
    %v2723 = vunpack.c.h.b16 %v465
    %v2724 = vunpack.c.l.b16 %v466
    %v2725 = vunpack.c.h.b16 %v466
    %v2726 = vunpack.c.l.b16 %v467
    %v2727 = vunpack.c.h.b16 %v467
    %v2728 = vunpack.c.l.b16 %v468
    %v2729 = vunpack.c.h.b16 %v468
    %v2730 = vunpack.c.l.b16 %v469
    %v2731 = vunpack.c.h.b16 %v469
    %v2732 = vunpack.c.l.b16 %v470
    %v2733 = vunpack.c.h.b16 %v470
    %v2734 = vunpack.c.l.b16 %v471
    %v2735 = vunpack.c.h.b16 %v471
    %v2736 = vunpack.c.l.b16 %v472
    %v2737 = vunpack.c.h.b16 %v472
    %v2738 = vunpack.c.l.b16 %v473
    %v2739 = vunpack.c.h.b16 %v473
    %v2740 = vunpack.c.l.b16 %v474
    %v2741 = vunpack.c.h.b16 %v474
    %v2742 = vunpack.c.l.b16 %v475
    %v2743 = vunpack.c.h.b16 %v475
    %v2744 = vunpack.c.l.b16 %v476
    %v2745 = vunpack.c.h.b16 %v476
    %v2746 = vunpack.c.l.b16 %v477
    %v2747 = vunpack.c.h.b16 %v477
    %v2748 = vunpack.c.l.b16 %v478
    %v2749 = vunpack.c.h.b16 %v478
    %v2750 = vunpack.c.l.b16 %v479
    %v2751 = vunpack.c.h.b16 %v479
    %v2752 = vunpack.c.l.b16 %v480
    %v2753 = vunpack.c.h.b16 %v480
    %v2754 = vunpack.c.l.b16 %v481
    %v2755 = vunpack.c.h.b16 %v481
    %v2756 = vunpack.c.l.b16 %v482
    %v2757 = vunpack.c.h.b16 %v482
    %v2758 = vunpack.c.l.b16 %v483
    %v2759 = vunpack.c.h.b16 %v483
    %v2760 = vunpack.c.l.b16 %v484
    %v2761 = vunpack.c.h.b16 %v484
    %v2762 = vunpack.c.l.b16 %v485
    %v2763 = vunpack.c.h.b16 %v485
    %v2764 = vunpack.c.l.b16 %v486
    %v2765 = vunpack.c.h.b16 %v486
    %v2766 = vunpack.c.l.b16 %v487
    %v2767 = vunpack.c.h.b16 %v487
    %v2768 = vunpack.c.l.b16 %v488
    %v2769 = vunpack.c.h.b16 %v488
    %v2770 = vunpack.c.l.b16 %v489
    %v2771 = vunpack.c.h.b16 %v489
    %v2772 = vunpack.c.l.b16 %v490
    %v2773 = vunpack.c.h.b16 %v490
    %v2774 = vunpack.c.l.b16 %v491
    %v2775 = vunpack.c.h.b16 %v491
    %v2776 = vunpack.c.l.b16 %v492
    %v2777 = vunpack.c.h.b16 %v492
    %v2778 = vunpack.c.l.b16 %v493
    %v2779 = vunpack.c.h.b16 %v493
    %v2780 = vunpack.c.l.b16 %v494
    %v2781 = vunpack.c.h.b16 %v494
    %v2782 = vunpack.c.l.b16 %v495
    %v2783 = vunpack.c.h.b16 %v495
    %v2784 = vunpack.c.l.b16 %v496
    %v2785 = vunpack.c.h.b16 %v496
    %v2786 = vunpack.c.l.b16 %v497
    %v2787 = vunpack.c.h.b16 %v497
    %v2788 = vunpack.c.l.b16 %v498
    %v2789 = vunpack.c.h.b16 %v498
    %v2790 = vunpack.c.l.b16 %v499
    %v2791 = vunpack.c.h.b16 %v499
    %v2792 = vunpack.c.l.b16 %v500
    %v2793 = vunpack.c.h.b16 %v500
    %v2794 = vunpack.c.l.b16 %v501
    %v2795 = vunpack.c.h.b16 %v501
    %v2796 = vunpack.c.l.b16 %v502
    %v2797 = vunpack.c.h.b16 %v502
    %v2798 = vunpack.c.l.b16 %v503
    %v2799 = vunpack.c.h.b16 %v503
    %v2800 = vunpack.c.l.b16 %v504
    %v2801 = vunpack.c.h.b16 %v504
    %v2802 = vunpack.c.l.b16 %v505
    %v2803 = vunpack.c.h.b16 %v505
    %v2804 = vunpack.c.l.b16 %v506
    %v2805 = vunpack.c.h.b16 %v506
    %v2806 = vunpack.c.l.b16 %v507
    %v2807 = vunpack.c.h.b16 %v507
    %v2808 = vunpack.c.l.b16 %v508
    %v2809 = vunpack.c.h.b16 %v508
    %v2810 = vunpack.c.l.b16 %v509
    %v2811 = vunpack.c.h.b16 %v509
    %v2812 = vunpack.c.l.b16 %v510
    %v2813 = vunpack.c.h.b16 %v510
    %v2814 = vunpack.c.l.b16 %v511
    %v2815 = vunpack.c.h.b16 %v511
    %v2816 = vunpack.c.l.b16 %v512
    %v2817 = vunpack.c.h.b16 %v512
    %v2818 = vunpack.c.l.b16 %v513
    %v2819 = vunpack.c.h.b16 %v513
    %v2820 = vunpack.c.l.b16 %v514
    %v2821 = vunpack.c.h.b16 %v514
    %v2822 = vunpack.c.l.b16 %v515
    %v2823 = vunpack.c.h.b16 %v515
    %v2824 = vunpack.c.l.b16 %v516
    %v2825 = vunpack.c.h.b16 %v516
    %v2826 = vunpack.c.l.b16 %v517
    %v2827 = vunpack.c.h.b16 %v517
    %v2828 = vunpack.c.l.b16 %v518
    %v2829 = vunpack.c.h.b16 %v518
    %v2830 = vunpack.c.l.b16 %v519
    %v2831 = vunpack.c.h.b16 %v519
    %v2832 = vunpack.c.l.b16 %v520
    %v2833 = vunpack.c.h.b16 %v520
    %v2834 = vunpack.c.l.b16 %v521
    %v2835 = vunpack.c.h.b16 %v521
    %v2836 = vunpack.c.l.b16 %v522
    %v2837 = vunpack.c.h.b16 %v522
    %v2838 = vunpack.c.l.b16 %v523
    %v2839 = vunpack.c.h.b16 %v523
    %v2840 = vunpack.c.l.b16 %v524
    %v2841 = vunpack.c.h.b16 %v524
    %v2842 = vunpack.c.l.b16 %v525
    %v2843 = vunpack.c.h.b16 %v525
    %v2844 = vunpack.c.l.b16 %v526
    %v2845 = vunpack.c.h.b16 %v526
    %v2846 = vunpack.c.l.b16 %v527
    %v2847 = vunpack.c.h.b16 %v527
    %v2848 = vunpack.c.l.b16 %v528
    %v2849 = vunpack.c.h.b16 %v528
    %v2850 = vunpack.c.l.b16 %v529
    %v2851 = vunpack.c.h.b16 %v529
    %v2852 = vunpack.c.l.b16 %v530
    %v2853 = vunpack.c.h.b16 %v530
    %v2854 = vunpack.c.l.b16 %v531
    %v2855 = vunpack.c.h.b16 %v531
    %v2856 = vunpack.c.l.b16 %v532
    %v2857 = vunpack.c.h.b16 %v532
    %v2858 = vunpack.c.l.b16 %v533
    %v2859 = vunpack.c.h.b16 %v533
    %v2860 = vunpack.c.l.b16 %v534
    %v2861 = vunpack.c.h.b16 %v534
    %v2862 = vunpack.c.l.b16 %v535
    %v2863 = vunpack.c.h.b16 %v535
    %v2864 = vunpack.c.l.b16 %v536
    %v2865 = vunpack.c.h.b16 %v536
    %v2866 = vunpack.c.l.b16 %v537
    %v2867 = vunpack.c.h.b16 %v537
    %v2868 = vunpack.c.l.b16 %v538
    %v2869 = vunpack.c.h.b16 %v538
    %v2870 = vunpack.c.l.b16 %v539
    %v2871 = vunpack.c.h.b16 %v539
    %v2872 = vunpack.c.l.b16 %v540
    %v2873 = vunpack.c.h.b16 %v540
    %v2874 = vunpack.c.l.b16 %v541
    %v2875 = vunpack.c.h.b16 %v541
    %v2876 = vunpack.c.l.b16 %v542
    %v2877 = vunpack.c.h.b16 %v542
    %v2878 = vunpack.c.l.b16 %v543
    %v2879 = vunpack.c.h.b16 %v543
    %v2880 = vunpack.c.l.b16 %v544
    %v2881 = vunpack.c.h.b16 %v544
    %v2882 = vunpack.c.l.b16 %v545
    %v2883 = vunpack.c.h.b16 %v545
    %v2884 = vunpack.c.l.b16 %v546
    %v2885 = vunpack.c.h.b16 %v546
    %v2886 = vunpack.c.l.b16 %v547
    %v2887 = vunpack.c.h.b16 %v547
    %v2888 = vunpack.c.l.b16 %v548
    %v2889 = vunpack.c.h.b16 %v548
    %v2890 = vunpack.c.l.b16 %v549
    %v2891 = vunpack.c.h.b16 %v549
    %v2892 = vunpack.c.l.b16 %v550
    %v2893 = vunpack.c.h.b16 %v550
    %v2894 = vunpack.c.l.b16 %v551
    %v2895 = vunpack.c.h.b16 %v551
    %v2896 = vunpack.c.l.b16 %v552
    %v2897 = vunpack.c.h.b16 %v552
    %v2898 = vunpack.c.l.b16 %v553
    %v2899 = vunpack.c.h.b16 %v553
    %v2900 = vunpack.c.l.b16 %v554
    %v2901 = vunpack.c.h.b16 %v554
    %v2902 = vunpack.c.l.b16 %v555
    %v2903 = vunpack.c.h.b16 %v555
    %v2904 = vunpack.c.l.b16 %v556
    %v2905 = vunpack.c.h.b16 %v556
    %v2906 = vunpack.c.l.b16 %v557
    %v2907 = vunpack.c.h.b16 %v557
    %v2908 = vunpack.c.l.b16 %v558
    %v2909 = vunpack.c.h.b16 %v558
    %v2910 = vunpack.c.l.b16 %v559
    %v2911 = vunpack.c.h.b16 %v559
    %v2912 = vunpack.c.l.b16 %v560
    %v2913 = vunpack.c.h.b16 %v560
    %v2914 = vunpack.c.l.b16 %v561
    %v2915 = vunpack.c.h.b16 %v561
    %v2916 = vunpack.c.l.b16 %v562
    %v2917 = vunpack.c.h.b16 %v562
    %v2918 = vunpack.c.l.b16 %v563
    %v2919 = vunpack.c.h.b16 %v563
    %v2920 = vunpack.c.l.b16 %v564
    %v2921 = vunpack.c.h.b16 %v564
    %v2922 = vunpack.c.l.b16 %v565
    %v2923 = vunpack.c.h.b16 %v565
    %v2924 = vunpack.c.l.b16 %v566
    %v2925 = vunpack.c.h.b16 %v566
    %v2926 = vunpack.c.l.b16 %v567
    %v2927 = vunpack.c.h.b16 %v567
    %v2928 = vunpack.c.l.b16 %v568
    %v2929 = vunpack.c.h.b16 %v568
    %v2930 = vunpack.c.l.b16 %v569
    %v2931 = vunpack.c.h.b16 %v569
    %v2932 = vunpack.c.l.b16 %v570
    %v2933 = vunpack.c.h.b16 %v570
    %v2934 = vunpack.c.l.b16 %v571
    %v2935 = vunpack.c.h.b16 %v571
    %v2936 = vunpack.c.l.b16 %v572
    %v2937 = vunpack.c.h.b16 %v572
    %v2938 = vunpack.c.l.b16 %v573
    %v2939 = vunpack.c.h.b16 %v573
    %v2940 = vunpack.c.l.b16 %v574
    %v2941 = vunpack.c.h.b16 %v574
    %v2942 = vunpack.c.l.b16 %v575
    %v2943 = vunpack.c.h.b16 %v575
    %v2944 = vunpack.c.l.b16 %v576
    %v2945 = vunpack.c.h.b16 %v576
    %v2946 = vunpack.c.l.b16 %v577
    %v2947 = vunpack.c.h.b16 %v577
    %v2948 = vunpack.c.l.b16 %v578
    %v2949 = vunpack.c.h.b16 %v578
    %v2950 = vunpack.c.l.b16 %v579
    %v2951 = vunpack.c.h.b16 %v579
    %v2952 = vunpack.c.l.b16 %v580
    %v2953 = vunpack.c.h.b16 %v580
    %v2954 = vunpack.c.l.b16 %v581
    %v2955 = vunpack.c.h.b16 %v581
    %v2956 = vunpack.c.l.b16 %v582
    %v2957 = vunpack.c.h.b16 %v582
    %v2958 = vunpack.c.l.b16 %v583
    %v2959 = vunpack.c.h.b16 %v583
    %v2960 = vunpack.c.l.b16 %v584
    %v2961 = vunpack.c.h.b16 %v584
    %v2962 = vunpack.c.l.b16 %v585
    %v2963 = vunpack.c.h.b16 %v585
    %v2964 = vunpack.c.l.b16 %v586
    %v2965 = vunpack.c.h.b16 %v586
    %v2966 = vunpack.c.l.b16 %v587
    %v2967 = vunpack.c.h.b16 %v587
    %v2968 = vunpack.c.l.b16 %v588
    %v2969 = vunpack.c.h.b16 %v588
    %v2970 = vunpack.c.l.b16 %v589
    %v2971 = vunpack.c.h.b16 %v589
    %v2972 = vunpack.c.l.b16 %v590
    %v2973 = vunpack.c.h.b16 %v590
    %v2974 = vunpack.c.l.b16 %v591
    %v2975 = vunpack.c.h.b16 %v591
    %v2976 = vunpack.c.l.b16 %v592
    %v2977 = vunpack.c.h.b16 %v592
    %v2978 = vunpack.c.l.b16 %v593
    %v2979 = vunpack.c.h.b16 %v593
    %v2980 = vunpack.c.l.b16 %v594
    %v2981 = vunpack.c.h.b16 %v594
    %v2982 = vunpack.c.l.b16 %v595
    %v2983 = vunpack.c.h.b16 %v595
    %v2984 = vunpack.c.l.b16 %v596
    %v2985 = vunpack.c.h.b16 %v596
    %v2986 = vunpack.c.l.b16 %v597
    %v2987 = vunpack.c.h.b16 %v597
    %v2988 = vunpack.c.l.b16 %v598
    %v2989 = vunpack.c.h.b16 %v598
    %v2990 = vunpack.c.l.b16 %v599
    %v2991 = vunpack.c.h.b16 %v599
    %v2992 = vunpack.c.l.b16 %v600
    %v2993 = vunpack.c.h.b16 %v600
    %v2994 = vunpack.c.l.b16 %v601
    %v2995 = vunpack.c.h.b16 %v601
    %v2996 = vunpack.c.l.b16 %v602
    %v2997 = vunpack.c.h.b16 %v602
    %v2998 = vunpack.c.l.b16 %v603
    %v2999 = vunpack.c.h.b16 %v603
    %v3000 = vunpack.c.l.b16 %v604
    %v3001 = vunpack.c.h.b16 %v604
    %v3002 = vunpack.c.l.b16 %v605
    %v3003 = vunpack.c.h.b16 %v605
    %v3004 = vunpack.c.l.b16 %v606
    %v3005 = vunpack.c.h.b16 %v606
    %v3006 = vunpack.c.l.b16 %v607
    %v3007 = vunpack.c.h.b16 %v607
    %v3008 = vunpack.c.l.b16 %v608
    %v3009 = vunpack.c.h.b16 %v608
    %v3010 = vunpack.c.l.b16 %v609
    %v3011 = vunpack.c.h.b16 %v609
    %v3012 = vunpack.c.l.b16 %v610
    %v3013 = vunpack.c.h.b16 %v610
    %v3014 = vunpack.c.l.b16 %v611
    %v3015 = vunpack.c.h.b16 %v611
    %v3016 = vunpack.c.l.b16 %v612
    %v3017 = vunpack.c.h.b16 %v612
    %v3018 = vunpack.c.l.b16 %v613
    %v3019 = vunpack.c.h.b16 %v613
    %v3020 = vunpack.c.l.b16 %v614
    %v3021 = vunpack.c.h.b16 %v614
    %v3022 = vunpack.c.l.b16 %v615
    %v3023 = vunpack.c.h.b16 %v615
    %v3024 = vunpack.c.l.b16 %v616
    %v3025 = vunpack.c.h.b16 %v616
    %v3026 = vunpack.c.l.b16 %v617
    %v3027 = vunpack.c.h.b16 %v617
    %v3028 = vunpack.c.l.b16 %v618
    %v3029 = vunpack.c.h.b16 %v618
    %v3030 = vunpack.c.l.b16 %v619
    %v3031 = vunpack.c.h.b16 %v619
    %v3032 = vunpack.c.l.b16 %v620
    %v3033 = vunpack.c.h.b16 %v620
    %v3034 = vunpack.c.l.b16 %v621
    %v3035 = vunpack.c.h.b16 %v621
    %v3036 = vunpack.c.l.b16 %v622
    %v3037 = vunpack.c.h.b16 %v622
    %v3038 = vunpack.c.l.b16 %v623
    %v3039 = vunpack.c.h.b16 %v623
    %v3040 = vunpack.c.l.b16 %v624
    %v3041 = vunpack.c.h.b16 %v624
    %v3042 = vunpack.c.l.b16 %v625
    %v3043 = vunpack.c.h.b16 %v625
    %v3044 = vunpack.c.l.b16 %v626
    %v3045 = vunpack.c.h.b16 %v626
    %v3046 = vunpack.c.l.b16 %v627
    %v3047 = vunpack.c.h.b16 %v627
    %v3048 = vunpack.c.l.b16 %v628
    %v3049 = vunpack.c.h.b16 %v628
    %v3050 = vunpack.c.l.b16 %v629
    %v3051 = vunpack.c.h.b16 %v629
    %v3052 = vunpack.c.l.b16 %v630
    %v3053 = vunpack.c.h.b16 %v630
    %v3054 = vunpack.c.l.b16 %v631
    %v3055 = vunpack.c.h.b16 %v631
    %v3056 = vunpack.c.l.b16 %v632
    %v3057 = vunpack.c.h.b16 %v632
    %v3058 = vunpack.c.l.b16 %v633
    %v3059 = vunpack.c.h.b16 %v633
    %v3060 = vunpack.c.l.b16 %v634
    %v3061 = vunpack.c.h.b16 %v634
    %v3062 = vunpack.c.l.b16 %v635
    %v3063 = vunpack.c.h.b16 %v635
    %v3064 = vunpack.c.l.b16 %v636
    %v3065 = vunpack.c.h.b16 %v636
    %v3066 = vunpack.c.l.b16 %v637
    %v3067 = vunpack.c.h.b16 %v637
    %v3068 = vunpack.c.l.b16 %v638
    %v3069 = vunpack.c.h.b16 %v638
    %v3070 = vunpack.c.l.b16 %v639
    %v3071 = vunpack.c.h.b16 %v639
    %v3072 = vunpack.c.l.b16 %v640
    %v3073 = vunpack.c.h.b16 %v640
    %v3074 = vunpack.c.l.b16 %v641
    %v3075 = vunpack.c.h.b16 %v641
    %v3076 = vunpack.c.l.b16 %v642
    %v3077 = vunpack.c.h.b16 %v642
    %v3078 = vunpack.c.l.b16 %v643
    %v3079 = vunpack.c.h.b16 %v643
    %v3080 = vunpack.c.l.b16 %v644
    %v3081 = vunpack.c.h.b16 %v644
    %v3082 = vunpack.c.l.b16 %v645
    %v3083 = vunpack.c.h.b16 %v645
    %v3084 = vunpack.c.l.b16 %v646
    %v3085 = vunpack.c.h.b16 %v646
    %v3086 = vunpack.c.l.b16 %v647
    %v3087 = vunpack.c.h.b16 %v647
    %v3088 = vunpack.c.l.b16 %v648
    %v3089 = vunpack.c.h.b16 %v648
    %v3090 = vunpack.c.l.b16 %v649
    %v3091 = vunpack.c.h.b16 %v649
    %v3092 = vunpack.c.l.b16 %v650
    %v3093 = vunpack.c.h.b16 %v650
    %v3094 = vunpack.c.l.b16 %v651
    %v3095 = vunpack.c.h.b16 %v651
    %v3096 = vunpack.c.l.b16 %v652
    %v3097 = vunpack.c.h.b16 %v652
    %v3098 = vunpack.c.l.b16 %v653
    %v3099 = vunpack.c.h.b16 %v653
    %v3100 = vunpack.c.l.b16 %v654
    %v3101 = vunpack.c.h.b16 %v654
    %v3102 = vunpack.c.l.b16 %v655
    %v3103 = vunpack.c.h.b16 %v655
    %v3104 = vunpack.c.l.b16 %v656
    %v3105 = vunpack.c.h.b16 %v656
    %v3106 = vunpack.c.l.b16 %v657
    %v3107 = vunpack.c.h.b16 %v657
    %v3108 = vunpack.c.l.b16 %v658
    %v3109 = vunpack.c.h.b16 %v658
    %v3110 = vunpack.c.l.b16 %v659
    %v3111 = vunpack.c.h.b16 %v659
    %v3112 = vunpack.c.l.b16 %v660
    %v3113 = vunpack.c.h.b16 %v660
    %v3114 = vunpack.c.l.b16 %v661
    %v3115 = vunpack.c.h.b16 %v661
    %v3116 = vunpack.c.l.b16 %v662
    %v3117 = vunpack.c.h.b16 %v662
    %v3118 = vunpack.c.l.b16 %v663
    %v3119 = vunpack.c.h.b16 %v663
    %v3120 = vunpack.c.l.b16 %v664
    %v3121 = vunpack.c.h.b16 %v664
    %v3122 = vunpack.c.l.b16 %v665
    %v3123 = vunpack.c.h.b16 %v665
    %v3124 = vunpack.c.l.b16 %v666
    %v3125 = vunpack.c.h.b16 %v666
    %v3126 = vunpack.c.l.b16 %v667
    %v3127 = vunpack.c.h.b16 %v667
    %v3128 = vunpack.c.l.b16 %v668
    %v3129 = vunpack.c.h.b16 %v668
    %v3130 = vunpack.c.l.b16 %v669
    %v3131 = vunpack.c.h.b16 %v669
    %v3132 = vunpack.c.l.b16 %v670
    %v3133 = vunpack.c.h.b16 %v670
    %v3134 = vunpack.c.l.b16 %v671
    %v3135 = vunpack.c.h.b16 %v671
    %v3136 = vunpack.c.l.b16 %v672
    %v3137 = vunpack.c.h.b16 %v672
    %v3138 = vunpack.c.l.b16 %v673
    %v3139 = vunpack.c.h.b16 %v673
    %v3140 = vunpack.c.l.b16 %v674
    %v3141 = vunpack.c.h.b16 %v674
    %v3142 = vunpack.c.l.b16 %v675
    %v3143 = vunpack.c.h.b16 %v675
    %v3144 = vunpack.c.l.b16 %v676
    %v3145 = vunpack.c.h.b16 %v676
    %v3146 = vunpack.c.l.b16 %v677
    %v3147 = vunpack.c.h.b16 %v677
    %v3148 = vunpack.c.l.b16 %v678
    %v3149 = vunpack.c.h.b16 %v678
    %v3150 = vunpack.c.l.b16 %v679
    %v3151 = vunpack.c.h.b16 %v679
    %v3152 = vunpack.c.l.b16 %v680
    %v3153 = vunpack.c.h.b16 %v680
    %v3154 = vunpack.c.l.b16 %v681
    %v3155 = vunpack.c.h.b16 %v681
    %v3156 = vunpack.c.l.b16 %v682
    %v3157 = vunpack.c.h.b16 %v682
    %v3158 = vunpack.c.l.b16 %v683
    %v3159 = vunpack.c.h.b16 %v683
    %v3160 = vunpack.c.l.b16 %v684
    %v3161 = vunpack.c.h.b16 %v684
    %v3162 = vunpack.c.l.b16 %v685
    %v3163 = vunpack.c.h.b16 %v685
    %v3164 = vunpack.c.l.b16 %v686
    %v3165 = vunpack.c.h.b16 %v686
    %v3166 = vunpack.c.l.b16 %v687
    %v3167 = vunpack.c.h.b16 %v687
    %v3168 = vunpack.c.l.b16 %v688
    %v3169 = vunpack.c.h.b16 %v688
    %v3170 = vunpack.c.l.b16 %v689
    %v3171 = vunpack.c.h.b16 %v689
    %v3172 = vunpack.c.l.b16 %v690
    %v3173 = vunpack.c.h.b16 %v690
    %v3174 = vunpack.c.l.b16 %v691
    %v3175 = vunpack.c.h.b16 %v691
    %v3176 = vunpack.c.l.b16 %v692
    %v3177 = vunpack.c.h.b16 %v692
    %v3178 = vunpack.c.l.b16 %v693
    %v3179 = vunpack.c.h.b16 %v693
    %v3180 = vunpack.c.l.b16 %v694
    %v3181 = vunpack.c.h.b16 %v694
    %v3182 = vunpack.c.l.b16 %v695
    %v3183 = vunpack.c.h.b16 %v695
    %v3184 = vunpack.c.l.b16 %v696
    %v3185 = vunpack.c.h.b16 %v696
    %v3186 = vunpack.c.l.b16 %v697
    %v3187 = vunpack.c.h.b16 %v697
    %v3188 = vunpack.c.l.b16 %v698
    %v3189 = vunpack.c.h.b16 %v698
    %v3190 = vunpack.c.l.b16 %v699
    %v3191 = vunpack.c.h.b16 %v699
    %v3192 = vunpack.c.l.b16 %v700
    %v3193 = vunpack.c.h.b16 %v700
    %v3194 = vunpack.c.l.b16 %v701
    %v3195 = vunpack.c.h.b16 %v701
    %v3196 = vunpack.c.l.b16 %v702
    %v3197 = vunpack.c.h.b16 %v702
    %v3198 = vunpack.c.l.b16 %v703
    %v3199 = vunpack.c.h.b16 %v703
    %v3200 = vunpack.c.l.b16 %v704
    %v3201 = vunpack.c.h.b16 %v704
    %v3202 = vunpack.c.l.b16 %v705
    %v3203 = vunpack.c.h.b16 %v705
    %v3204 = vunpack.c.l.b16 %v706
    %v3205 = vunpack.c.h.b16 %v706
    %v3206 = vunpack.c.l.b16 %v707
    %v3207 = vunpack.c.h.b16 %v707
    %v3208 = vunpack.c.l.b16 %v708
    %v3209 = vunpack.c.h.b16 %v708
    %v3210 = vunpack.c.l.b16 %v709
    %v3211 = vunpack.c.h.b16 %v709
    %v3212 = vunpack.c.l.b16 %v710
    %v3213 = vunpack.c.h.b16 %v710
    %v3214 = vunpack.c.l.b16 %v711
    %v3215 = vunpack.c.h.b16 %v711
    %v3216 = vunpack.c.l.b16 %v712
    %v3217 = vunpack.c.h.b16 %v712
    %v3218 = vunpack.c.l.b16 %v713
    %v3219 = vunpack.c.h.b16 %v713
    %v3220 = vunpack.c.l.b16 %v714
    %v3221 = vunpack.c.h.b16 %v714
    %v3222 = vunpack.c.l.b16 %v715
    %v3223 = vunpack.c.h.b16 %v715
    %v3224 = vunpack.c.l.b16 %v716
    %v3225 = vunpack.c.h.b16 %v716
    %v3226 = vunpack.c.l.b16 %v717
    %v3227 = vunpack.c.h.b16 %v717
    %v3228 = vunpack.c.l.b16 %v718
    %v3229 = vunpack.c.h.b16 %v718
    %v3230 = vunpack.c.l.b16 %v719
    %v3231 = vunpack.c.h.b16 %v719
    %v3232 = vunpack.c.l.b16 %v720
    %v3233 = vunpack.c.h.b16 %v720
    %v3234 = vunpack.c.l.b16 %v721
    %v3235 = vunpack.c.h.b16 %v721
    %v3236 = vunpack.c.l.b16 %v722
    %v3237 = vunpack.c.h.b16 %v722
    %v3238 = vunpack.c.l.b16 %v723
    %v3239 = vunpack.c.h.b16 %v723
    %v3240 = vunpack.c.l.b16 %v724
    %v3241 = vunpack.c.h.b16 %v724
    %v3242 = vunpack.c.l.b16 %v725
    %v3243 = vunpack.c.h.b16 %v725
    %v3244 = vunpack.c.l.b16 %v726
    %v3245 = vunpack.c.h.b16 %v726
    %v3246 = vunpack.c.l.b16 %v727
    %v3247 = vunpack.c.h.b16 %v727
    %v3248 = vunpack.c.l.b16 %v728
    %v3249 = vunpack.c.h.b16 %v728
    %v3250 = vunpack.c.l.b16 %v729
    %v3251 = vunpack.c.h.b16 %v729
    %v3252 = vunpack.c.l.b16 %v730
    %v3253 = vunpack.c.h.b16 %v730
    %v3254 = vunpack.c.l.b16 %v731
    %v3255 = vunpack.c.h.b16 %v731
    %v3256 = vunpack.c.l.b16 %v732
    %v3257 = vunpack.c.h.b16 %v732
    %v3258 = vunpack.c.l.b16 %v733
    %v3259 = vunpack.c.h.b16 %v733
    %v3260 = vunpack.c.l.b16 %v734
    %v3261 = vunpack.c.h.b16 %v734
    %v3262 = vunpack.c.l.b16 %v735
    %v3263 = vunpack.c.h.b16 %v735
    %v3264 = vunpack.c.l.b16 %v736
    %v3265 = vunpack.c.h.b16 %v736
    %v3266 = vunpack.c.l.b16 %v737
    %v3267 = vunpack.c.h.b16 %v737
    %v3268 = vunpack.c.l.b16 %v738
    %v3269 = vunpack.c.h.b16 %v738
    %v3270 = vunpack.c.l.b16 %v739
    %v3271 = vunpack.c.h.b16 %v739
    %v3272 = vunpack.c.l.b16 %v740
    %v3273 = vunpack.c.h.b16 %v740
    %v3274 = vunpack.c.l.b16 %v741
    %v3275 = vunpack.c.h.b16 %v741
    %v3276 = vunpack.c.l.b16 %v742
    %v3277 = vunpack.c.h.b16 %v742
    %v3278 = vunpack.c.l.b16 %v743
    %v3279 = vunpack.c.h.b16 %v743
    %v3280 = vunpack.c.l.b16 %v744
    %v3281 = vunpack.c.h.b16 %v744
    %v3282 = vunpack.c.l.b16 %v745
    %v3283 = vunpack.c.h.b16 %v745
    %v3284 = vunpack.c.l.b16 %v746
    %v3285 = vunpack.c.h.b16 %v746
    %v3286 = vunpack.c.l.b16 %v747
    %v3287 = vunpack.c.h.b16 %v747
    %v3288 = vunpack.c.l.b16 %v748
    %v3289 = vunpack.c.h.b16 %v748
    %v3290 = vunpack.c.l.b16 %v749
    %v3291 = vunpack.c.h.b16 %v749
    %v3292 = vunpack.c.l.b16 %v750
    %v3293 = vunpack.c.h.b16 %v750
    %v3294 = vunpack.c.l.b16 %v751
    %v3295 = vunpack.c.h.b16 %v751
    %v3296 = vunpack.c.l.b16 %v752
    %v3297 = vunpack.c.h.b16 %v752
    %v3298 = vunpack.c.l.b16 %v753
    %v3299 = vunpack.c.h.b16 %v753
    %v3300 = vunpack.c.l.b16 %v754
    %v3301 = vunpack.c.h.b16 %v754
    %v3302 = vunpack.c.l.b16 %v755
    %v3303 = vunpack.c.h.b16 %v755
    %v3304 = vunpack.c.l.b16 %v756
    %v3305 = vunpack.c.h.b16 %v756
    %v3306 = vunpack.c.l.b16 %v757
    %v3307 = vunpack.c.h.b16 %v757
    %v3308 = vunpack.c.l.b16 %v758
    %v3309 = vunpack.c.h.b16 %v758
    %v3310 = vunpack.c.l.b16 %v759
    %v3311 = vunpack.c.h.b16 %v759
    %v3312 = vunpack.c.l.b16 %v760
    %v3313 = vunpack.c.h.b16 %v760
    %v3314 = vunpack.c.l.b16 %v761
    %v3315 = vunpack.c.h.b16 %v761
    %v3316 = vunpack.c.l.b16 %v762
    %v3317 = vunpack.c.h.b16 %v762
    %v3318 = vunpack.c.l.b16 %v763
    %v3319 = vunpack.c.h.b16 %v763
    %v3320 = vunpack.c.l.b16 %v764
    %v3321 = vunpack.c.h.b16 %v764
    %v3322 = vunpack.c.l.b16 %v765
    %v3323 = vunpack.c.h.b16 %v765
    %v3324 = vunpack.c.l.b16 %v766
    %v3325 = vunpack.c.h.b16 %v766
    %v3326 = vunpack.c.l.b16 %v767
    %v3327 = vunpack.c.h.b16 %v767
    %v3328 = vunpack.c.l.b16 %v768
    %v3329 = vunpack.c.h.b16 %v768
    %v3330 = vunpack.c.l.b16 %v769
    %v3331 = vunpack.c.h.b16 %v769
    %v3332 = vunpack.c.l.b16 %v770
    %v3333 = vunpack.c.h.b16 %v770
    %v3334 = vunpack.c.l.b16 %v771
    %v3335 = vunpack.c.h.b16 %v771
    %v3336 = vunpack.c.l.b16 %v772
    %v3337 = vunpack.c.h.b16 %v772
    %v3338 = vunpack.c.l.b16 %v773
    %v3339 = vunpack.c.h.b16 %v773
    %v3340 = vunpack.c.l.b16 %v774
    %v3341 = vunpack.c.h.b16 %v774
    %v3342 = vunpack.c.l.b16 %v775
    %v3343 = vunpack.c.h.b16 %v775
    %v3344 = vunpack.c.l.b16 %v776
    %v3345 = vunpack.c.h.b16 %v776
    %v3346 = vunpack.c.l.b16 %v777
    %v3347 = vunpack.c.h.b16 %v777
    %v3348 = vunpack.c.l.b16 %v778
    %v3349 = vunpack.c.h.b16 %v778
    %v3350 = vunpack.c.l.b16 %v779
    %v3351 = vunpack.c.h.b16 %v779
    %v3352 = vunpack.c.l.b16 %v780
    %v3353 = vunpack.c.h.b16 %v780
    %v3354 = vunpack.c.l.b16 %v781
    %v3355 = vunpack.c.h.b16 %v781
    %v3356 = vunpack.c.l.b16 %v782
    %v3357 = vunpack.c.h.b16 %v782
    %v3358 = vunpack.c.l.b16 %v783
    %v3359 = vunpack.c.h.b16 %v783
    %v3360 = vunpack.c.l.b16 %v784
    %v3361 = vunpack.c.h.b16 %v784
    %v3362 = vunpack.c.l.b16 %v785
    %v3363 = vunpack.c.h.b16 %v785
    %v3364 = vunpack.c.l.b16 %v786
    %v3365 = vunpack.c.h.b16 %v786
    %v3366 = vunpack.c.l.b16 %v787
    %v3367 = vunpack.c.h.b16 %v787
    %v3368 = vunpack.c.l.b16 %v788
    %v3369 = vunpack.c.h.b16 %v788
    %v3370 = vunpack.c.l.b16 %v789
    %v3371 = vunpack.c.h.b16 %v789
    %v3372 = vunpack.c.l.b16 %v790
    %v3373 = vunpack.c.h.b16 %v790
    %v3374 = vunpack.c.l.b16 %v791
    %v3375 = vunpack.c.h.b16 %v791
    %v3376 = vunpack.c.l.b16 %v792
    %v3377 = vunpack.c.h.b16 %v792
    %v3378 = vunpack.c.l.b16 %v793
    %v3379 = vunpack.c.h.b16 %v793
    %v3380 = vunpack.c.l.b16 %v794
    %v3381 = vunpack.c.h.b16 %v794
    %v3382 = vunpack.c.l.b16 %v795
    %v3383 = vunpack.c.h.b16 %v795
    %v3384 = vunpack.c.l.b16 %v796
    %v3385 = vunpack.c.h.b16 %v796
    %v3386 = vunpack.c.l.b16 %v797
    %v3387 = vunpack.c.h.b16 %v797
    %v3388 = vunpack.c.l.b16 %v798
    %v3389 = vunpack.c.h.b16 %v798
    %v3390 = vunpack.c.l.b16 %v799
    %v3391 = vunpack.c.h.b16 %v799
    %v3392 = vunpack.c.l.b16 %v800
    %v3393 = vunpack.c.h.b16 %v800
    %v3394 = vunpack.c.l.b16 %v801
    %v3395 = vunpack.c.h.b16 %v801
    %v3396 = vunpack.c.l.b16 %v802
    %v3397 = vunpack.c.h.b16 %v802
    %v3398 = vunpack.c.l.b16 %v803
    %v3399 = vunpack.c.h.b16 %v803
    %v3400 = vunpack.c.l.b16 %v804
    %v3401 = vunpack.c.h.b16 %v804
    %v3402 = vunpack.c.l.b16 %v805
    %v3403 = vunpack.c.h.b16 %v805
    %v3404 = vunpack.c.l.b16 %v806
    %v3405 = vunpack.c.h.b16 %v806
    %v3406 = vunpack.c.l.b16 %v807
    %v3407 = vunpack.c.h.b16 %v807
    %v3408 = vunpack.c.l.b16 %v808
    %v3409 = vunpack.c.h.b16 %v808
    %v3410 = vunpack.c.l.b16 %v809
    %v3411 = vunpack.c.h.b16 %v809
    %v3412 = vunpack.c.l.b16 %v810
    %v3413 = vunpack.c.h.b16 %v810
    %v3414 = vunpack.c.l.b16 %v811
    %v3415 = vunpack.c.h.b16 %v811
    %v3416 = vunpack.c.l.b16 %v812
    %v3417 = vunpack.c.h.b16 %v812
    %v3418 = vunpack.c.l.b16 %v813
    %v3419 = vunpack.c.h.b16 %v813
    %v3420 = vunpack.c.l.b16 %v814
    %v3421 = vunpack.c.h.b16 %v814
    %v3422 = vunpack.c.l.b16 %v815
    %v3423 = vunpack.c.h.b16 %v815
    %v3424 = vunpack.c.l.b16 %v816
    %v3425 = vunpack.c.h.b16 %v816
    %v3426 = vunpack.c.l.b16 %v817
    %v3427 = vunpack.c.h.b16 %v817
    %v3428 = vunpack.c.l.b16 %v818
    %v3429 = vunpack.c.h.b16 %v818
    %v3430 = vunpack.c.l.b16 %v819
    %v3431 = vunpack.c.h.b16 %v819
    %v3432 = vunpack.c.l.b16 %v820
    %v3433 = vunpack.c.h.b16 %v820
    %v3434 = vunpack.c.l.b16 %v821
    %v3435 = vunpack.c.h.b16 %v821
    %v3436 = vunpack.c.l.b16 %v822
    %v3437 = vunpack.c.h.b16 %v822
    %v3438 = vunpack.c.l.b16 %v823
    %v3439 = vunpack.c.h.b16 %v823
    %v3440 = vunpack.c.l.b16 %v824
    %v3441 = vunpack.c.h.b16 %v824
    %v3442 = vunpack.c.l.b16 %v825
    %v3443 = vunpack.c.h.b16 %v825
    %v3444 = vunpack.c.l.b16 %v826
    %v3445 = vunpack.c.h.b16 %v826
    %v3446 = vunpack.c.l.b16 %v827
    %v3447 = vunpack.c.h.b16 %v827
    %v3448 = vunpack.c.l.b16 %v828
    %v3449 = vunpack.c.h.b16 %v828
    %v3450 = vunpack.c.l.b16 %v829
    %v3451 = vunpack.c.h.b16 %v829
    %v3452 = vunpack.c.l.b16 %v830
    %v3453 = vunpack.c.h.b16 %v830
    %v3454 = vunpack.c.l.b16 %v831
    %v3455 = vunpack.c.h.b16 %v831
    %v3456 = vunpack.c.l.b16 %v832
    %v3457 = vunpack.c.h.b16 %v832
    %v3458 = vunpack.c.l.b16 %v833
    %v3459 = vunpack.c.h.b16 %v833
    %v3460 = vunpack.c.l.b16 %v834
    %v3461 = vunpack.c.h.b16 %v834
    %v3462 = vunpack.c.l.b16 %v835
    %v3463 = vunpack.c.h.b16 %v835
    %v3464 = vunpack.c.l.b16 %v836
    %v3465 = vunpack.c.h.b16 %v836
    %v3466 = vunpack.c.l.b16 %v837
    %v3467 = vunpack.c.h.b16 %v837
    %v3468 = vunpack.c.l.b16 %v838
    %v3469 = vunpack.c.h.b16 %v838
    %v3470 = vunpack.c.l.b16 %v839
    %v3471 = vunpack.c.h.b16 %v839
    %v3472 = vunpack.c.l.b16 %v840
    %v3473 = vunpack.c.h.b16 %v840
    %v3474 = vunpack.c.l.b16 %v841
    %v3475 = vunpack.c.h.b16 %v841
    %v3476 = vunpack.c.l.b16 %v842
    %v3477 = vunpack.c.h.b16 %v842
    %v3478 = vunpack.c.l.b16 %v843
    %v3479 = vunpack.c.h.b16 %v843
    %v3480 = vunpack.c.l.b16 %v844
    %v3481 = vunpack.c.h.b16 %v844
    %v3482 = vunpack.c.l.b16 %v845
    %v3483 = vunpack.c.h.b16 %v845
    %v3484 = vunpack.c.l.b16 %v846
    %v3485 = vunpack.c.h.b16 %v846
    %v3486 = vunpack.c.l.b16 %v847
    %v3487 = vunpack.c.h.b16 %v847
    %v3488 = vunpack.c.l.b16 %v848
    %v3489 = vunpack.c.h.b16 %v848
    %v3490 = vunpack.c.l.b16 %v849
    %v3491 = vunpack.c.h.b16 %v849
    %v3492 = vunpack.c.l.b16 %v850
    %v3493 = vunpack.c.h.b16 %v850
    %v3494 = vunpack.c.l.b16 %v851
    %v3495 = vunpack.c.h.b16 %v851
    %v3496 = vunpack.c.l.b16 %v852
    %v3497 = vunpack.c.h.b16 %v852
    %v3498 = vunpack.c.l.b16 %v853
    %v3499 = vunpack.c.h.b16 %v853
    %v3500 = vunpack.c.l.b16 %v854
    %v3501 = vunpack.c.h.b16 %v854
    %v3502 = vunpack.c.l.b16 %v855
    %v3503 = vunpack.c.h.b16 %v855
    %v3504 = vunpack.c.l.b16 %v856
    %v3505 = vunpack.c.h.b16 %v856
    %v3506 = vunpack.c.l.b16 %v857
    %v3507 = vunpack.c.h.b16 %v857
    %v3508 = vunpack.c.l.b16 %v858
    %v3509 = vunpack.c.h.b16 %v858
    %v3510 = vunpack.c.l.b16 %v859
    %v3511 = vunpack.c.h.b16 %v859
    %v3512 = vunpack.c.l.b16 %v860
    %v3513 = vunpack.c.h.b16 %v860
    %v3514 = vunpack.c.l.b16 %v861
    %v3515 = vunpack.c.h.b16 %v861
    %v3516 = vunpack.c.l.b16 %v862
    %v3517 = vunpack.c.h.b16 %v862
    %v3518 = vunpack.c.l.b16 %v863
    %v3519 = vunpack.c.h.b16 %v863
    %v3520 = vunpack.c.l.b16 %v864
    %v3521 = vunpack.c.h.b16 %v864
    %v3522 = vunpack.c.l.b16 %v865
    %v3523 = vunpack.c.h.b16 %v865
    %v3524 = vunpack.c.l.b16 %v866
    %v3525 = vunpack.c.h.b16 %v866
    %v3526 = vunpack.c.l.b16 %v867
    %v3527 = vunpack.c.h.b16 %v867
    %v3528 = vunpack.c.l.b16 %v868
    %v3529 = vunpack.c.h.b16 %v868
    %v3530 = vunpack.c.l.b16 %v869
    %v3531 = vunpack.c.h.b16 %v869
    %v3532 = vunpack.c.l.b16 %v870
    %v3533 = vunpack.c.h.b16 %v870
    %v3534 = vunpack.c.l.b16 %v871
    %v3535 = vunpack.c.h.b16 %v871
    %v3536 = vunpack.c.l.b16 %v872
    %v3537 = vunpack.c.h.b16 %v872
    %v3538 = vunpack.c.l.b16 %v873
    %v3539 = vunpack.c.h.b16 %v873
    %v3540 = vunpack.c.l.b16 %v874
    %v3541 = vunpack.c.h.b16 %v874
    %v3542 = vunpack.c.l.b16 %v875
    %v3543 = vunpack.c.h.b16 %v875
    %v3544 = vunpack.c.l.b16 %v876
    %v3545 = vunpack.c.h.b16 %v876
    %v3546 = vunpack.c.l.b16 %v877
    %v3547 = vunpack.c.h.b16 %v877
    %v3548 = vunpack.c.l.b16 %v878
    %v3549 = vunpack.c.h.b16 %v878
    %v3550 = vunpack.c.l.b16 %v879
    %v3551 = vunpack.c.h.b16 %v879
    %v3552 = vunpack.c.l.b16 %v880
    %v3553 = vunpack.c.h.b16 %v880
    %v3554 = vunpack.c.l.b16 %v881
    %v3555 = vunpack.c.h.b16 %v881
    %v3556 = vunpack.c.l.b16 %v882
    %v3557 = vunpack.c.h.b16 %v882
    %v3558 = vunpack.c.l.b16 %v883
    %v3559 = vunpack.c.h.b16 %v883
    %v3560 = vunpack.c.l.b16 %v884
    %v3561 = vunpack.c.h.b16 %v884
    %v3562 = vunpack.c.l.b16 %v885
    %v3563 = vunpack.c.h.b16 %v885
    %v3564 = vunpack.c.l.b16 %v886
    %v3565 = vunpack.c.h.b16 %v886
    %v3566 = vunpack.c.l.b16 %v887
    %v3567 = vunpack.c.h.b16 %v887
    %v3568 = vunpack.c.l.b16 %v888
    %v3569 = vunpack.c.h.b16 %v888
    %v3570 = vunpack.c.l.b16 %v889
    %v3571 = vunpack.c.h.b16 %v889
    %v3572 = vunpack.c.l.b16 %v890
    %v3573 = vunpack.c.h.b16 %v890
    %v3574 = vunpack.c.l.b16 %v891
    %v3575 = vunpack.c.h.b16 %v891
    %v3576 = vunpack.c.l.b16 %v892
    %v3577 = vunpack.c.h.b16 %v892
    %v3578 = vunpack.c.l.b16 %v893
    %v3579 = vunpack.c.h.b16 %v893
    %v3580 = vunpack.c.l.b16 %v894
    %v3581 = vunpack.c.h.b16 %v894
    %v3582 = vunpack.c.l.b16 %v895
    %v3583 = vunpack.c.h.b16 %v895
    %v3584 = vunpack.c.l.b16 %v896
    %v3585 = vunpack.c.h.b16 %v896
    %v3586 = vunpack.c.l.b16 %v897
    %v3587 = vunpack.c.h.b16 %v897
    %v3588 = vunpack.c.l.b16 %v898
    %v3589 = vunpack.c.h.b16 %v898
    %v3590 = vunpack.c.l.b16 %v899
    %v3591 = vunpack.c.h.b16 %v899
    %v3592 = vunpack.c.l.b16 %v900
    %v3593 = vunpack.c.h.b16 %v900
    %v3594 = vunpack.c.l.b16 %v901
    %v3595 = vunpack.c.h.b16 %v901
    %v3596 = vunpack.c.l.b16 %v902
    %v3597 = vunpack.c.h.b16 %v902
    %v3598 = vunpack.c.l.b16 %v903
    %v3599 = vunpack.c.h.b16 %v903
    %v3600 = vunpack.c.l.b16 %v904
    %v3601 = vunpack.c.h.b16 %v904
    %v3602 = vunpack.c.l.b16 %v905
    %v3603 = vunpack.c.h.b16 %v905
    %v3604 = vunpack.c.l.b16 %v906
    %v3605 = vunpack.c.h.b16 %v906
    %v3606 = vunpack.c.l.b16 %v907
    %v3607 = vunpack.c.h.b16 %v907
    %v3608 = vunpack.c.l.b16 %v908
    %v3609 = vunpack.c.h.b16 %v908
    %v3610 = vunpack.c.l.b16 %v909
    %v3611 = vunpack.c.h.b16 %v909
    %v3612 = vunpack.c.l.b16 %v910
    %v3613 = vunpack.c.h.b16 %v910
    %v3614 = vunpack.c.l.b16 %v911
    %v3615 = vunpack.c.h.b16 %v911
    %v3616 = vunpack.c.l.b16 %v912
    %v3617 = vunpack.c.h.b16 %v912
    %v3618 = vunpack.c.l.b16 %v913
    %v3619 = vunpack.c.h.b16 %v913
    %v3620 = vunpack.c.l.b16 %v914
    %v3621 = vunpack.c.h.b16 %v914
    %v3622 = vunpack.c.l.b16 %v915
    %v3623 = vunpack.c.h.b16 %v915
    %v3624 = vunpack.c.l.b16 %v916
    %v3625 = vunpack.c.h.b16 %v916
    %v3626 = vunpack.c.l.b16 %v917
    %v3627 = vunpack.c.h.b16 %v917
    %v3628 = vunpack.c.l.b16 %v918
    %v3629 = vunpack.c.h.b16 %v918
    %v3630 = vunpack.c.l.b16 %v919
    %v3631 = vunpack.c.h.b16 %v919
    %v3632 = vunpack.c.l.b16 %v920
    %v3633 = vunpack.c.h.b16 %v920
    %v3634 = vunpack.c.l.b16 %v921
    %v3635 = vunpack.c.h.b16 %v921
    %v3636 = vunpack.c.l.b16 %v922
    %v3637 = vunpack.c.h.b16 %v922
    %v3638 = vunpack.c.l.b16 %v923
    %v3639 = vunpack.c.h.b16 %v923
    %v3640 = vunpack.c.l.b16 %v924
    %v3641 = vunpack.c.h.b16 %v924
    %v3642 = vunpack.c.l.b16 %v925
    %v3643 = vunpack.c.h.b16 %v925
    %v3644 = vunpack.c.l.b16 %v926
    %v3645 = vunpack.c.h.b16 %v926
    %v3646 = vunpack.c.l.b16 %v927
    %v3647 = vunpack.c.h.b16 %v927
    %v3648 = vunpack.c.l.b16 %v928
    %v3649 = vunpack.c.h.b16 %v928
    %v3650 = vunpack.c.l.b16 %v929
    %v3651 = vunpack.c.h.b16 %v929
    %v3652 = vunpack.c.l.b16 %v930
    %v3653 = vunpack.c.h.b16 %v930
    %v3654 = vunpack.c.l.b16 %v931
    %v3655 = vunpack.c.h.b16 %v931
    %v3656 = vunpack.c.l.b16 %v932
    %v3657 = vunpack.c.h.b16 %v932
    %v3658 = vunpack.c.l.b16 %v933
    %v3659 = vunpack.c.h.b16 %v933
    %v3660 = vunpack.c.l.b16 %v934
    %v3661 = vunpack.c.h.b16 %v934
    %v3662 = vunpack.c.l.b16 %v935
    %v3663 = vunpack.c.h.b16 %v935
    %v3664 = vunpack.c.l.b16 %v936
    %v3665 = vunpack.c.h.b16 %v936
    %v3666 = vunpack.c.l.b16 %v937
    %v3667 = vunpack.c.h.b16 %v937
    %v3668 = vunpack.c.l.b16 %v938
    %v3669 = vunpack.c.h.b16 %v938
    %v3670 = vunpack.c.l.b16 %v939
    %v3671 = vunpack.c.h.b16 %v939
    %v3672 = vunpack.c.l.b16 %v940
    %v3673 = vunpack.c.h.b16 %v940
    %v3674 = vunpack.c.l.b16 %v941
    %v3675 = vunpack.c.h.b16 %v941
    %v3676 = vunpack.c.l.b16 %v942
    %v3677 = vunpack.c.h.b16 %v942
    %v3678 = vunpack.c.l.b16 %v943
    %v3679 = vunpack.c.h.b16 %v943
    %v3680 = vunpack.c.l.b16 %v944
    %v3681 = vunpack.c.h.b16 %v944
    %v3682 = vunpack.c.l.b16 %v945
    %v3683 = vunpack.c.h.b16 %v945
    %v3684 = vunpack.c.l.b16 %v946
    %v3685 = vunpack.c.h.b16 %v946
    %v3686 = vunpack.c.l.b16 %v947
    %v3687 = vunpack.c.h.b16 %v947
    %v3688 = vunpack.c.l.b16 %v948
    %v3689 = vunpack.c.h.b16 %v948
    %v3690 = vunpack.c.l.b16 %v949
    %v3691 = vunpack.c.h.b16 %v949
    %v3692 = vunpack.c.l.b16 %v950
    %v3693 = vunpack.c.h.b16 %v950
    %v3694 = vunpack.c.l.b16 %v951
    %v3695 = vunpack.c.h.b16 %v951
    %v3696 = vunpack.c.l.b16 %v952
    %v3697 = vunpack.c.h.b16 %v952
    %v3698 = vunpack.c.l.b16 %v953
    %v3699 = vunpack.c.h.b16 %v953
    %v3700 = vunpack.c.l.b16 %v954
    %v3701 = vunpack.c.h.b16 %v954
    %v3702 = vunpack.c.l.b16 %v955
    %v3703 = vunpack.c.h.b16 %v955
    %v3704 = vunpack.c.l.b16 %v956
    %v3705 = vunpack.c.h.b16 %v956
    %v3706 = vunpack.c.l.b16 %v957
    %v3707 = vunpack.c.h.b16 %v957
    %v3708 = vunpack.c.l.b16 %v958
    %v3709 = vunpack.c.h.b16 %v958
    %v3710 = vunpack.c.l.b16 %v959
    %v3711 = vunpack.c.h.b16 %v959
    %v3712 = vunpack.c.l.b16 %v960
    %v3713 = vunpack.c.h.b16 %v960
    %v3714 = vunpack.c.l.b16 %v961
    %v3715 = vunpack.c.h.b16 %v961
    %v3716 = vunpack.c.l.b16 %v962
    %v3717 = vunpack.c.h.b16 %v962
    %v3718 = vunpack.c.l.b16 %v963
    %v3719 = vunpack.c.h.b16 %v963
    %v3720 = vunpack.c.l.b16 %v964
    %v3721 = vunpack.c.h.b16 %v964
    %v3722 = vunpack.c.l.b16 %v965
    %v3723 = vunpack.c.h.b16 %v965
    %v3724 = vunpack.c.l.b16 %v966
    %v3725 = vunpack.c.h.b16 %v966
    %v3726 = vunpack.c.l.b16 %v967
    %v3727 = vunpack.c.h.b16 %v967
    %v3728 = vunpack.c.l.b16 %v968
    %v3729 = vunpack.c.h.b16 %v968
    %v3730 = vunpack.c.l.b16 %v969
    %v3731 = vunpack.c.h.b16 %v969
    %v3732 = vunpack.c.l.b16 %v970
    %v3733 = vunpack.c.h.b16 %v970
    %v3734 = vunpack.c.l.b16 %v971
    %v3735 = vunpack.c.h.b16 %v971
    %v3736 = vunpack.c.l.b16 %v972
    %v3737 = vunpack.c.h.b16 %v972
    %v3738 = vunpack.c.l.b16 %v973
    %v3739 = vunpack.c.h.b16 %v973
    %v3740 = vunpack.c.l.b16 %v974
    %v3741 = vunpack.c.h.b16 %v974
    %v3742 = vunpack.c.l.b16 %v975
    %v3743 = vunpack.c.h.b16 %v975
    %v3744 = vunpack.c.l.b16 %v976
    %v3745 = vunpack.c.h.b16 %v976
    %v3746 = vunpack.c.l.b16 %v977
    %v3747 = vunpack.c.h.b16 %v977
    %v3748 = vunpack.c.l.b16 %v978
    %v3749 = vunpack.c.h.b16 %v978
    %v3750 = vunpack.c.l.b16 %v979
    %v3751 = vunpack.c.h.b16 %v979
    %v3752 = vunpack.c.l.b16 %v980
    %v3753 = vunpack.c.h.b16 %v980
    %v3754 = vunpack.c.l.b16 %v981
    %v3755 = vunpack.c.h.b16 %v981
    %v3756 = vunpack.c.l.b16 %v982
    %v3757 = vunpack.c.h.b16 %v982
    %v3758 = vunpack.c.l.b16 %v983
    %v3759 = vunpack.c.h.b16 %v983
    %v3760 = vunpack.c.l.b16 %v984
    %v3761 = vunpack.c.h.b16 %v984
    %v3762 = vunpack.c.l.b16 %v985
    %v3763 = vunpack.c.h.b16 %v985
    %v3764 = vunpack.c.l.b16 %v986
    %v3765 = vunpack.c.h.b16 %v986
    %v3766 = vunpack.c.l.b16 %v987
    %v3767 = vunpack.c.h.b16 %v987
    %v3768 = vunpack.c.l.b16 %v988
    %v3769 = vunpack.c.h.b16 %v988
    %v3770 = vunpack.c.l.b16 %v989
    %v3771 = vunpack.c.h.b16 %v989
    %v3772 = vunpack.c.l.b16 %v990
    %v3773 = vunpack.c.h.b16 %v990
    %v3774 = vunpack.c.l.b16 %v991
    %v3775 = vunpack.c.h.b16 %v991
    %v3776 = vunpack.c.l.b16 %v992
    %v3777 = vunpack.c.h.b16 %v992
    %v3778 = vunpack.c.l.b16 %v993
    %v3779 = vunpack.c.h.b16 %v993
    %v3780 = vunpack.c.l.b16 %v994
    %v3781 = vunpack.c.h.b16 %v994
    %v3782 = vunpack.c.l.b16 %v995
    %v3783 = vunpack.c.h.b16 %v995
    %v3784 = vunpack.c.l.b16 %v996
    %v3785 = vunpack.c.h.b16 %v996
    %v3786 = vunpack.c.l.b16 %v997
    %v3787 = vunpack.c.h.b16 %v997
    %v3788 = vunpack.c.l.b16 %v998
    %v3789 = vunpack.c.h.b16 %v998
    %v3790 = vunpack.c.l.b16 %v999
    %v3791 = vunpack.c.h.b16 %v999
    %v3792 = vunpack.c.l.b16 %v1000
    %v3793 = vunpack.c.h.b16 %v1000
    %v3794 = vunpack.c.l.b16 %v1001
    %v3795 = vunpack.c.h.b16 %v1001
    %v3796 = vunpack.c.l.b16 %v1002
    %v3797 = vunpack.c.h.b16 %v1002
    %v3798 = vunpack.c.l.b16 %v1003
    %v3799 = vunpack.c.h.b16 %v1003
    %v3800 = vunpack.c.l.b16 %v1004
    %v3801 = vunpack.c.h.b16 %v1004
    %v3802 = vunpack.c.l.b16 %v1005
    %v3803 = vunpack.c.h.b16 %v1005
    %v3804 = vunpack.c.l.b16 %v1006
    %v3805 = vunpack.c.h.b16 %v1006
    %v3806 = vunpack.c.l.b16 %v1007
    %v3807 = vunpack.c.h.b16 %v1007
    %v3808 = vunpack.c.l.b16 %v1008
    %v3809 = vunpack.c.h.b16 %v1008
    %v3810 = vunpack.c.l.b16 %v1009
    %v3811 = vunpack.c.h.b16 %v1009
    %v3812 = vunpack.c.l.b16 %v1010
    %v3813 = vunpack.c.h.b16 %v1010
    %v3814 = vunpack.c.l.b16 %v1011
    %v3815 = vunpack.c.h.b16 %v1011
    %v3816 = vunpack.c.l.b16 %v1012
    %v3817 = vunpack.c.h.b16 %v1012
    %v3818 = vunpack.c.l.b16 %v1013
    %v3819 = vunpack.c.h.b16 %v1013
    %v3820 = vunpack.c.l.b16 %v1014
    %v3821 = vunpack.c.h.b16 %v1014
    %v3822 = vunpack.c.l.b16 %v1015
    %v3823 = vunpack.c.h.b16 %v1015
    %v3824 = vunpack.c.l.b16 %v1016
    %v3825 = vunpack.c.h.b16 %v1016
    %v3826 = vunpack.c.l.b16 %v1017
    %v3827 = vunpack.c.h.b16 %v1017
    %v3828 = vunpack.c.l.b16 %v1018
    %v3829 = vunpack.c.h.b16 %v1018
    %v3830 = vunpack.c.l.b16 %v1019
    %v3831 = vunpack.c.h.b16 %v1019
    %v3832 = vunpack.c.l.b16 %v1020
    %v3833 = vunpack.c.h.b16 %v1020
    %v3834 = vunpack.c.l.b16 %v1021
    %v3835 = vunpack.c.h.b16 %v1021
    %v3836 = vunpack.c.l.b16 %v1022
    %v3837 = vunpack.c.h.b16 %v1022
    %v3838 = vunpack.c.l.b16 %v1023
    %v3839 = vunpack.c.h.b16 %v1023
    %v3840 = vunpack.c.l.b16 %v1024
    %v3841 = vunpack.c.h.b16 %v1024
    %v3842 = vunpack.c.l.b16 %v1025
    %v3843 = vunpack.c.h.b16 %v1025
    %v3844 = vunpack.c.l.b16 %v1026
    %v3845 = vunpack.c.h.b16 %v1026
    %v3846 = vunpack.c.l.b16 %v1027
    %v3847 = vunpack.c.h.b16 %v1027
    %v3848 = vunpack.c.l.b16 %v1028
    %v3849 = vunpack.c.h.b16 %v1028
    %v3850 = vunpack.c.l.b16 %v1029
    %v3851 = vunpack.c.h.b16 %v1029
    %v3852 = vunpack.c.l.b16 %v1030
    %v3853 = vunpack.c.h.b16 %v1030
    %v3854 = vunpack.c.l.b16 %v1031
    %v3855 = vunpack.c.h.b16 %v1031
    %v3856 = vunpack.c.l.b16 %v1032
    %v3857 = vunpack.c.h.b16 %v1032
    %v3858 = vunpack.c.l.b16 %v1033
    %v3859 = vunpack.c.h.b16 %v1033
    %v3860 = vunpack.c.l.b16 %v1034
    %v3861 = vunpack.c.h.b16 %v1034
    %v3862 = vunpack.c.l.b16 %v1035
    %v3863 = vunpack.c.h.b16 %v1035
    %v3864 = vunpack.c.l.b16 %v1036
    %v3865 = vunpack.c.h.b16 %v1036
    %v3866 = vunpack.c.l.b16 %v1037
    %v3867 = vunpack.c.h.b16 %v1037
    %v3868 = vunpack.c.l.b16 %v1038
    %v3869 = vunpack.c.h.b16 %v1038
    %v3870 = vunpack.c.l.b16 %v1039
    %v3871 = vunpack.c.h.b16 %v1039
    %v3872 = vunpack.c.l.b16 %v1040
    %v3873 = vunpack.c.h.b16 %v1040
    %v3874 = vunpack.c.l.b16 %v1041
    %v3875 = vunpack.c.h.b16 %v1041
    %v3876 = vunpack.c.l.b16 %v1042
    %v3877 = vunpack.c.h.b16 %v1042
    %v3878 = vunpack.c.l.b16 %v1043
    %v3879 = vunpack.c.h.b16 %v1043
    %v3880 = vunpack.c.l.b16 %v1044
    %v3881 = vunpack.c.h.b16 %v1044
    %v3882 = vunpack.c.l.b16 %v1045
    %v3883 = vunpack.c.h.b16 %v1045
    %v3884 = vpack.c.b16 %v2028, %v2020
    %v3885 = vpack.c.b16 %v2029, %v2021
    %v3886 = vpack.c.b16 %v2030, %v2022
    %v3887 = vpack.c.b16 %v2031, %v2023
    %v3888 = vpack.c.b16 %v2032, %v2024
    %v3889 = vpack.c.b16 %v2033, %v2025
    %v3890 = vpack.c.b16 %v2034, %v2026
    %v3891 = vpack.c.b16 %v2035, %v2027
    %v3892 = vpack.c.b16 %v2044, %v2036
    %v3893 = vpack.c.b16 %v2045, %v2037
    %v3894 = vpack.c.b16 %v2046, %v2038
    %v3895 = vpack.c.b16 %v2047, %v2039
    %v3896 = vpack.c.b16 %v2048, %v2040
    %v3897 = vpack.c.b16 %v2049, %v2041
    %v3898 = vpack.c.b16 %v2050, %v2042
    %v3899 = vpack.c.b16 %v2051, %v2043
    %v3900 = vpack.c.b16 %v2060, %v2052
    %v3901 = vpack.c.b16 %v2061, %v2053
    %v3902 = vpack.c.b16 %v2062, %v2054
    %v3903 = vpack.c.b16 %v2063, %v2055
    %v3904 = vpack.c.b16 %v2064, %v2056
    %v3905 = vpack.c.b16 %v2065, %v2057
    %v3906 = vpack.c.b16 %v2066, %v2058
    %v3907 = vpack.c.b16 %v2067, %v2059
    %v3908 = vpack.c.b16 %v2076, %v2068
    %v3909 = vpack.c.b16 %v2077, %v2069
    %v3910 = vpack.c.b16 %v2078, %v2070
    %v3911 = vpack.c.b16 %v2079, %v2071
    %v3912 = vpack.c.b16 %v2080, %v2072
    %v3913 = vpack.c.b16 %v2081, %v2073
    %v3914 = vpack.c.b16 %v2082, %v2074
    %v3915 = vpack.c.b16 %v2083, %v2075
    %v3916 = vpack.c.b16 %v2092, %v2084
    %v3917 = vpack.c.b16 %v2093, %v2085
    %v3918 = vpack.c.b16 %v2094, %v2086
    %v3919 = vpack.c.b16 %v2095, %v2087
    %v3920 = vpack.c.b16 %v2096, %v2088
    %v3921 = vpack.c.b16 %v2097, %v2089
    %v3922 = vpack.c.b16 %v2098, %v2090
    %v3923 = vpack.c.b16 %v2099, %v2091
    %v3924 = vpack.c.b16 %v2108, %v2100
    %v3925 = vpack.c.b16 %v2109, %v2101
    %v3926 = vpack.c.b16 %v2110, %v2102
    %v3927 = vpack.c.b16 %v2111, %v2103
    %v3928 = vpack.c.b16 %v2112, %v2104
    %v3929 = vpack.c.b16 %v2113, %v2105
    %v3930 = vpack.c.b16 %v2114, %v2106
    %v3931 = vpack.c.b16 %v2115, %v2107
    %v3932 = vpack.c.b16 %v2124, %v2116
    %v3933 = vpack.c.b16 %v2125, %v2117
    %v3934 = vpack.c.b16 %v2126, %v2118
    %v3935 = vpack.c.b16 %v2127, %v2119
    %v3936 = vpack.c.b16 %v2128, %v2120
    %v3937 = vpack.c.b16 %v2129, %v2121
    %v3938 = vpack.c.b16 %v2130, %v2122
    %v3939 = vpack.c.b16 %v2131, %v2123
    %v3940 = vpack.c.b16 %v2140, %v2132
    %v3941 = vpack.c.b16 %v2141, %v2133
    %v3942 = vpack.c.b16 %v2142, %v2134
    %v3943 = vpack.c.b16 %v2143, %v2135
    %v3944 = vpack.c.b16 %v2144, %v2136
    %v3945 = vpack.c.b16 %v2145, %v2137
    %v3946 = vpack.c.b16 %v2146, %v2138
    %v3947 = vpack.c.b16 %v2147, %v2139
    %v3948 = vpack.c.b16 %v2156, %v2148
    %v3949 = vpack.c.b16 %v2157, %v2149
    %v3950 = vpack.c.b16 %v2158, %v2150
    %v3951 = vpack.c.b16 %v2159, %v2151
    %v3952 = vpack.c.b16 %v2160, %v2152
    %v3953 = vpack.c.b16 %v2161, %v2153
    %v3954 = vpack.c.b16 %v2162, %v2154
    %v3955 = vpack.c.b16 %v2163, %v2155
    %v3956 = vpack.c.b16 %v2172, %v2164
    %v3957 = vpack.c.b16 %v2173, %v2165
    %v3958 = vpack.c.b16 %v2174, %v2166
    %v3959 = vpack.c.b16 %v2175, %v2167
    %v3960 = vpack.c.b16 %v2176, %v2168
    %v3961 = vpack.c.b16 %v2177, %v2169
    %v3962 = vpack.c.b16 %v2178, %v2170
    %v3963 = vpack.c.b16 %v2179, %v2171
    %v3964 = vpack.c.b16 %v2188, %v2180
    %v3965 = vpack.c.b16 %v2189, %v2181
    %v3966 = vpack.c.b16 %v2190, %v2182
    %v3967 = vpack.c.b16 %v2191, %v2183
    %v3968 = vpack.c.b16 %v2192, %v2184
    %v3969 = vpack.c.b16 %v2193, %v2185
    %v3970 = vpack.c.b16 %v2194, %v2186
    %v3971 = vpack.c.b16 %v2195, %v2187
    %v3972 = vpack.c.b16 %v2204, %v2196
    %v3973 = vpack.c.b16 %v2205, %v2197
    %v3974 = vpack.c.b16 %v2206, %v2198
    %v3975 = vpack.c.b16 %v2207, %v2199
    %v3976 = vpack.c.b16 %v2208, %v2200
    %v3977 = vpack.c.b16 %v2209, %v2201
    %v3978 = vpack.c.b16 %v2210, %v2202
    %v3979 = vpack.c.b16 %v2211, %v2203
    %v3980 = vpack.c.b16 %v2220, %v2212
    %v3981 = vpack.c.b16 %v2221, %v2213
    %v3982 = vpack.c.b16 %v2222, %v2214
    %v3983 = vpack.c.b16 %v2223, %v2215
    %v3984 = vpack.c.b16 %v2224, %v2216
    %v3985 = vpack.c.b16 %v2225, %v2217
    %v3986 = vpack.c.b16 %v2226, %v2218
    %v3987 = vpack.c.b16 %v2227, %v2219
    %v3988 = vpack.c.b16 %v2236, %v2228
    %v3989 = vpack.c.b16 %v2237, %v2229
    %v3990 = vpack.c.b16 %v2238, %v2230
    %v3991 = vpack.c.b16 %v2239, %v2231
    %v3992 = vpack.c.b16 %v2240, %v2232
    %v3993 = vpack.c.b16 %v2241, %v2233
    %v3994 = vpack.c.b16 %v2242, %v2234
    %v3995 = vpack.c.b16 %v2243, %v2235
    %v3996 = vpack.c.b16 %v2252, %v2244
    %v3997 = vpack.c.b16 %v2253, %v2245
    %v3998 = vpack.c.b16 %v2254, %v2246
    %v3999 = vpack.c.b16 %v2255, %v2247
    %v4000 = vpack.c.b16 %v2256, %v2248
    %v4001 = vpack.c.b16 %v2257, %v2249
    %v4002 = vpack.c.b16 %v2258, %v2250
    %v4003 = vpack.c.b16 %v2259, %v2251
    %v4004 = vpack.c.b16 %v2268, %v2260
    %v4005 = vpack.c.b16 %v2269, %v2261
    %v4006 = vpack.c.b16 %v2270, %v2262
    %v4007 = vpack.c.b16 %v2271, %v2263
    %v4008 = vpack.c.b16 %v2272, %v2264
    %v4009 = vpack.c.b16 %v2273, %v2265
    %v4010 = vpack.c.b16 %v2274, %v2266
    %v4011 = vpack.c.b16 %v2275, %v2267
    %v4012 = vpack.c.b16 %v2284, %v2276
    %v4013 = vpack.c.b16 %v2285, %v2277
    %v4014 = vpack.c.b16 %v2286, %v2278
    %v4015 = vpack.c.b16 %v2287, %v2279
    %v4016 = vpack.c.b16 %v2288, %v2280
    %v4017 = vpack.c.b16 %v2289, %v2281
    %v4018 = vpack.c.b16 %v2290, %v2282
    %v4019 = vpack.c.b16 %v2291, %v2283
    %v4020 = vpack.c.b16 %v2300, %v2292
    %v4021 = vpack.c.b16 %v2301, %v2293
    %v4022 = vpack.c.b16 %v2302, %v2294
    %v4023 = vpack.c.b16 %v2303, %v2295
    %v4024 = vpack.c.b16 %v2304, %v2296
    %v4025 = vpack.c.b16 %v2305, %v2297
    %v4026 = vpack.c.b16 %v2306, %v2298
    %v4027 = vpack.c.b16 %v2307, %v2299
    %v4028 = vpack.c.b16 %v2316, %v2308
    %v4029 = vpack.c.b16 %v2317, %v2309
    %v4030 = vpack.c.b16 %v2318, %v2310
    %v4031 = vpack.c.b16 %v2319, %v2311
    %v4032 = vpack.c.b16 %v2320, %v2312
    %v4033 = vpack.c.b16 %v2321, %v2313
    %v4034 = vpack.c.b16 %v2322, %v2314
    %v4035 = vpack.c.b16 %v2323, %v2315
    %v4036 = vpack.c.b16 %v2332, %v2324
    %v4037 = vpack.c.b16 %v2333, %v2325
    %v4038 = vpack.c.b16 %v2334, %v2326
    %v4039 = vpack.c.b16 %v2335, %v2327
    %v4040 = vpack.c.b16 %v2336, %v2328
    %v4041 = vpack.c.b16 %v2337, %v2329
    %v4042 = vpack.c.b16 %v2338, %v2330
    %v4043 = vpack.c.b16 %v2339, %v2331
    %v4044 = vpack.c.b16 %v2348, %v2340
    %v4045 = vpack.c.b16 %v2349, %v2341
    %v4046 = vpack.c.b16 %v2350, %v2342
    %v4047 = vpack.c.b16 %v2351, %v2343
    %v4048 = vpack.c.b16 %v2352, %v2344
    %v4049 = vpack.c.b16 %v2353, %v2345
    %v4050 = vpack.c.b16 %v2354, %v2346
    %v4051 = vpack.c.b16 %v2355, %v2347
    %v4052 = vpack.c.b16 %v2364, %v2356
    %v4053 = vpack.c.b16 %v2365, %v2357
    %v4054 = vpack.c.b16 %v2366, %v2358
    %v4055 = vpack.c.b16 %v2367, %v2359
    %v4056 = vpack.c.b16 %v2368, %v2360
    %v4057 = vpack.c.b16 %v2369, %v2361
    %v4058 = vpack.c.b16 %v2370, %v2362
    %v4059 = vpack.c.b16 %v2371, %v2363
    %v4060 = vpack.c.b16 %v2380, %v2372
    %v4061 = vpack.c.b16 %v2381, %v2373
    %v4062 = vpack.c.b16 %v2382, %v2374
    %v4063 = vpack.c.b16 %v2383, %v2375
    %v4064 = vpack.c.b16 %v2384, %v2376
    %v4065 = vpack.c.b16 %v2385, %v2377
    %v4066 = vpack.c.b16 %v2386, %v2378
    %v4067 = vpack.c.b16 %v2387, %v2379
    %v4068 = vpack.c.b16 %v2396, %v2388
    %v4069 = vpack.c.b16 %v2397, %v2389
    %v4070 = vpack.c.b16 %v2398, %v2390
    %v4071 = vpack.c.b16 %v2399, %v2391
    %v4072 = vpack.c.b16 %v2400, %v2392
    %v4073 = vpack.c.b16 %v2401, %v2393
    %v4074 = vpack.c.b16 %v2402, %v2394
    %v4075 = vpack.c.b16 %v2403, %v2395
    %v4076 = vpack.c.b16 %v2412, %v2404
    %v4077 = vpack.c.b16 %v2413, %v2405
    %v4078 = vpack.c.b16 %v2414, %v2406
    %v4079 = vpack.c.b16 %v2415, %v2407
    %v4080 = vpack.c.b16 %v2416, %v2408
    %v4081 = vpack.c.b16 %v2417, %v2409
    %v4082 = vpack.c.b16 %v2418, %v2410
    %v4083 = vpack.c.b16 %v2419, %v2411
    %v4084 = vpack.c.b16 %v2428, %v2420
    %v4085 = vpack.c.b16 %v2429, %v2421
    %v4086 = vpack.c.b16 %v2430, %v2422
    %v4087 = vpack.c.b16 %v2431, %v2423
    %v4088 = vpack.c.b16 %v2432, %v2424
    %v4089 = vpack.c.b16 %v2433, %v2425
    %v4090 = vpack.c.b16 %v2434, %v2426
    %v4091 = vpack.c.b16 %v2435, %v2427
    %v4092 = vpack.c.b16 %v2444, %v2436
    %v4093 = vpack.c.b16 %v2445, %v2437
    %v4094 = vpack.c.b16 %v2446, %v2438
    %v4095 = vpack.c.b16 %v2447, %v2439
    %v4096 = vpack.c.b16 %v2448, %v2440
    %v4097 = vpack.c.b16 %v2449, %v2441
    %v4098 = vpack.c.b16 %v2450, %v2442
    %v4099 = vpack.c.b16 %v2451, %v2443
    %v4100 = vpack.c.b16 %v2460, %v2452
    %v4101 = vpack.c.b16 %v2461, %v2453
    %v4102 = vpack.c.b16 %v2462, %v2454
    %v4103 = vpack.c.b16 %v2463, %v2455
    %v4104 = vpack.c.b16 %v2464, %v2456
    %v4105 = vpack.c.b16 %v2465, %v2457
    %v4106 = vpack.c.b16 %v2466, %v2458
    %v4107 = vpack.c.b16 %v2467, %v2459
    %v4108 = vpack.c.b16 %v2476, %v2468
    %v4109 = vpack.c.b16 %v2477, %v2469
    %v4110 = vpack.c.b16 %v2478, %v2470
    %v4111 = vpack.c.b16 %v2479, %v2471
    %v4112 = vpack.c.b16 %v2480, %v2472
    %v4113 = vpack.c.b16 %v2481, %v2473
    %v4114 = vpack.c.b16 %v2482, %v2474
    %v4115 = vpack.c.b16 %v2483, %v2475
    %v4116 = vpack.c.b16 %v2492, %v2484
    %v4117 = vpack.c.b16 %v2493, %v2485
    %v4118 = vpack.c.b16 %v2494, %v2486
    %v4119 = vpack.c.b16 %v2495, %v2487
    %v4120 = vpack.c.b16 %v2496, %v2488
    %v4121 = vpack.c.b16 %v2497, %v2489
    %v4122 = vpack.c.b16 %v2498, %v2490
    %v4123 = vpack.c.b16 %v2499, %v2491
    %v4124 = vpack.c.b16 %v2508, %v2500
    %v4125 = vpack.c.b16 %v2509, %v2501
    %v4126 = vpack.c.b16 %v2510, %v2502
    %v4127 = vpack.c.b16 %v2511, %v2503
    %v4128 = vpack.c.b16 %v2512, %v2504
    %v4129 = vpack.c.b16 %v2513, %v2505
    %v4130 = vpack.c.b16 %v2514, %v2506
    %v4131 = vpack.c.b16 %v2515, %v2507
    %v4132 = vpack.c.b16 %v2524, %v2516
    %v4133 = vpack.c.b16 %v2525, %v2517
    %v4134 = vpack.c.b16 %v2526, %v2518
    %v4135 = vpack.c.b16 %v2527, %v2519
    %v4136 = vpack.c.b16 %v2528, %v2520
    %v4137 = vpack.c.b16 %v2529, %v2521
    %v4138 = vpack.c.b16 %v2530, %v2522
    %v4139 = vpack.c.b16 %v2531, %v2523
    %v4140 = vpack.c.b16 %v2540, %v2532
    %v4141 = vpack.c.b16 %v2541, %v2533
    %v4142 = vpack.c.b16 %v2542, %v2534
    %v4143 = vpack.c.b16 %v2543, %v2535
    %v4144 = vpack.c.b16 %v2544, %v2536
    %v4145 = vpack.c.b16 %v2545, %v2537
    %v4146 = vpack.c.b16 %v2546, %v2538
    %v4147 = vpack.c.b16 %v2547, %v2539
    %v4148 = vpack.c.b16 %v2556, %v2548
    %v4149 = vpack.c.b16 %v2557, %v2549
    %v4150 = vpack.c.b16 %v2558, %v2550
    %v4151 = vpack.c.b16 %v2559, %v2551
    %v4152 = vpack.c.b16 %v2560, %v2552
    %v4153 = vpack.c.b16 %v2561, %v2553
    %v4154 = vpack.c.b16 %v2562, %v2554
    %v4155 = vpack.c.b16 %v2563, %v2555
    %v4156 = vpack.c.b16 %v2572, %v2564
    %v4157 = vpack.c.b16 %v2573, %v2565
    %v4158 = vpack.c.b16 %v2574, %v2566
    %v4159 = vpack.c.b16 %v2575, %v2567
    %v4160 = vpack.c.b16 %v2576, %v2568
    %v4161 = vpack.c.b16 %v2577, %v2569
    %v4162 = vpack.c.b16 %v2578, %v2570
    %v4163 = vpack.c.b16 %v2579, %v2571
    %v4164 = vpack.c.b16 %v2588, %v2580
    %v4165 = vpack.c.b16 %v2589, %v2581
    %v4166 = vpack.c.b16 %v2590, %v2582
    %v4167 = vpack.c.b16 %v2591, %v2583
    %v4168 = vpack.c.b16 %v2592, %v2584
    %v4169 = vpack.c.b16 %v2593, %v2585
    %v4170 = vpack.c.b16 %v2594, %v2586
    %v4171 = vpack.c.b16 %v2595, %v2587
    %v4172 = vpack.c.b16 %v2604, %v2596
    %v4173 = vpack.c.b16 %v2605, %v2597
    %v4174 = vpack.c.b16 %v2606, %v2598
    %v4175 = vpack.c.b16 %v2607, %v2599
    %v4176 = vpack.c.b16 %v2608, %v2600
    %v4177 = vpack.c.b16 %v2609, %v2601
    %v4178 = vpack.c.b16 %v2610, %v2602
    %v4179 = vpack.c.b16 %v2611, %v2603
    %v4180 = vpack.c.b16 %v2620, %v2612
    %v4181 = vpack.c.b16 %v2621, %v2613
    %v4182 = vpack.c.b16 %v2622, %v2614
    %v4183 = vpack.c.b16 %v2623, %v2615
    %v4184 = vpack.c.b16 %v2624, %v2616
    %v4185 = vpack.c.b16 %v2625, %v2617
    %v4186 = vpack.c.b16 %v2626, %v2618
    %v4187 = vpack.c.b16 %v2627, %v2619
    %v4188 = vpack.c.b16 %v2636, %v2628
    %v4189 = vpack.c.b16 %v2637, %v2629
    %v4190 = vpack.c.b16 %v2638, %v2630
    %v4191 = vpack.c.b16 %v2639, %v2631
    %v4192 = vpack.c.b16 %v2640, %v2632
    %v4193 = vpack.c.b16 %v2641, %v2633
    %v4194 = vpack.c.b16 %v2642, %v2634
    %v4195 = vpack.c.b16 %v2643, %v2635
    %v4196 = vpack.c.b16 %v2652, %v2644
    %v4197 = vpack.c.b16 %v2653, %v2645
    %v4198 = vpack.c.b16 %v2654, %v2646
    %v4199 = vpack.c.b16 %v2655, %v2647
    %v4200 = vpack.c.b16 %v2656, %v2648
    %v4201 = vpack.c.b16 %v2657, %v2649
    %v4202 = vpack.c.b16 %v2658, %v2650
    %v4203 = vpack.c.b16 %v2659, %v2651
    %v4204 = vpack.c.b16 %v2668, %v2660
    %v4205 = vpack.c.b16 %v2669, %v2661
    %v4206 = vpack.c.b16 %v2670, %v2662
    %v4207 = vpack.c.b16 %v2671, %v2663
    %v4208 = vpack.c.b16 %v2672, %v2664
    %v4209 = vpack.c.b16 %v2673, %v2665
    %v4210 = vpack.c.b16 %v2674, %v2666
    %v4211 = vpack.c.b16 %v2675, %v2667
    %v4212 = vpack.c.b16 %v2684, %v2676
    %v4213 = vpack.c.b16 %v2685, %v2677
    %v4214 = vpack.c.b16 %v2686, %v2678
    %v4215 = vpack.c.b16 %v2687, %v2679
    %v4216 = vpack.c.b16 %v2688, %v2680
    %v4217 = vpack.c.b16 %v2689, %v2681
    %v4218 = vpack.c.b16 %v2690, %v2682
    %v4219 = vpack.c.b16 %v2691, %v2683
    %v4220 = vpack.c.b16 %v2700, %v2692
    %v4221 = vpack.c.b16 %v2701, %v2693
    %v4222 = vpack.c.b16 %v2702, %v2694
    %v4223 = vpack.c.b16 %v2703, %v2695
    %v4224 = vpack.c.b16 %v2704, %v2696
    %v4225 = vpack.c.b16 %v2705, %v2697
    %v4226 = vpack.c.b16 %v2706, %v2698
    %v4227 = vpack.c.b16 %v2707, %v2699
    %v4228 = vpack.c.b16 %v2716, %v2708
    %v4229 = vpack.c.b16 %v2717, %v2709
    %v4230 = vpack.c.b16 %v2718, %v2710
    %v4231 = vpack.c.b16 %v2719, %v2711
    %v4232 = vpack.c.b16 %v2720, %v2712
    %v4233 = vpack.c.b16 %v2721, %v2713
    %v4234 = vpack.c.b16 %v2722, %v2714
    %v4235 = vpack.c.b16 %v2723, %v2715
    %v4236 = vpack.c.b16 %v2732, %v2724
    %v4237 = vpack.c.b16 %v2733, %v2725
    %v4238 = vpack.c.b16 %v2734, %v2726
    %v4239 = vpack.c.b16 %v2735, %v2727
    %v4240 = vpack.c.b16 %v2736, %v2728
    %v4241 = vpack.c.b16 %v2737, %v2729
    %v4242 = vpack.c.b16 %v2738, %v2730
    %v4243 = vpack.c.b16 %v2739, %v2731
    %v4244 = vpack.c.b16 %v2748, %v2740
    %v4245 = vpack.c.b16 %v2749, %v2741
    %v4246 = vpack.c.b16 %v2750, %v2742
    %v4247 = vpack.c.b16 %v2751, %v2743
    %v4248 = vpack.c.b16 %v2752, %v2744
    %v4249 = vpack.c.b16 %v2753, %v2745
    %v4250 = vpack.c.b16 %v2754, %v2746
    %v4251 = vpack.c.b16 %v2755, %v2747
    %v4252 = vpack.c.b16 %v2764, %v2756
    %v4253 = vpack.c.b16 %v2765, %v2757
    %v4254 = vpack.c.b16 %v2766, %v2758
    %v4255 = vpack.c.b16 %v2767, %v2759
    %v4256 = vpack.c.b16 %v2768, %v2760
    %v4257 = vpack.c.b16 %v2769, %v2761
    %v4258 = vpack.c.b16 %v2770, %v2762
    %v4259 = vpack.c.b16 %v2771, %v2763
    %v4260 = vpack.c.b16 %v2780, %v2772
    %v4261 = vpack.c.b16 %v2781, %v2773
    %v4262 = vpack.c.b16 %v2782, %v2774
    %v4263 = vpack.c.b16 %v2783, %v2775
    %v4264 = vpack.c.b16 %v2784, %v2776
    %v4265 = vpack.c.b16 %v2785, %v2777
    %v4266 = vpack.c.b16 %v2786, %v2778
    %v4267 = vpack.c.b16 %v2787, %v2779
    %v4268 = vpack.c.b16 %v2796, %v2788
    %v4269 = vpack.c.b16 %v2797, %v2789
    %v4270 = vpack.c.b16 %v2798, %v2790
    %v4271 = vpack.c.b16 %v2799, %v2791
    %v4272 = vpack.c.b16 %v2800, %v2792
    %v4273 = vpack.c.b16 %v2801, %v2793
    %v4274 = vpack.c.b16 %v2802, %v2794
    %v4275 = vpack.c.b16 %v2803, %v2795
    %v4276 = vpack.c.b16 %v2812, %v2804
    %v4277 = vpack.c.b16 %v2813, %v2805
    %v4278 = vpack.c.b16 %v2814, %v2806
    %v4279 = vpack.c.b16 %v2815, %v2807
    %v4280 = vpack.c.b16 %v2816, %v2808
    %v4281 = vpack.c.b16 %v2817, %v2809
    %v4282 = vpack.c.b16 %v2818, %v2810
    %v4283 = vpack.c.b16 %v2819, %v2811
    %v4284 = vpack.c.b16 %v2828, %v2820
    %v4285 = vpack.c.b16 %v2829, %v2821
    %v4286 = vpack.c.b16 %v2830, %v2822
    %v4287 = vpack.c.b16 %v2831, %v2823
    %v4288 = vpack.c.b16 %v2832, %v2824
    %v4289 = vpack.c.b16 %v2833, %v2825
    %v4290 = vpack.c.b16 %v2834, %v2826
    %v4291 = vpack.c.b16 %v2835, %v2827
    %v4292 = vpack.c.b16 %v2844, %v2836
    %v4293 = vpack.c.b16 %v2845, %v2837
    %v4294 = vpack.c.b16 %v2846, %v2838
    %v4295 = vpack.c.b16 %v2847, %v2839
    %v4296 = vpack.c.b16 %v2848, %v2840
    %v4297 = vpack.c.b16 %v2849, %v2841
    %v4298 = vpack.c.b16 %v2850, %v2842
    %v4299 = vpack.c.b16 %v2851, %v2843
    %v4300 = vpack.c.b16 %v2860, %v2852
    %v4301 = vpack.c.b16 %v2861, %v2853
    %v4302 = vpack.c.b16 %v2862, %v2854
    %v4303 = vpack.c.b16 %v2863, %v2855
    %v4304 = vpack.c.b16 %v2864, %v2856
    %v4305 = vpack.c.b16 %v2865, %v2857
    %v4306 = vpack.c.b16 %v2866, %v2858
    %v4307 = vpack.c.b16 %v2867, %v2859
    %v4308 = vpack.c.b16 %v2876, %v2868
    %v4309 = vpack.c.b16 %v2877, %v2869
    %v4310 = vpack.c.b16 %v2878, %v2870
    %v4311 = vpack.c.b16 %v2879, %v2871
    %v4312 = vpack.c.b16 %v2880, %v2872
    %v4313 = vpack.c.b16 %v2881, %v2873
    %v4314 = vpack.c.b16 %v2882, %v2874
    %v4315 = vpack.c.b16 %v2883, %v2875
    %v4316 = vpack.c.b16 %v2892, %v2884
    %v4317 = vpack.c.b16 %v2893, %v2885
    %v4318 = vpack.c.b16 %v2894, %v2886
    %v4319 = vpack.c.b16 %v2895, %v2887
    %v4320 = vpack.c.b16 %v2896, %v2888
    %v4321 = vpack.c.b16 %v2897, %v2889
    %v4322 = vpack.c.b16 %v2898, %v2890
    %v4323 = vpack.c.b16 %v2899, %v2891
    %v4324 = vpack.c.b16 %v2908, %v2900
    %v4325 = vpack.c.b16 %v2909, %v2901
    %v4326 = vpack.c.b16 %v2910, %v2902
    %v4327 = vpack.c.b16 %v2911, %v2903
    %v4328 = vpack.c.b16 %v2912, %v2904
    %v4329 = vpack.c.b16 %v2913, %v2905
    %v4330 = vpack.c.b16 %v2914, %v2906
    %v4331 = vpack.c.b16 %v2915, %v2907
    %v4332 = vpack.c.b16 %v2924, %v2916
    %v4333 = vpack.c.b16 %v2925, %v2917
    %v4334 = vpack.c.b16 %v2926, %v2918
    %v4335 = vpack.c.b16 %v2927, %v2919
    %v4336 = vpack.c.b16 %v2928, %v2920
    %v4337 = vpack.c.b16 %v2929, %v2921
    %v4338 = vpack.c.b16 %v2930, %v2922
    %v4339 = vpack.c.b16 %v2931, %v2923
    %v4340 = vpack.c.b16 %v2940, %v2932
    %v4341 = vpack.c.b16 %v2941, %v2933
    %v4342 = vpack.c.b16 %v2942, %v2934
    %v4343 = vpack.c.b16 %v2943, %v2935
    %v4344 = vpack.c.b16 %v2944, %v2936
    %v4345 = vpack.c.b16 %v2945, %v2937
    %v4346 = vpack.c.b16 %v2946, %v2938
    %v4347 = vpack.c.b16 %v2947, %v2939
    %v4348 = vpack.c.b16 %v2956, %v2948
    %v4349 = vpack.c.b16 %v2957, %v2949
    %v4350 = vpack.c.b16 %v2958, %v2950
    %v4351 = vpack.c.b16 %v2959, %v2951
    %v4352 = vpack.c.b16 %v2960, %v2952
    %v4353 = vpack.c.b16 %v2961, %v2953
    %v4354 = vpack.c.b16 %v2962, %v2954
    %v4355 = vpack.c.b16 %v2963, %v2955
    %v4356 = vpack.c.b16 %v2972, %v2964
    %v4357 = vpack.c.b16 %v2973, %v2965
    %v4358 = vpack.c.b16 %v2974, %v2966
    %v4359 = vpack.c.b16 %v2975, %v2967
    %v4360 = vpack.c.b16 %v2976, %v2968
    %v4361 = vpack.c.b16 %v2977, %v2969
    %v4362 = vpack.c.b16 %v2978, %v2970
    %v4363 = vpack.c.b16 %v2979, %v2971
    %v4364 = vpack.c.b16 %v2988, %v2980
    %v4365 = vpack.c.b16 %v2989, %v2981
    %v4366 = vpack.c.b16 %v2990, %v2982
    %v4367 = vpack.c.b16 %v2991, %v2983
    %v4368 = vpack.c.b16 %v2992, %v2984
    %v4369 = vpack.c.b16 %v2993, %v2985
    %v4370 = vpack.c.b16 %v2994, %v2986
    %v4371 = vpack.c.b16 %v2995, %v2987
    %v4372 = vpack.c.b16 %v3004, %v2996
    %v4373 = vpack.c.b16 %v3005, %v2997
    %v4374 = vpack.c.b16 %v3006, %v2998
    %v4375 = vpack.c.b16 %v3007, %v2999
    %v4376 = vpack.c.b16 %v3008, %v3000
    %v4377 = vpack.c.b16 %v3009, %v3001
    %v4378 = vpack.c.b16 %v3010, %v3002
    %v4379 = vpack.c.b16 %v3011, %v3003
    %v4380 = vpack.c.b16 %v3020, %v3012
    %v4381 = vpack.c.b16 %v3021, %v3013
    %v4382 = vpack.c.b16 %v3022, %v3014
    %v4383 = vpack.c.b16 %v3023, %v3015
    %v4384 = vpack.c.b16 %v3024, %v3016
    %v4385 = vpack.c.b16 %v3025, %v3017
    %v4386 = vpack.c.b16 %v3026, %v3018
    %v4387 = vpack.c.b16 %v3027, %v3019
    %v4388 = vpack.c.b16 %v3036, %v3028
    %v4389 = vpack.c.b16 %v3037, %v3029
    %v4390 = vpack.c.b16 %v3038, %v3030
    %v4391 = vpack.c.b16 %v3039, %v3031
    %v4392 = vpack.c.b16 %v3040, %v3032
    %v4393 = vpack.c.b16 %v3041, %v3033
    %v4394 = vpack.c.b16 %v3042, %v3034
    %v4395 = vpack.c.b16 %v3043, %v3035
    %v4396 = vpack.c.b16 %v3052, %v3044
    %v4397 = vpack.c.b16 %v3053, %v3045
    %v4398 = vpack.c.b16 %v3054, %v3046
    %v4399 = vpack.c.b16 %v3055, %v3047
    %v4400 = vpack.c.b16 %v3056, %v3048
    %v4401 = vpack.c.b16 %v3057, %v3049
    %v4402 = vpack.c.b16 %v3058, %v3050
    %v4403 = vpack.c.b16 %v3059, %v3051
    %v4404 = vpack.c.b16 %v3068, %v3060
    %v4405 = vpack.c.b16 %v3069, %v3061
    %v4406 = vpack.c.b16 %v3070, %v3062
    %v4407 = vpack.c.b16 %v3071, %v3063
    %v4408 = vpack.c.b16 %v3072, %v3064
    %v4409 = vpack.c.b16 %v3073, %v3065
    %v4410 = vpack.c.b16 %v3074, %v3066
    %v4411 = vpack.c.b16 %v3075, %v3067
    %v4412 = vpack.c.b16 %v3084, %v3076
    %v4413 = vpack.c.b16 %v3085, %v3077
    %v4414 = vpack.c.b16 %v3086, %v3078
    %v4415 = vpack.c.b16 %v3087, %v3079
    %v4416 = vpack.c.b16 %v3088, %v3080
    %v4417 = vpack.c.b16 %v3089, %v3081
    %v4418 = vpack.c.b16 %v3090, %v3082
    %v4419 = vpack.c.b16 %v3091, %v3083
    %v4420 = vpack.c.b16 %v3100, %v3092
    %v4421 = vpack.c.b16 %v3101, %v3093
    %v4422 = vpack.c.b16 %v3102, %v3094
    %v4423 = vpack.c.b16 %v3103, %v3095
    %v4424 = vpack.c.b16 %v3104, %v3096
    %v4425 = vpack.c.b16 %v3105, %v3097
    %v4426 = vpack.c.b16 %v3106, %v3098
    %v4427 = vpack.c.b16 %v3107, %v3099
    %v4428 = vpack.c.b16 %v3116, %v3108
    %v4429 = vpack.c.b16 %v3117, %v3109
    %v4430 = vpack.c.b16 %v3118, %v3110
    %v4431 = vpack.c.b16 %v3119, %v3111
    %v4432 = vpack.c.b16 %v3120, %v3112
    %v4433 = vpack.c.b16 %v3121, %v3113
    %v4434 = vpack.c.b16 %v3122, %v3114
    %v4435 = vpack.c.b16 %v3123, %v3115
    %v4436 = vpack.c.b16 %v3132, %v3124
    %v4437 = vpack.c.b16 %v3133, %v3125
    %v4438 = vpack.c.b16 %v3134, %v3126
    %v4439 = vpack.c.b16 %v3135, %v3127
    %v4440 = vpack.c.b16 %v3136, %v3128
    %v4441 = vpack.c.b16 %v3137, %v3129
    %v4442 = vpack.c.b16 %v3138, %v3130
    %v4443 = vpack.c.b16 %v3139, %v3131
    %v4444 = vpack.c.b16 %v3148, %v3140
    %v4445 = vpack.c.b16 %v3149, %v3141
    %v4446 = vpack.c.b16 %v3150, %v3142
    %v4447 = vpack.c.b16 %v3151, %v3143
    %v4448 = vpack.c.b16 %v3152, %v3144
    %v4449 = vpack.c.b16 %v3153, %v3145
    %v4450 = vpack.c.b16 %v3154, %v3146
    %v4451 = vpack.c.b16 %v3155, %v3147
    %v4452 = vpack.c.b16 %v3164, %v3156
    %v4453 = vpack.c.b16 %v3165, %v3157
    %v4454 = vpack.c.b16 %v3166, %v3158
    %v4455 = vpack.c.b16 %v3167, %v3159
    %v4456 = vpack.c.b16 %v3168, %v3160
    %v4457 = vpack.c.b16 %v3169, %v3161
    %v4458 = vpack.c.b16 %v3170, %v3162
    %v4459 = vpack.c.b16 %v3171, %v3163
    %v4460 = vpack.c.b16 %v3180, %v3172
    %v4461 = vpack.c.b16 %v3181, %v3173
    %v4462 = vpack.c.b16 %v3182, %v3174
    %v4463 = vpack.c.b16 %v3183, %v3175
    %v4464 = vpack.c.b16 %v3184, %v3176
    %v4465 = vpack.c.b16 %v3185, %v3177
    %v4466 = vpack.c.b16 %v3186, %v3178
    %v4467 = vpack.c.b16 %v3187, %v3179
    %v4468 = vpack.c.b16 %v3196, %v3188
    %v4469 = vpack.c.b16 %v3197, %v3189
    %v4470 = vpack.c.b16 %v3198, %v3190
    %v4471 = vpack.c.b16 %v3199, %v3191
    %v4472 = vpack.c.b16 %v3200, %v3192
    %v4473 = vpack.c.b16 %v3201, %v3193
    %v4474 = vpack.c.b16 %v3202, %v3194
    %v4475 = vpack.c.b16 %v3203, %v3195
    %v4476 = vpack.c.b16 %v3212, %v3204
    %v4477 = vpack.c.b16 %v3213, %v3205
    %v4478 = vpack.c.b16 %v3214, %v3206
    %v4479 = vpack.c.b16 %v3215, %v3207
    %v4480 = vpack.c.b16 %v3216, %v3208
    %v4481 = vpack.c.b16 %v3217, %v3209
    %v4482 = vpack.c.b16 %v3218, %v3210
    %v4483 = vpack.c.b16 %v3219, %v3211
    %v4484 = vpack.c.b16 %v3228, %v3220
    %v4485 = vpack.c.b16 %v3229, %v3221
    %v4486 = vpack.c.b16 %v3230, %v3222
    %v4487 = vpack.c.b16 %v3231, %v3223
    %v4488 = vpack.c.b16 %v3232, %v3224
    %v4489 = vpack.c.b16 %v3233, %v3225
    %v4490 = vpack.c.b16 %v3234, %v3226
    %v4491 = vpack.c.b16 %v3235, %v3227
    %v4492 = vpack.c.b16 %v3244, %v3236
    %v4493 = vpack.c.b16 %v3245, %v3237
    %v4494 = vpack.c.b16 %v3246, %v3238
    %v4495 = vpack.c.b16 %v3247, %v3239
    %v4496 = vpack.c.b16 %v3248, %v3240
    %v4497 = vpack.c.b16 %v3249, %v3241
    %v4498 = vpack.c.b16 %v3250, %v3242
    %v4499 = vpack.c.b16 %v3251, %v3243
    %v4500 = vpack.c.b16 %v3260, %v3252
    %v4501 = vpack.c.b16 %v3261, %v3253
    %v4502 = vpack.c.b16 %v3262, %v3254
    %v4503 = vpack.c.b16 %v3263, %v3255
    %v4504 = vpack.c.b16 %v3264, %v3256
    %v4505 = vpack.c.b16 %v3265, %v3257
    %v4506 = vpack.c.b16 %v3266, %v3258
    %v4507 = vpack.c.b16 %v3267, %v3259
    %v4508 = vpack.c.b16 %v3276, %v3268
    %v4509 = vpack.c.b16 %v3277, %v3269
    %v4510 = vpack.c.b16 %v3278, %v3270
    %v4511 = vpack.c.b16 %v3279, %v3271
    %v4512 = vpack.c.b16 %v3280, %v3272
    %v4513 = vpack.c.b16 %v3281, %v3273
    %v4514 = vpack.c.b16 %v3282, %v3274
    %v4515 = vpack.c.b16 %v3283, %v3275
    %v4516 = vpack.c.b16 %v3292, %v3284
    %v4517 = vpack.c.b16 %v3293, %v3285
    %v4518 = vpack.c.b16 %v3294, %v3286
    %v4519 = vpack.c.b16 %v3295, %v3287
    %v4520 = vpack.c.b16 %v3296, %v3288
    %v4521 = vpack.c.b16 %v3297, %v3289
    %v4522 = vpack.c.b16 %v3298, %v3290
    %v4523 = vpack.c.b16 %v3299, %v3291
    %v4524 = vpack.c.b16 %v3308, %v3300
    %v4525 = vpack.c.b16 %v3309, %v3301
    %v4526 = vpack.c.b16 %v3310, %v3302
    %v4527 = vpack.c.b16 %v3311, %v3303
    %v4528 = vpack.c.b16 %v3312, %v3304
    %v4529 = vpack.c.b16 %v3313, %v3305
    %v4530 = vpack.c.b16 %v3314, %v3306
    %v4531 = vpack.c.b16 %v3315, %v3307
    %v4532 = vpack.c.b16 %v3324, %v3316
    %v4533 = vpack.c.b16 %v3325, %v3317
    %v4534 = vpack.c.b16 %v3326, %v3318
    %v4535 = vpack.c.b16 %v3327, %v3319
    %v4536 = vpack.c.b16 %v3328, %v3320
    %v4537 = vpack.c.b16 %v3329, %v3321
    %v4538 = vpack.c.b16 %v3330, %v3322
    %v4539 = vpack.c.b16 %v3331, %v3323
    %v4540 = vpack.c.b16 %v3340, %v3332
    %v4541 = vpack.c.b16 %v3341, %v3333
    %v4542 = vpack.c.b16 %v3342, %v3334
    %v4543 = vpack.c.b16 %v3343, %v3335
    %v4544 = vpack.c.b16 %v3344, %v3336
    %v4545 = vpack.c.b16 %v3345, %v3337
    %v4546 = vpack.c.b16 %v3346, %v3338
    %v4547 = vpack.c.b16 %v3347, %v3339
    %v4548 = vpack.c.b16 %v3356, %v3348
    %v4549 = vpack.c.b16 %v3357, %v3349
    %v4550 = vpack.c.b16 %v3358, %v3350
    %v4551 = vpack.c.b16 %v3359, %v3351
    %v4552 = vpack.c.b16 %v3360, %v3352
    %v4553 = vpack.c.b16 %v3361, %v3353
    %v4554 = vpack.c.b16 %v3362, %v3354
    %v4555 = vpack.c.b16 %v3363, %v3355
    %v4556 = vpack.c.b16 %v3372, %v3364
    %v4557 = vpack.c.b16 %v3373, %v3365
    %v4558 = vpack.c.b16 %v3374, %v3366
    %v4559 = vpack.c.b16 %v3375, %v3367
    %v4560 = vpack.c.b16 %v3376, %v3368
    %v4561 = vpack.c.b16 %v3377, %v3369
    %v4562 = vpack.c.b16 %v3378, %v3370
    %v4563 = vpack.c.b16 %v3379, %v3371
    %v4564 = vpack.c.b16 %v3388, %v3380
    %v4565 = vpack.c.b16 %v3389, %v3381
    %v4566 = vpack.c.b16 %v3390, %v3382
    %v4567 = vpack.c.b16 %v3391, %v3383
    %v4568 = vpack.c.b16 %v3392, %v3384
    %v4569 = vpack.c.b16 %v3393, %v3385
    %v4570 = vpack.c.b16 %v3394, %v3386
    %v4571 = vpack.c.b16 %v3395, %v3387
    %v4572 = vpack.c.b16 %v3404, %v3396
    %v4573 = vpack.c.b16 %v3405, %v3397
    %v4574 = vpack.c.b16 %v3406, %v3398
    %v4575 = vpack.c.b16 %v3407, %v3399
    %v4576 = vpack.c.b16 %v3408, %v3400
    %v4577 = vpack.c.b16 %v3409, %v3401
    %v4578 = vpack.c.b16 %v3410, %v3402
    %v4579 = vpack.c.b16 %v3411, %v3403
    %v4580 = vpack.c.b16 %v3420, %v3412
    %v4581 = vpack.c.b16 %v3421, %v3413
    %v4582 = vpack.c.b16 %v3422, %v3414
    %v4583 = vpack.c.b16 %v3423, %v3415
    %v4584 = vpack.c.b16 %v3424, %v3416
    %v4585 = vpack.c.b16 %v3425, %v3417
    %v4586 = vpack.c.b16 %v3426, %v3418
    %v4587 = vpack.c.b16 %v3427, %v3419
    %v4588 = vpack.c.b16 %v3436, %v3428
    %v4589 = vpack.c.b16 %v3437, %v3429
    %v4590 = vpack.c.b16 %v3438, %v3430
    %v4591 = vpack.c.b16 %v3439, %v3431
    %v4592 = vpack.c.b16 %v3440, %v3432
    %v4593 = vpack.c.b16 %v3441, %v3433
    %v4594 = vpack.c.b16 %v3442, %v3434
    %v4595 = vpack.c.b16 %v3443, %v3435
    %v4596 = vpack.c.b16 %v3452, %v3444
    %v4597 = vpack.c.b16 %v3453, %v3445
    %v4598 = vpack.c.b16 %v3454, %v3446
    %v4599 = vpack.c.b16 %v3455, %v3447
    %v4600 = vpack.c.b16 %v3456, %v3448
    %v4601 = vpack.c.b16 %v3457, %v3449
    %v4602 = vpack.c.b16 %v3458, %v3450
    %v4603 = vpack.c.b16 %v3459, %v3451
    %v4604 = vpack.c.b16 %v3468, %v3460
    %v4605 = vpack.c.b16 %v3469, %v3461
    %v4606 = vpack.c.b16 %v3470, %v3462
    %v4607 = vpack.c.b16 %v3471, %v3463
    %v4608 = vpack.c.b16 %v3472, %v3464
    %v4609 = vpack.c.b16 %v3473, %v3465
    %v4610 = vpack.c.b16 %v3474, %v3466
    %v4611 = vpack.c.b16 %v3475, %v3467
    %v4612 = vpack.c.b16 %v3484, %v3476
    %v4613 = vpack.c.b16 %v3485, %v3477
    %v4614 = vpack.c.b16 %v3486, %v3478
    %v4615 = vpack.c.b16 %v3487, %v3479
    %v4616 = vpack.c.b16 %v3488, %v3480
    %v4617 = vpack.c.b16 %v3489, %v3481
    %v4618 = vpack.c.b16 %v3490, %v3482
    %v4619 = vpack.c.b16 %v3491, %v3483
    %v4620 = vpack.c.b16 %v3500, %v3492
    %v4621 = vpack.c.b16 %v3501, %v3493
    %v4622 = vpack.c.b16 %v3502, %v3494
    %v4623 = vpack.c.b16 %v3503, %v3495
    %v4624 = vpack.c.b16 %v3504, %v3496
    %v4625 = vpack.c.b16 %v3505, %v3497
    %v4626 = vpack.c.b16 %v3506, %v3498
    %v4627 = vpack.c.b16 %v3507, %v3499
    %v4628 = vpack.c.b16 %v3516, %v3508
    %v4629 = vpack.c.b16 %v3517, %v3509
    %v4630 = vpack.c.b16 %v3518, %v3510
    %v4631 = vpack.c.b16 %v3519, %v3511
    %v4632 = vpack.c.b16 %v3520, %v3512
    %v4633 = vpack.c.b16 %v3521, %v3513
    %v4634 = vpack.c.b16 %v3522, %v3514
    %v4635 = vpack.c.b16 %v3523, %v3515
    %v4636 = vpack.c.b16 %v3532, %v3524
    %v4637 = vpack.c.b16 %v3533, %v3525
    %v4638 = vpack.c.b16 %v3534, %v3526
    %v4639 = vpack.c.b16 %v3535, %v3527
    %v4640 = vpack.c.b16 %v3536, %v3528
    %v4641 = vpack.c.b16 %v3537, %v3529
    %v4642 = vpack.c.b16 %v3538, %v3530
    %v4643 = vpack.c.b16 %v3539, %v3531
    %v4644 = vpack.c.b16 %v3548, %v3540
    %v4645 = vpack.c.b16 %v3549, %v3541
    %v4646 = vpack.c.b16 %v3550, %v3542
    %v4647 = vpack.c.b16 %v3551, %v3543
    %v4648 = vpack.c.b16 %v3552, %v3544
    %v4649 = vpack.c.b16 %v3553, %v3545
    %v4650 = vpack.c.b16 %v3554, %v3546
    %v4651 = vpack.c.b16 %v3555, %v3547
    %v4652 = vpack.c.b16 %v3564, %v3556
    %v4653 = vpack.c.b16 %v3565, %v3557
    %v4654 = vpack.c.b16 %v3566, %v3558
    %v4655 = vpack.c.b16 %v3567, %v3559
    %v4656 = vpack.c.b16 %v3568, %v3560
    %v4657 = vpack.c.b16 %v3569, %v3561
    %v4658 = vpack.c.b16 %v3570, %v3562
    %v4659 = vpack.c.b16 %v3571, %v3563
    %v4660 = vpack.c.b16 %v3580, %v3572
    %v4661 = vpack.c.b16 %v3581, %v3573
    %v4662 = vpack.c.b16 %v3582, %v3574
    %v4663 = vpack.c.b16 %v3583, %v3575
    %v4664 = vpack.c.b16 %v3584, %v3576
    %v4665 = vpack.c.b16 %v3585, %v3577
    %v4666 = vpack.c.b16 %v3586, %v3578
    %v4667 = vpack.c.b16 %v3587, %v3579
    %v4668 = vpack.c.b16 %v3596, %v3588
    %v4669 = vpack.c.b16 %v3597, %v3589
    %v4670 = vpack.c.b16 %v3598, %v3590
    %v4671 = vpack.c.b16 %v3599, %v3591
    %v4672 = vpack.c.b16 %v3600, %v3592
    %v4673 = vpack.c.b16 %v3601, %v3593
    %v4674 = vpack.c.b16 %v3602, %v3594
    %v4675 = vpack.c.b16 %v3603, %v3595
    %v4676 = vpack.c.b16 %v3612, %v3604
    %v4677 = vpack.c.b16 %v3613, %v3605
    %v4678 = vpack.c.b16 %v3614, %v3606
    %v4679 = vpack.c.b16 %v3615, %v3607
    %v4680 = vpack.c.b16 %v3616, %v3608
    %v4681 = vpack.c.b16 %v3617, %v3609
    %v4682 = vpack.c.b16 %v3618, %v3610
    %v4683 = vpack.c.b16 %v3619, %v3611
    %v4684 = vpack.c.b16 %v3628, %v3620
    %v4685 = vpack.c.b16 %v3629, %v3621
    %v4686 = vpack.c.b16 %v3630, %v3622
    %v4687 = vpack.c.b16 %v3631, %v3623
    %v4688 = vpack.c.b16 %v3632, %v3624
    %v4689 = vpack.c.b16 %v3633, %v3625
    %v4690 = vpack.c.b16 %v3634, %v3626
    %v4691 = vpack.c.b16 %v3635, %v3627
    %v4692 = vpack.c.b16 %v3644, %v3636
    %v4693 = vpack.c.b16 %v3645, %v3637
    %v4694 = vpack.c.b16 %v3646, %v3638
    %v4695 = vpack.c.b16 %v3647, %v3639
    %v4696 = vpack.c.b16 %v3648, %v3640
    %v4697 = vpack.c.b16 %v3649, %v3641
    %v4698 = vpack.c.b16 %v3650, %v3642
    %v4699 = vpack.c.b16 %v3651, %v3643
    %v4700 = vpack.c.b16 %v3660, %v3652
    %v4701 = vpack.c.b16 %v3661, %v3653
    %v4702 = vpack.c.b16 %v3662, %v3654
    %v4703 = vpack.c.b16 %v3663, %v3655
    %v4704 = vpack.c.b16 %v3664, %v3656
    %v4705 = vpack.c.b16 %v3665, %v3657
    %v4706 = vpack.c.b16 %v3666, %v3658
    %v4707 = vpack.c.b16 %v3667, %v3659
    %v4708 = vpack.c.b16 %v3676, %v3668
    %v4709 = vpack.c.b16 %v3677, %v3669
    %v4710 = vpack.c.b16 %v3678, %v3670
    %v4711 = vpack.c.b16 %v3679, %v3671
    %v4712 = vpack.c.b16 %v3680, %v3672
    %v4713 = vpack.c.b16 %v3681, %v3673
    %v4714 = vpack.c.b16 %v3682, %v3674
    %v4715 = vpack.c.b16 %v3683, %v3675
    %v4716 = vpack.c.b16 %v3692, %v3684
    %v4717 = vpack.c.b16 %v3693, %v3685
    %v4718 = vpack.c.b16 %v3694, %v3686
    %v4719 = vpack.c.b16 %v3695, %v3687
    %v4720 = vpack.c.b16 %v3696, %v3688
    %v4721 = vpack.c.b16 %v3697, %v3689
    %v4722 = vpack.c.b16 %v3698, %v3690
    %v4723 = vpack.c.b16 %v3699, %v3691
    %v4724 = vpack.c.b16 %v3708, %v3700
    %v4725 = vpack.c.b16 %v3709, %v3701
    %v4726 = vpack.c.b16 %v3710, %v3702
    %v4727 = vpack.c.b16 %v3711, %v3703
    %v4728 = vpack.c.b16 %v3712, %v3704
    %v4729 = vpack.c.b16 %v3713, %v3705
    %v4730 = vpack.c.b16 %v3714, %v3706
    %v4731 = vpack.c.b16 %v3715, %v3707
    %v4732 = vpack.c.b16 %v3724, %v3716
    %v4733 = vpack.c.b16 %v3725, %v3717
    %v4734 = vpack.c.b16 %v3726, %v3718
    %v4735 = vpack.c.b16 %v3727, %v3719
    %v4736 = vpack.c.b16 %v3728, %v3720
    %v4737 = vpack.c.b16 %v3729, %v3721
    %v4738 = vpack.c.b16 %v3730, %v3722
    %v4739 = vpack.c.b16 %v3731, %v3723
    %v4740 = vpack.c.b16 %v3740, %v3732
    %v4741 = vpack.c.b16 %v3741, %v3733
    %v4742 = vpack.c.b16 %v3742, %v3734
    %v4743 = vpack.c.b16 %v3743, %v3735
    %v4744 = vpack.c.b16 %v3744, %v3736
    %v4745 = vpack.c.b16 %v3745, %v3737
    %v4746 = vpack.c.b16 %v3746, %v3738
    %v4747 = vpack.c.b16 %v3747, %v3739
    %v4748 = vpack.c.b16 %v3756, %v3748
    %v4749 = vpack.c.b16 %v3757, %v3749
    %v4750 = vpack.c.b16 %v3758, %v3750
    %v4751 = vpack.c.b16 %v3759, %v3751
    %v4752 = vpack.c.b16 %v3760, %v3752
    %v4753 = vpack.c.b16 %v3761, %v3753
    %v4754 = vpack.c.b16 %v3762, %v3754
    %v4755 = vpack.c.b16 %v3763, %v3755
    %v4756 = vpack.c.b16 %v3772, %v3764
    %v4757 = vpack.c.b16 %v3773, %v3765
    %v4758 = vpack.c.b16 %v3774, %v3766
    %v4759 = vpack.c.b16 %v3775, %v3767
    %v4760 = vpack.c.b16 %v3776, %v3768
    %v4761 = vpack.c.b16 %v3777, %v3769
    %v4762 = vpack.c.b16 %v3778, %v3770
    %v4763 = vpack.c.b16 %v3779, %v3771
    %v4764 = vpack.c.b16 %v3788, %v3780
    %v4765 = vpack.c.b16 %v3789, %v3781
    %v4766 = vpack.c.b16 %v3790, %v3782
    %v4767 = vpack.c.b16 %v3791, %v3783
    %v4768 = vpack.c.b16 %v3792, %v3784
    %v4769 = vpack.c.b16 %v3793, %v3785
    %v4770 = vpack.c.b16 %v3794, %v3786
    %v4771 = vpack.c.b16 %v3795, %v3787
    %v4772 = vpack.c.b16 %v3804, %v3796
    %v4773 = vpack.c.b16 %v3805, %v3797
    %v4774 = vpack.c.b16 %v3806, %v3798
    %v4775 = vpack.c.b16 %v3807, %v3799
    %v4776 = vpack.c.b16 %v3808, %v3800
    %v4777 = vpack.c.b16 %v3809, %v3801
    %v4778 = vpack.c.b16 %v3810, %v3802
    %v4779 = vpack.c.b16 %v3811, %v3803
    %v4780 = vpack.c.b16 %v3820, %v3812
    %v4781 = vpack.c.b16 %v3821, %v3813
    %v4782 = vpack.c.b16 %v3822, %v3814
    %v4783 = vpack.c.b16 %v3823, %v3815
    %v4784 = vpack.c.b16 %v3824, %v3816
    %v4785 = vpack.c.b16 %v3825, %v3817
    %v4786 = vpack.c.b16 %v3826, %v3818
    %v4787 = vpack.c.b16 %v3827, %v3819
    %v4788 = vpack.c.b16 %v3836, %v3828
    %v4789 = vpack.c.b16 %v3837, %v3829
    %v4790 = vpack.c.b16 %v3838, %v3830
    %v4791 = vpack.c.b16 %v3839, %v3831
    %v4792 = vpack.c.b16 %v3840, %v3832
    %v4793 = vpack.c.b16 %v3841, %v3833
    %v4794 = vpack.c.b16 %v3842, %v3834
    %v4795 = vpack.c.b16 %v3843, %v3835
    %v4796 = vpack.c.b16 %v3852, %v3844
    %v4797 = vpack.c.b16 %v3853, %v3845
    %v4798 = vpack.c.b16 %v3854, %v3846
    %v4799 = vpack.c.b16 %v3855, %v3847
    %v4800 = vpack.c.b16 %v3856, %v3848
    %v4801 = vpack.c.b16 %v3857, %v3849
    %v4802 = vpack.c.b16 %v3858, %v3850
    %v4803 = vpack.c.b16 %v3859, %v3851
    %v4804 = vpack.c.b16 %v3868, %v3860
    %v4805 = vpack.c.b16 %v3869, %v3861
    %v4806 = vpack.c.b16 %v3870, %v3862
    %v4807 = vpack.c.b16 %v3871, %v3863
    %v4808 = vpack.c.b16 %v3872, %v3864
    %v4809 = vpack.c.b16 %v3873, %v3865
    %v4810 = vpack.c.b16 %v3874, %v3866
    %v4811 = vpack.c.b16 %v3875, %v3867
    %v4812 = vpack.c.b16 %v3876, %v3876
    %v4813 = vpack.c.b16 %v3877, %v3877
    %v4814 = vpack.c.b16 %v3878, %v3878
    %v4815 = vpack.c.b16 %v3879, %v3879
    %v4816 = vpack.c.b16 %v3880, %v3880
    %v4817 = vpack.c.b16 %v3881, %v3881
    %v4818 = vpack.c.b16 %v3882, %v3882
    %v4819 = vpack.c.b16 %v3883, %v3883
    %vm5748 = vcmask 588800
    %v5750 = vsel %vm5748, %v113, 0
    %vm5752 = vcmask 1043456
    %v5754 = vsel %vm5752, %v4812, 0
    %v5757 = vsel %vm5752, %v4813, 0
    %v5760 = vsel %vm5752, %v4814, 0
    %v5763 = vsel %vm5752, %v4815, 0
    %v5766 = vsel %vm5752, %v4816, 0
    %v5769 = vsel %vm5752, %v4817, 0
    %v5772 = vsel %vm5752, %v4818, 0
    %v5775 = vsel %vm5752, %v4819, 0
    %5777 = vmatprep.subr.bf16.mxu0 %v3941
    %5778 = vmatpush1.bf16.msra.mxu0 %v3940
    %5779 = vmatprep.subr.bf16.mxu0 %v3933
    %5780 = vmatpush1.bf16.msra.mxu0 %v3932
    %5781 = vmatprep.subr.bf16.mxu0 %v3925
    %5782 = vmatpush1.bf16.msra.mxu0 %v3924
    %5783 = vmatprep.subr.bf16.mxu0 %v3917
    %5784 = vmatpush1.bf16.msra.mxu0 %v3916
    %5785 = vmatprep.subr.bf16.mxu0 %v3909
    %5786 = vmatpush1.bf16.msra.mxu0 %v3908
    %5787 = vmatprep.subr.bf16.mxu0 %v3901
    %5788 = vmatpush1.bf16.msra.mxu0 %v3900
    %5789 = vmatprep.subr.bf16.mxu0 %v3893
    %5790 = vmatpush1.bf16.msra.mxu0 %v3892
    %5791 = vmatprep.subr.bf16.mxu0 %v3885
    %5792 = vmatpush1.bf16.msra.mxu0 %v3884
    %5793 = vmatprep.subr.bf16.mxu0 %v4005
    %5794 = vmatpush2.bf16.msra.mxu0 %v4004
    %5795 = vmatprep.subr.bf16.mxu0 %v3997
    %5796 = vmatpush2.bf16.msra.mxu0 %v3996
    %5797 = vmatprep.subr.bf16.mxu0 %v3989
    %5798 = vmatpush2.bf16.msra.mxu0 %v3988
    %5799 = vmatprep.subr.bf16.mxu0 %v3981
    %5800 = vmatpush2.bf16.msra.mxu0 %v3980
    %5801 = vmatprep.subr.bf16.mxu0 %v3973
    %5802 = vmatpush2.bf16.msra.mxu0 %v3972
    %5803 = vmatprep.subr.bf16.mxu0 %v3965
    %5804 = vmatpush2.bf16.msra.mxu0 %v3964
    %5805 = vmatprep.subr.bf16.mxu0 %v3957
    %5806 = vmatpush2.bf16.msra.mxu0 %v3956
    %5807 = vmatprep.subr.bf16.mxu0 %v3949
    %5808 = vmatpush2.bf16.msra.mxu0 %v3948
    %5809 = vmatprep.mubr.bf16.mxu0 %v100
    %5810 = vmatmul.mubr.bf16.gmra.mxu0 %v99
    %v5811 = vpop.f32.mrf.mxu0
    %v5812 = vadd.f32 %v1051, %v5811
    %v5813 = vpop.f32.mrf.mxu0
    %v5814 = vadd.f32 %v1055, %v5813
    %v5815 = vpop.f32.mrf.mxu0
    %v5816 = vpop.f32.mrf.mxu0
    %5817 = vdwg.mxu0
    %5818 = vmatprep.subr.bf16.mxu0 %v4069
    %5819 = vmatpush1.bf16.msra.mxu0 %v4068
    %5820 = vmatprep.subr.bf16.mxu0 %v4061
    %5821 = vmatpush1.bf16.msra.mxu0 %v4060
    %5822 = vmatprep.subr.bf16.mxu0 %v4053
    %5823 = vmatpush1.bf16.msra.mxu0 %v4052
    %5824 = vmatprep.subr.bf16.mxu0 %v4045
    %5825 = vmatpush1.bf16.msra.mxu0 %v4044
    %5826 = vmatprep.subr.bf16.mxu0 %v4037
    %5827 = vmatpush1.bf16.msra.mxu0 %v4036
    %5828 = vmatprep.subr.bf16.mxu0 %v4029
    %5829 = vmatpush1.bf16.msra.mxu0 %v4028
    %5830 = vmatprep.subr.bf16.mxu0 %v4021
    %5831 = vmatpush1.bf16.msra.mxu0 %v4020
    %5832 = vmatprep.subr.bf16.mxu0 %v4013
    %5833 = vmatpush1.bf16.msra.mxu0 %v4012
    %5834 = vmatprep.subr.bf16.mxu0 %v4133
    %5835 = vmatpush2.bf16.msra.mxu0 %v4132
    %5836 = vmatprep.subr.bf16.mxu0 %v4125
    %5837 = vmatpush2.bf16.msra.mxu0 %v4124
    %5838 = vmatprep.subr.bf16.mxu0 %v4117
    %5839 = vmatpush2.bf16.msra.mxu0 %v4116
    %5840 = vmatprep.subr.bf16.mxu0 %v4109
    %5841 = vmatpush2.bf16.msra.mxu0 %v4108
    %5842 = vmatprep.subr.bf16.mxu0 %v4101
    %5843 = vmatpush2.bf16.msra.mxu0 %v4100
    %5844 = vmatprep.subr.bf16.mxu0 %v4093
    %5845 = vmatpush2.bf16.msra.mxu0 %v4092
    %5846 = vmatprep.subr.bf16.mxu0 %v4085
    %5847 = vmatpush2.bf16.msra.mxu0 %v4084
    %5848 = vmatprep.subr.bf16.mxu0 %v4077
    %5849 = vmatpush2.bf16.msra.mxu0 %v4076
    %5850 = vmatprep.mubr.bf16.mxu0 %v102
    %5851 = vmatmul.mubr.bf16.gmra.mxu0 %v101
    %v5852 = vpop.f32.mrf.mxu0
    %v5853 = vadd.f32 %v5812, %v5852
    %v5854 = vpop.f32.mrf.mxu0
    %v5855 = vadd.f32 %v5814, %v5854
    %v5856 = vpop.f32.mrf.mxu0
    %v5857 = vpop.f32.mrf.mxu0
    %5858 = vdwg.mxu0
    %5859 = vmatprep.subr.bf16.mxu0 %v4197
    %5860 = vmatpush1.bf16.msra.mxu0 %v4196
    %5861 = vmatprep.subr.bf16.mxu0 %v4189
    %5862 = vmatpush1.bf16.msra.mxu0 %v4188
    %5863 = vmatprep.subr.bf16.mxu0 %v4181
    %5864 = vmatpush1.bf16.msra.mxu0 %v4180
    %5865 = vmatprep.subr.bf16.mxu0 %v4173
    %5866 = vmatpush1.bf16.msra.mxu0 %v4172
    %5867 = vmatprep.subr.bf16.mxu0 %v4165
    %5868 = vmatpush1.bf16.msra.mxu0 %v4164
    %5869 = vmatprep.subr.bf16.mxu0 %v4157
    %5870 = vmatpush1.bf16.msra.mxu0 %v4156
    %5871 = vmatprep.subr.bf16.mxu0 %v4149
    %5872 = vmatpush1.bf16.msra.mxu0 %v4148
    %5873 = vmatprep.subr.bf16.mxu0 %v4141
    %5874 = vmatpush1.bf16.msra.mxu0 %v4140
    %5875 = vmatprep.subr.bf16.mxu0 %v4261
    %5876 = vmatpush2.bf16.msra.mxu0 %v4260
    %5877 = vmatprep.subr.bf16.mxu0 %v4253
    %5878 = vmatpush2.bf16.msra.mxu0 %v4252
    %5879 = vmatprep.subr.bf16.mxu0 %v4245
    %5880 = vmatpush2.bf16.msra.mxu0 %v4244
    %5881 = vmatprep.subr.bf16.mxu0 %v4237
    %5882 = vmatpush2.bf16.msra.mxu0 %v4236
    %5883 = vmatprep.subr.bf16.mxu0 %v4229
    %5884 = vmatpush2.bf16.msra.mxu0 %v4228
    %5885 = vmatprep.subr.bf16.mxu0 %v4221
    %5886 = vmatpush2.bf16.msra.mxu0 %v4220
    %5887 = vmatprep.subr.bf16.mxu0 %v4213
    %5888 = vmatpush2.bf16.msra.mxu0 %v4212
    %5889 = vmatprep.subr.bf16.mxu0 %v4205
    %5890 = vmatpush2.bf16.msra.mxu0 %v4204
    %5891 = vmatprep.mubr.bf16.mxu0 %v104
    %5892 = vmatmul.mubr.bf16.gmra.mxu0 %v103
    %v5893 = vpop.f32.mrf.mxu0
    %v5894 = vadd.f32 %v5853, %v5893
    %v5895 = vpop.f32.mrf.mxu0
    %v5896 = vadd.f32 %v5855, %v5895
    %v5897 = vpop.f32.mrf.mxu0
    %v5898 = vpop.f32.mrf.mxu0
    %5899 = vdwg.mxu0
    %5900 = vmatprep.subr.bf16.mxu0 %v4325
    %5901 = vmatpush1.bf16.msra.mxu0 %v4324
    %5902 = vmatprep.subr.bf16.mxu0 %v4317
    %5903 = vmatpush1.bf16.msra.mxu0 %v4316
    %5904 = vmatprep.subr.bf16.mxu0 %v4309
    %5905 = vmatpush1.bf16.msra.mxu0 %v4308
    %5906 = vmatprep.subr.bf16.mxu0 %v4301
    %5907 = vmatpush1.bf16.msra.mxu0 %v4300
    %5908 = vmatprep.subr.bf16.mxu0 %v4293
    %5909 = vmatpush1.bf16.msra.mxu0 %v4292
    %5910 = vmatprep.subr.bf16.mxu0 %v4285
    %5911 = vmatpush1.bf16.msra.mxu0 %v4284
    %5912 = vmatprep.subr.bf16.mxu0 %v4277
    %5913 = vmatpush1.bf16.msra.mxu0 %v4276
    %5914 = vmatprep.subr.bf16.mxu0 %v4269
    %5915 = vmatpush1.bf16.msra.mxu0 %v4268
    %5916 = vmatprep.subr.bf16.mxu0 %v4389
    %5917 = vmatpush2.bf16.msra.mxu0 %v4388
    %5918 = vmatprep.subr.bf16.mxu0 %v4381
    %5919 = vmatpush2.bf16.msra.mxu0 %v4380
    %5920 = vmatprep.subr.bf16.mxu0 %v4373
    %5921 = vmatpush2.bf16.msra.mxu0 %v4372
    %5922 = vmatprep.subr.bf16.mxu0 %v4365
    %5923 = vmatpush2.bf16.msra.mxu0 %v4364
    %5924 = vmatprep.subr.bf16.mxu0 %v4357
    %5925 = vmatpush2.bf16.msra.mxu0 %v4356
    %5926 = vmatprep.subr.bf16.mxu0 %v4349
    %5927 = vmatpush2.bf16.msra.mxu0 %v4348
    %5928 = vmatprep.subr.bf16.mxu0 %v4341
    %5929 = vmatpush2.bf16.msra.mxu0 %v4340
    %5930 = vmatprep.subr.bf16.mxu0 %v4333
    %5931 = vmatpush2.bf16.msra.mxu0 %v4332
    %5932 = vmatprep.mubr.bf16.mxu0 %v106
    %5933 = vmatmul.mubr.bf16.gmra.mxu0 %v105
    %v5934 = vpop.f32.mrf.mxu0
    %v5935 = vadd.f32 %v5894, %v5934
    %v5936 = vpop.f32.mrf.mxu0
    %v5937 = vadd.f32 %v5896, %v5936
    %v5938 = vpop.f32.mrf.mxu0
    %v5939 = vpop.f32.mrf.mxu0
    %5940 = vdwg.mxu0
    %5941 = vmatprep.subr.bf16.mxu0 %v4453
    %5942 = vmatpush1.bf16.msra.mxu0 %v4452
    %5943 = vmatprep.subr.bf16.mxu0 %v4445
    %5944 = vmatpush1.bf16.msra.mxu0 %v4444
    %5945 = vmatprep.subr.bf16.mxu0 %v4437
    %5946 = vmatpush1.bf16.msra.mxu0 %v4436
    %5947 = vmatprep.subr.bf16.mxu0 %v4429
    %5948 = vmatpush1.bf16.msra.mxu0 %v4428
    %5949 = vmatprep.subr.bf16.mxu0 %v4421
    %5950 = vmatpush1.bf16.msra.mxu0 %v4420
    %5951 = vmatprep.subr.bf16.mxu0 %v4413
    %5952 = vmatpush1.bf16.msra.mxu0 %v4412
    %5953 = vmatprep.subr.bf16.mxu0 %v4405
    %5954 = vmatpush1.bf16.msra.mxu0 %v4404
    %5955 = vmatprep.subr.bf16.mxu0 %v4397
    %5956 = vmatpush1.bf16.msra.mxu0 %v4396
    %5957 = vmatprep.subr.bf16.mxu0 %v4517
    %5958 = vmatpush2.bf16.msra.mxu0 %v4516
    %5959 = vmatprep.subr.bf16.mxu0 %v4509
    %5960 = vmatpush2.bf16.msra.mxu0 %v4508
    %5961 = vmatprep.subr.bf16.mxu0 %v4501
    %5962 = vmatpush2.bf16.msra.mxu0 %v4500
    %5963 = vmatprep.subr.bf16.mxu0 %v4493
    %5964 = vmatpush2.bf16.msra.mxu0 %v4492
    %5965 = vmatprep.subr.bf16.mxu0 %v4485
    %5966 = vmatpush2.bf16.msra.mxu0 %v4484
    %5967 = vmatprep.subr.bf16.mxu0 %v4477
    %5968 = vmatpush2.bf16.msra.mxu0 %v4476
    %5969 = vmatprep.subr.bf16.mxu0 %v4469
    %5970 = vmatpush2.bf16.msra.mxu0 %v4468
    %5971 = vmatprep.subr.bf16.mxu0 %v4461
    %5972 = vmatpush2.bf16.msra.mxu0 %v4460
    %5973 = vmatprep.mubr.bf16.mxu0 %v108
    %5974 = vmatmul.mubr.bf16.gmra.mxu0 %v107
    %v5975 = vpop.f32.mrf.mxu0
    %v5976 = vadd.f32 %v5935, %v5975
    %v5977 = vpop.f32.mrf.mxu0
    %v5978 = vadd.f32 %v5937, %v5977
    %v5979 = vpop.f32.mrf.mxu0
    %v5980 = vpop.f32.mrf.mxu0
    %5981 = vdwg.mxu0
    %5982 = vmatprep.subr.bf16.mxu0 %v4581
    %5983 = vmatpush1.bf16.msra.mxu0 %v4580
    %5984 = vmatprep.subr.bf16.mxu0 %v4573
    %5985 = vmatpush1.bf16.msra.mxu0 %v4572
    %5986 = vmatprep.subr.bf16.mxu0 %v4565
    %5987 = vmatpush1.bf16.msra.mxu0 %v4564
    %5988 = vmatprep.subr.bf16.mxu0 %v4557
    %5989 = vmatpush1.bf16.msra.mxu0 %v4556
    %5990 = vmatprep.subr.bf16.mxu0 %v4549
    %5991 = vmatpush1.bf16.msra.mxu0 %v4548
    %5992 = vmatprep.subr.bf16.mxu0 %v4541
    %5993 = vmatpush1.bf16.msra.mxu0 %v4540
    %5994 = vmatprep.subr.bf16.mxu0 %v4533
    %5995 = vmatpush1.bf16.msra.mxu0 %v4532
    %5996 = vmatprep.subr.bf16.mxu0 %v4525
    %5997 = vmatpush1.bf16.msra.mxu0 %v4524
    %5998 = vmatprep.subr.bf16.mxu0 %v4645
    %5999 = vmatpush2.bf16.msra.mxu0 %v4644
    %6000 = vmatprep.subr.bf16.mxu0 %v4637
    %6001 = vmatpush2.bf16.msra.mxu0 %v4636
    %6002 = vmatprep.subr.bf16.mxu0 %v4629
    %6003 = vmatpush2.bf16.msra.mxu0 %v4628
    %6004 = vmatprep.subr.bf16.mxu0 %v4621
    %6005 = vmatpush2.bf16.msra.mxu0 %v4620
    %6006 = vmatprep.subr.bf16.mxu0 %v4613
    %6007 = vmatpush2.bf16.msra.mxu0 %v4612
    %6008 = vmatprep.subr.bf16.mxu0 %v4605
    %6009 = vmatpush2.bf16.msra.mxu0 %v4604
    %6010 = vmatprep.subr.bf16.mxu0 %v4597
    %6011 = vmatpush2.bf16.msra.mxu0 %v4596
    %6012 = vmatprep.subr.bf16.mxu0 %v4589
    %6013 = vmatpush2.bf16.msra.mxu0 %v4588
    %6014 = vmatprep.mubr.bf16.mxu0 %v110
    %6015 = vmatmul.mubr.bf16.gmra.mxu0 %v109
    %v6016 = vpop.f32.mrf.mxu0
    %v6017 = vadd.f32 %v5976, %v6016
    %v6018 = vpop.f32.mrf.mxu0
    %v6019 = vadd.f32 %v5978, %v6018
    %v6020 = vpop.f32.mrf.mxu0
    %v6021 = vpop.f32.mrf.mxu0
    %6022 = vdwg.mxu0
    %6023 = vmatprep.subr.bf16.mxu0 %v4709
    %6024 = vmatpush1.bf16.msra.mxu0 %v4708
    %6025 = vmatprep.subr.bf16.mxu0 %v4701
    %6026 = vmatpush1.bf16.msra.mxu0 %v4700
    %6027 = vmatprep.subr.bf16.mxu0 %v4693
    %6028 = vmatpush1.bf16.msra.mxu0 %v4692
    %6029 = vmatprep.subr.bf16.mxu0 %v4685
    %6030 = vmatpush1.bf16.msra.mxu0 %v4684
    %6031 = vmatprep.subr.bf16.mxu0 %v4677
    %6032 = vmatpush1.bf16.msra.mxu0 %v4676
    %6033 = vmatprep.subr.bf16.mxu0 %v4669
    %6034 = vmatpush1.bf16.msra.mxu0 %v4668
    %6035 = vmatprep.subr.bf16.mxu0 %v4661
    %6036 = vmatpush1.bf16.msra.mxu0 %v4660
    %6037 = vmatprep.subr.bf16.mxu0 %v4653
    %6038 = vmatpush1.bf16.msra.mxu0 %v4652
    %6039 = vmatprep.subr.bf16.mxu0 %v4773
    %6040 = vmatpush2.bf16.msra.mxu0 %v4772
    %6041 = vmatprep.subr.bf16.mxu0 %v4765
    %6042 = vmatpush2.bf16.msra.mxu0 %v4764
    %6043 = vmatprep.subr.bf16.mxu0 %v4757
    %6044 = vmatpush2.bf16.msra.mxu0 %v4756
    %6045 = vmatprep.subr.bf16.mxu0 %v4749
    %6046 = vmatpush2.bf16.msra.mxu0 %v4748
    %6047 = vmatprep.subr.bf16.mxu0 %v4741
    %6048 = vmatpush2.bf16.msra.mxu0 %v4740
    %6049 = vmatprep.subr.bf16.mxu0 %v4733
    %6050 = vmatpush2.bf16.msra.mxu0 %v4732
    %6051 = vmatprep.subr.bf16.mxu0 %v4725
    %6052 = vmatpush2.bf16.msra.mxu0 %v4724
    %6053 = vmatprep.subr.bf16.mxu0 %v4717
    %6054 = vmatpush2.bf16.msra.mxu0 %v4716
    %6055 = vmatprep.mubr.bf16.mxu0 %v112
    %6056 = vmatmul.mubr.bf16.gmra.mxu0 %v111
    %v6057 = vpop.f32.mrf.mxu0
    %v6058 = vadd.f32 %v6017, %v6057
    %v6059 = vpop.f32.mrf.mxu0
    %v6060 = vadd.f32 %v6019, %v6059
    %v6061 = vpop.f32.mrf.mxu0
    %v6062 = vpop.f32.mrf.mxu0
    %6063 = vdwg.mxu0
    %6064 = vmatprep.subr.bf16.mxu0 0
    %6065 = vmatpush1.bf16.msra.mxu0 0
    %6066 = vmatprep.subr.bf16.mxu0 0
    %6067 = vmatpush1.bf16.msra.mxu0 0
    %6068 = vmatprep.subr.bf16.mxu0 0
    %6069 = vmatpush1.bf16.msra.mxu0 0
    %6070 = vmatprep.subr.bf16.mxu0 %v5757
    %6071 = vmatpush1.bf16.msra.mxu0 %v5754
    %6072 = vmatprep.subr.bf16.mxu0 %v4805
    %6073 = vmatpush1.bf16.msra.mxu0 %v4804
    %6074 = vmatprep.subr.bf16.mxu0 %v4797
    %6075 = vmatpush1.bf16.msra.mxu0 %v4796
    %6076 = vmatprep.subr.bf16.mxu0 %v4789
    %6077 = vmatpush1.bf16.msra.mxu0 %v4788
    %6078 = vmatprep.subr.bf16.mxu0 %v4781
    %6079 = vmatpush1.bf16.msra.mxu0 %v4780
    %6080 = vmatprep.subr.bf16.mxu0 0
    %6081 = vmatpush2.bf16.msra.mxu0 0
    %6082 = vmatprep.subr.bf16.mxu0 0
    %6083 = vmatpush2.bf16.msra.mxu0 0
    %6084 = vmatprep.subr.bf16.mxu0 0
    %6085 = vmatpush2.bf16.msra.mxu0 0
    %6086 = vmatprep.subr.bf16.mxu0 0
    %6087 = vmatpush2.bf16.msra.mxu0 0
    %6088 = vmatprep.subr.bf16.mxu0 0
    %6089 = vmatpush2.bf16.msra.mxu0 0
    %6090 = vmatprep.subr.bf16.mxu0 0
    %6091 = vmatpush2.bf16.msra.mxu0 0
    %6092 = vmatprep.subr.bf16.mxu0 0
    %6093 = vmatpush2.bf16.msra.mxu0 0
    %6094 = vmatprep.subr.bf16.mxu0 0
    %6095 = vmatpush2.bf16.msra.mxu0 0
    %6096 = vmatprep.mubr.bf16.mxu0 0
    %6097 = vmatmul.mubr.bf16.gmra.mxu0 %v5750
    %v6098 = vpop.f32.mrf.mxu0
    %v6099 = vadd.f32 %v6058, %v6098
    %v6100 = vpop.f32.mrf.mxu0
    %v6101 = vadd.f32 %v6060, %v6100
    %v6102 = vpop.f32.mrf.mxu0
    %v6103 = vpop.f32.mrf.mxu0
    %6104 = vdwg.mxu0
    %6105 = vmatprep.subr.bf16.mxu0 %v3943
    %6106 = vmatpush1.bf16.msra.mxu0 %v3942
    %6107 = vmatprep.subr.bf16.mxu0 %v3935
    %6108 = vmatpush1.bf16.msra.mxu0 %v3934
    %6109 = vmatprep.subr.bf16.mxu0 %v3927
    %6110 = vmatpush1.bf16.msra.mxu0 %v3926
    %6111 = vmatprep.subr.bf16.mxu0 %v3919
    %6112 = vmatpush1.bf16.msra.mxu0 %v3918
    %6113 = vmatprep.subr.bf16.mxu0 %v3911
    %6114 = vmatpush1.bf16.msra.mxu0 %v3910
    %6115 = vmatprep.subr.bf16.mxu0 %v3903
    %6116 = vmatpush1.bf16.msra.mxu0 %v3902
    %6117 = vmatprep.subr.bf16.mxu0 %v3895
    %6118 = vmatpush1.bf16.msra.mxu0 %v3894
    %6119 = vmatprep.subr.bf16.mxu0 %v3887
    %6120 = vmatpush1.bf16.msra.mxu0 %v3886
    %6121 = vmatprep.subr.bf16.mxu0 %v4007
    %6122 = vmatpush2.bf16.msra.mxu0 %v4006
    %6123 = vmatprep.subr.bf16.mxu0 %v3999
    %6124 = vmatpush2.bf16.msra.mxu0 %v3998
    %6125 = vmatprep.subr.bf16.mxu0 %v3991
    %6126 = vmatpush2.bf16.msra.mxu0 %v3990
    %6127 = vmatprep.subr.bf16.mxu0 %v3983
    %6128 = vmatpush2.bf16.msra.mxu0 %v3982
    %6129 = vmatprep.subr.bf16.mxu0 %v3975
    %6130 = vmatpush2.bf16.msra.mxu0 %v3974
    %6131 = vmatprep.subr.bf16.mxu0 %v3967
    %6132 = vmatpush2.bf16.msra.mxu0 %v3966
    %6133 = vmatprep.subr.bf16.mxu0 %v3959
    %6134 = vmatpush2.bf16.msra.mxu0 %v3958
    %6135 = vmatprep.subr.bf16.mxu0 %v3951
    %6136 = vmatpush2.bf16.msra.mxu0 %v3950
    %6137 = vmatprep.mubr.bf16.mxu0 %v100
    %6138 = vmatmul.mubr.bf16.gmra.mxu0 %v99
    %v6139 = vpop.f32.mrf.mxu0
    %v6140 = vadd.f32 %v1059, %v6139
    %v6141 = vpop.f32.mrf.mxu0
    %v6142 = vadd.f32 %v1063, %v6141
    %v6143 = vpop.f32.mrf.mxu0
    %v6144 = vpop.f32.mrf.mxu0
    %6145 = vdwg.mxu0
    %6146 = vmatprep.subr.bf16.mxu0 %v4071
    %6147 = vmatpush1.bf16.msra.mxu0 %v4070
    %6148 = vmatprep.subr.bf16.mxu0 %v4063
    %6149 = vmatpush1.bf16.msra.mxu0 %v4062
    %6150 = vmatprep.subr.bf16.mxu0 %v4055
    %6151 = vmatpush1.bf16.msra.mxu0 %v4054
    %6152 = vmatprep.subr.bf16.mxu0 %v4047
    %6153 = vmatpush1.bf16.msra.mxu0 %v4046
    %6154 = vmatprep.subr.bf16.mxu0 %v4039
    %6155 = vmatpush1.bf16.msra.mxu0 %v4038
    %6156 = vmatprep.subr.bf16.mxu0 %v4031
    %6157 = vmatpush1.bf16.msra.mxu0 %v4030
    %6158 = vmatprep.subr.bf16.mxu0 %v4023
    %6159 = vmatpush1.bf16.msra.mxu0 %v4022
    %6160 = vmatprep.subr.bf16.mxu0 %v4015
    %6161 = vmatpush1.bf16.msra.mxu0 %v4014
    %6162 = vmatprep.subr.bf16.mxu0 %v4135
    %6163 = vmatpush2.bf16.msra.mxu0 %v4134
    %6164 = vmatprep.subr.bf16.mxu0 %v4127
    %6165 = vmatpush2.bf16.msra.mxu0 %v4126
    %6166 = vmatprep.subr.bf16.mxu0 %v4119
    %6167 = vmatpush2.bf16.msra.mxu0 %v4118
    %6168 = vmatprep.subr.bf16.mxu0 %v4111
    %6169 = vmatpush2.bf16.msra.mxu0 %v4110
    %6170 = vmatprep.subr.bf16.mxu0 %v4103
    %6171 = vmatpush2.bf16.msra.mxu0 %v4102
    %6172 = vmatprep.subr.bf16.mxu0 %v4095
    %6173 = vmatpush2.bf16.msra.mxu0 %v4094
    %6174 = vmatprep.subr.bf16.mxu0 %v4087
    %6175 = vmatpush2.bf16.msra.mxu0 %v4086
    %6176 = vmatprep.subr.bf16.mxu0 %v4079
    %6177 = vmatpush2.bf16.msra.mxu0 %v4078
    %6178 = vmatprep.mubr.bf16.mxu0 %v102
    %6179 = vmatmul.mubr.bf16.gmra.mxu0 %v101
    %v6180 = vpop.f32.mrf.mxu0
    %v6181 = vadd.f32 %v6140, %v6180
    %v6182 = vpop.f32.mrf.mxu0
    %v6183 = vadd.f32 %v6142, %v6182
    %v6184 = vpop.f32.mrf.mxu0
    %v6185 = vpop.f32.mrf.mxu0
    %6186 = vdwg.mxu0
    %6187 = vmatprep.subr.bf16.mxu0 %v4199
    %6188 = vmatpush1.bf16.msra.mxu0 %v4198
    %6189 = vmatprep.subr.bf16.mxu0 %v4191
    %6190 = vmatpush1.bf16.msra.mxu0 %v4190
    %6191 = vmatprep.subr.bf16.mxu0 %v4183
    %6192 = vmatpush1.bf16.msra.mxu0 %v4182
    %6193 = vmatprep.subr.bf16.mxu0 %v4175
    %6194 = vmatpush1.bf16.msra.mxu0 %v4174
    %6195 = vmatprep.subr.bf16.mxu0 %v4167
    %6196 = vmatpush1.bf16.msra.mxu0 %v4166
    %6197 = vmatprep.subr.bf16.mxu0 %v4159
    %6198 = vmatpush1.bf16.msra.mxu0 %v4158
    %6199 = vmatprep.subr.bf16.mxu0 %v4151
    %6200 = vmatpush1.bf16.msra.mxu0 %v4150
    %6201 = vmatprep.subr.bf16.mxu0 %v4143
    %6202 = vmatpush1.bf16.msra.mxu0 %v4142
    %6203 = vmatprep.subr.bf16.mxu0 %v4263
    %6204 = vmatpush2.bf16.msra.mxu0 %v4262
    %6205 = vmatprep.subr.bf16.mxu0 %v4255
    %6206 = vmatpush2.bf16.msra.mxu0 %v4254
    %6207 = vmatprep.subr.bf16.mxu0 %v4247
    %6208 = vmatpush2.bf16.msra.mxu0 %v4246
    %6209 = vmatprep.subr.bf16.mxu0 %v4239
    %6210 = vmatpush2.bf16.msra.mxu0 %v4238
    %6211 = vmatprep.subr.bf16.mxu0 %v4231
    %6212 = vmatpush2.bf16.msra.mxu0 %v4230
    %6213 = vmatprep.subr.bf16.mxu0 %v4223
    %6214 = vmatpush2.bf16.msra.mxu0 %v4222
    %6215 = vmatprep.subr.bf16.mxu0 %v4215
    %6216 = vmatpush2.bf16.msra.mxu0 %v4214
    %6217 = vmatprep.subr.bf16.mxu0 %v4207
    %6218 = vmatpush2.bf16.msra.mxu0 %v4206
    %6219 = vmatprep.mubr.bf16.mxu0 %v104
    %6220 = vmatmul.mubr.bf16.gmra.mxu0 %v103
    %v6221 = vpop.f32.mrf.mxu0
    %v6222 = vadd.f32 %v6181, %v6221
    %v6223 = vpop.f32.mrf.mxu0
    %v6224 = vadd.f32 %v6183, %v6223
    %v6225 = vpop.f32.mrf.mxu0
    %v6226 = vpop.f32.mrf.mxu0
    %6227 = vdwg.mxu0
    %6228 = vmatprep.subr.bf16.mxu0 %v4327
    %6229 = vmatpush1.bf16.msra.mxu0 %v4326
    %6230 = vmatprep.subr.bf16.mxu0 %v4319
    %6231 = vmatpush1.bf16.msra.mxu0 %v4318
    %6232 = vmatprep.subr.bf16.mxu0 %v4311
    %6233 = vmatpush1.bf16.msra.mxu0 %v4310
    %6234 = vmatprep.subr.bf16.mxu0 %v4303
    %6235 = vmatpush1.bf16.msra.mxu0 %v4302
    %6236 = vmatprep.subr.bf16.mxu0 %v4295
    %6237 = vmatpush1.bf16.msra.mxu0 %v4294
    %6238 = vmatprep.subr.bf16.mxu0 %v4287
    %6239 = vmatpush1.bf16.msra.mxu0 %v4286
    %6240 = vmatprep.subr.bf16.mxu0 %v4279
    %6241 = vmatpush1.bf16.msra.mxu0 %v4278
    %6242 = vmatprep.subr.bf16.mxu0 %v4271
    %6243 = vmatpush1.bf16.msra.mxu0 %v4270
    %6244 = vmatprep.subr.bf16.mxu0 %v4391
    %6245 = vmatpush2.bf16.msra.mxu0 %v4390
    %6246 = vmatprep.subr.bf16.mxu0 %v4383
    %6247 = vmatpush2.bf16.msra.mxu0 %v4382
    %6248 = vmatprep.subr.bf16.mxu0 %v4375
    %6249 = vmatpush2.bf16.msra.mxu0 %v4374
    %6250 = vmatprep.subr.bf16.mxu0 %v4367
    %6251 = vmatpush2.bf16.msra.mxu0 %v4366
    %6252 = vmatprep.subr.bf16.mxu0 %v4359
    %6253 = vmatpush2.bf16.msra.mxu0 %v4358
    %6254 = vmatprep.subr.bf16.mxu0 %v4351
    %6255 = vmatpush2.bf16.msra.mxu0 %v4350
    %6256 = vmatprep.subr.bf16.mxu0 %v4343
    %6257 = vmatpush2.bf16.msra.mxu0 %v4342
    %6258 = vmatprep.subr.bf16.mxu0 %v4335
    %6259 = vmatpush2.bf16.msra.mxu0 %v4334
    %6260 = vmatprep.mubr.bf16.mxu0 %v106
    %6261 = vmatmul.mubr.bf16.gmra.mxu0 %v105
    %v6262 = vpop.f32.mrf.mxu0
    %v6263 = vadd.f32 %v6222, %v6262
    %v6264 = vpop.f32.mrf.mxu0
    %v6265 = vadd.f32 %v6224, %v6264
    %v6266 = vpop.f32.mrf.mxu0
    %v6267 = vpop.f32.mrf.mxu0
    %6268 = vdwg.mxu0
    %6269 = vmatprep.subr.bf16.mxu0 %v4455
    %6270 = vmatpush1.bf16.msra.mxu0 %v4454
    %6271 = vmatprep.subr.bf16.mxu0 %v4447
    %6272 = vmatpush1.bf16.msra.mxu0 %v4446
    %6273 = vmatprep.subr.bf16.mxu0 %v4439
    %6274 = vmatpush1.bf16.msra.mxu0 %v4438
    %6275 = vmatprep.subr.bf16.mxu0 %v4431
    %6276 = vmatpush1.bf16.msra.mxu0 %v4430
    %6277 = vmatprep.subr.bf16.mxu0 %v4423
    %6278 = vmatpush1.bf16.msra.mxu0 %v4422
    %6279 = vmatprep.subr.bf16.mxu0 %v4415
    %6280 = vmatpush1.bf16.msra.mxu0 %v4414
    %6281 = vmatprep.subr.bf16.mxu0 %v4407
    %6282 = vmatpush1.bf16.msra.mxu0 %v4406
    %6283 = vmatprep.subr.bf16.mxu0 %v4399
    %6284 = vmatpush1.bf16.msra.mxu0 %v4398
    %6285 = vmatprep.subr.bf16.mxu0 %v4519
    %6286 = vmatpush2.bf16.msra.mxu0 %v4518
    %6287 = vmatprep.subr.bf16.mxu0 %v4511
    %6288 = vmatpush2.bf16.msra.mxu0 %v4510
    %6289 = vmatprep.subr.bf16.mxu0 %v4503
    %6290 = vmatpush2.bf16.msra.mxu0 %v4502
    %6291 = vmatprep.subr.bf16.mxu0 %v4495
    %6292 = vmatpush2.bf16.msra.mxu0 %v4494
    %6293 = vmatprep.subr.bf16.mxu0 %v4487
    %6294 = vmatpush2.bf16.msra.mxu0 %v4486
    %6295 = vmatprep.subr.bf16.mxu0 %v4479
    %6296 = vmatpush2.bf16.msra.mxu0 %v4478
    %6297 = vmatprep.subr.bf16.mxu0 %v4471
    %6298 = vmatpush2.bf16.msra.mxu0 %v4470
    %6299 = vmatprep.subr.bf16.mxu0 %v4463
    %6300 = vmatpush2.bf16.msra.mxu0 %v4462
    %6301 = vmatprep.mubr.bf16.mxu0 %v108
    %6302 = vmatmul.mubr.bf16.gmra.mxu0 %v107
    %v6303 = vpop.f32.mrf.mxu0
    %v6304 = vadd.f32 %v6263, %v6303
    %v6305 = vpop.f32.mrf.mxu0
    %v6306 = vadd.f32 %v6265, %v6305
    %v6307 = vpop.f32.mrf.mxu0
    %v6308 = vpop.f32.mrf.mxu0
    %6309 = vdwg.mxu0
    %6310 = vmatprep.subr.bf16.mxu0 %v4583
    %6311 = vmatpush1.bf16.msra.mxu0 %v4582
    %6312 = vmatprep.subr.bf16.mxu0 %v4575
    %6313 = vmatpush1.bf16.msra.mxu0 %v4574
    %6314 = vmatprep.subr.bf16.mxu0 %v4567
    %6315 = vmatpush1.bf16.msra.mxu0 %v4566
    %6316 = vmatprep.subr.bf16.mxu0 %v4559
    %6317 = vmatpush1.bf16.msra.mxu0 %v4558
    %6318 = vmatprep.subr.bf16.mxu0 %v4551
    %6319 = vmatpush1.bf16.msra.mxu0 %v4550
    %6320 = vmatprep.subr.bf16.mxu0 %v4543
    %6321 = vmatpush1.bf16.msra.mxu0 %v4542
    %6322 = vmatprep.subr.bf16.mxu0 %v4535
    %6323 = vmatpush1.bf16.msra.mxu0 %v4534
    %6324 = vmatprep.subr.bf16.mxu0 %v4527
    %6325 = vmatpush1.bf16.msra.mxu0 %v4526
    %6326 = vmatprep.subr.bf16.mxu0 %v4647
    %6327 = vmatpush2.bf16.msra.mxu0 %v4646
    %6328 = vmatprep.subr.bf16.mxu0 %v4639
    %6329 = vmatpush2.bf16.msra.mxu0 %v4638
    %6330 = vmatprep.subr.bf16.mxu0 %v4631
    %6331 = vmatpush2.bf16.msra.mxu0 %v4630
    %6332 = vmatprep.subr.bf16.mxu0 %v4623
    %6333 = vmatpush2.bf16.msra.mxu0 %v4622
    %6334 = vmatprep.subr.bf16.mxu0 %v4615
    %6335 = vmatpush2.bf16.msra.mxu0 %v4614
    %6336 = vmatprep.subr.bf16.mxu0 %v4607
    %6337 = vmatpush2.bf16.msra.mxu0 %v4606
    %6338 = vmatprep.subr.bf16.mxu0 %v4599
    %6339 = vmatpush2.bf16.msra.mxu0 %v4598
    %6340 = vmatprep.subr.bf16.mxu0 %v4591
    %6341 = vmatpush2.bf16.msra.mxu0 %v4590
    %6342 = vmatprep.mubr.bf16.mxu0 %v110
    %6343 = vmatmul.mubr.bf16.gmra.mxu0 %v109
    %v6344 = vpop.f32.mrf.mxu0
    %v6345 = vadd.f32 %v6304, %v6344
    %v6346 = vpop.f32.mrf.mxu0
    %v6347 = vadd.f32 %v6306, %v6346
    %v6348 = vpop.f32.mrf.mxu0
    %v6349 = vpop.f32.mrf.mxu0
    %6350 = vdwg.mxu0
    %6351 = vmatprep.subr.bf16.mxu0 %v4711
    %6352 = vmatpush1.bf16.msra.mxu0 %v4710
    %6353 = vmatprep.subr.bf16.mxu0 %v4703
    %6354 = vmatpush1.bf16.msra.mxu0 %v4702
    %6355 = vmatprep.subr.bf16.mxu0 %v4695
    %6356 = vmatpush1.bf16.msra.mxu0 %v4694
    %6357 = vmatprep.subr.bf16.mxu0 %v4687
    %6358 = vmatpush1.bf16.msra.mxu0 %v4686
    %6359 = vmatprep.subr.bf16.mxu0 %v4679
    %6360 = vmatpush1.bf16.msra.mxu0 %v4678
    %6361 = vmatprep.subr.bf16.mxu0 %v4671
    %6362 = vmatpush1.bf16.msra.mxu0 %v4670
    %6363 = vmatprep.subr.bf16.mxu0 %v4663
    %6364 = vmatpush1.bf16.msra.mxu0 %v4662
    %6365 = vmatprep.subr.bf16.mxu0 %v4655
    %6366 = vmatpush1.bf16.msra.mxu0 %v4654
    %6367 = vmatprep.subr.bf16.mxu0 %v4775
    %6368 = vmatpush2.bf16.msra.mxu0 %v4774
    %6369 = vmatprep.subr.bf16.mxu0 %v4767
    %6370 = vmatpush2.bf16.msra.mxu0 %v4766
    %6371 = vmatprep.subr.bf16.mxu0 %v4759
    %6372 = vmatpush2.bf16.msra.mxu0 %v4758
    %6373 = vmatprep.subr.bf16.mxu0 %v4751
    %6374 = vmatpush2.bf16.msra.mxu0 %v4750
    %6375 = vmatprep.subr.bf16.mxu0 %v4743
    %6376 = vmatpush2.bf16.msra.mxu0 %v4742
    %6377 = vmatprep.subr.bf16.mxu0 %v4735
    %6378 = vmatpush2.bf16.msra.mxu0 %v4734
    %6379 = vmatprep.subr.bf16.mxu0 %v4727
    %6380 = vmatpush2.bf16.msra.mxu0 %v4726
    %6381 = vmatprep.subr.bf16.mxu0 %v4719
    %6382 = vmatpush2.bf16.msra.mxu0 %v4718
    %6383 = vmatprep.mubr.bf16.mxu0 %v112
    %6384 = vmatmul.mubr.bf16.gmra.mxu0 %v111
    %v6385 = vpop.f32.mrf.mxu0
    %v6386 = vadd.f32 %v6345, %v6385
    %v6387 = vpop.f32.mrf.mxu0
    %v6388 = vadd.f32 %v6347, %v6387
    %v6389 = vpop.f32.mrf.mxu0
    %v6390 = vpop.f32.mrf.mxu0
    %6391 = vdwg.mxu0
    %6392 = vmatprep.subr.bf16.mxu0 0
    %6393 = vmatpush1.bf16.msra.mxu0 0
    %6394 = vmatprep.subr.bf16.mxu0 0
    %6395 = vmatpush1.bf16.msra.mxu0 0
    %6396 = vmatprep.subr.bf16.mxu0 0
    %6397 = vmatpush1.bf16.msra.mxu0 0
    %6398 = vmatprep.subr.bf16.mxu0 %v5763
    %6399 = vmatpush1.bf16.msra.mxu0 %v5760
    %6400 = vmatprep.subr.bf16.mxu0 %v4807
    %6401 = vmatpush1.bf16.msra.mxu0 %v4806
    %6402 = vmatprep.subr.bf16.mxu0 %v4799
    %6403 = vmatpush1.bf16.msra.mxu0 %v4798
    %6404 = vmatprep.subr.bf16.mxu0 %v4791
    %6405 = vmatpush1.bf16.msra.mxu0 %v4790
    %6406 = vmatprep.subr.bf16.mxu0 %v4783
    %6407 = vmatpush1.bf16.msra.mxu0 %v4782
    %6408 = vmatprep.subr.bf16.mxu0 0
    %6409 = vmatpush2.bf16.msra.mxu0 0
    %6410 = vmatprep.subr.bf16.mxu0 0
    %6411 = vmatpush2.bf16.msra.mxu0 0
    %6412 = vmatprep.subr.bf16.mxu0 0
    %6413 = vmatpush2.bf16.msra.mxu0 0
    %6414 = vmatprep.subr.bf16.mxu0 0
    %6415 = vmatpush2.bf16.msra.mxu0 0
    %6416 = vmatprep.subr.bf16.mxu0 0
    %6417 = vmatpush2.bf16.msra.mxu0 0
    %6418 = vmatprep.subr.bf16.mxu0 0
    %6419 = vmatpush2.bf16.msra.mxu0 0
    %6420 = vmatprep.subr.bf16.mxu0 0
    %6421 = vmatpush2.bf16.msra.mxu0 0
    %6422 = vmatprep.subr.bf16.mxu0 0
    %6423 = vmatpush2.bf16.msra.mxu0 0
    %6424 = vmatprep.mubr.bf16.mxu0 0
    %6425 = vmatmul.mubr.bf16.gmra.mxu0 %v5750
    %v6426 = vpop.f32.mrf.mxu0
    %v6427 = vadd.f32 %v6386, %v6426
    %v6428 = vpop.f32.mrf.mxu0
    %v6429 = vadd.f32 %v6388, %v6428
    %v6430 = vpop.f32.mrf.mxu0
    %v6431 = vpop.f32.mrf.mxu0
    %6432 = vdwg.mxu0
    %6433 = vmatprep.subr.bf16.mxu0 %v3945
    %6434 = vmatpush1.bf16.msra.mxu0 %v3944
    %6435 = vmatprep.subr.bf16.mxu0 %v3937
    %6436 = vmatpush1.bf16.msra.mxu0 %v3936
    %6437 = vmatprep.subr.bf16.mxu0 %v3929
    %6438 = vmatpush1.bf16.msra.mxu0 %v3928
    %6439 = vmatprep.subr.bf16.mxu0 %v3921
    %6440 = vmatpush1.bf16.msra.mxu0 %v3920
    %6441 = vmatprep.subr.bf16.mxu0 %v3913
    %6442 = vmatpush1.bf16.msra.mxu0 %v3912
    %6443 = vmatprep.subr.bf16.mxu0 %v3905
    %6444 = vmatpush1.bf16.msra.mxu0 %v3904
    %6445 = vmatprep.subr.bf16.mxu0 %v3897
    %6446 = vmatpush1.bf16.msra.mxu0 %v3896
    %6447 = vmatprep.subr.bf16.mxu0 %v3889
    %6448 = vmatpush1.bf16.msra.mxu0 %v3888
    %6449 = vmatprep.subr.bf16.mxu0 %v4009
    %6450 = vmatpush2.bf16.msra.mxu0 %v4008
    %6451 = vmatprep.subr.bf16.mxu0 %v4001
    %6452 = vmatpush2.bf16.msra.mxu0 %v4000
    %6453 = vmatprep.subr.bf16.mxu0 %v3993
    %6454 = vmatpush2.bf16.msra.mxu0 %v3992
    %6455 = vmatprep.subr.bf16.mxu0 %v3985
    %6456 = vmatpush2.bf16.msra.mxu0 %v3984
    %6457 = vmatprep.subr.bf16.mxu0 %v3977
    %6458 = vmatpush2.bf16.msra.mxu0 %v3976
    %6459 = vmatprep.subr.bf16.mxu0 %v3969
    %6460 = vmatpush2.bf16.msra.mxu0 %v3968
    %6461 = vmatprep.subr.bf16.mxu0 %v3961
    %6462 = vmatpush2.bf16.msra.mxu0 %v3960
    %6463 = vmatprep.subr.bf16.mxu0 %v3953
    %6464 = vmatpush2.bf16.msra.mxu0 %v3952
    %6465 = vmatprep.mubr.bf16.mxu0 %v100
    %6466 = vmatmul.mubr.bf16.gmra.mxu0 %v99
    %v6467 = vpop.f32.mrf.mxu0
    %v6468 = vadd.f32 %v1067, %v6467
    %v6469 = vpop.f32.mrf.mxu0
    %v6470 = vadd.f32 %v1071, %v6469
    %v6471 = vpop.f32.mrf.mxu0
    %v6472 = vpop.f32.mrf.mxu0
    %6473 = vdwg.mxu0
    %6474 = vmatprep.subr.bf16.mxu0 %v4073
    %6475 = vmatpush1.bf16.msra.mxu0 %v4072
    %6476 = vmatprep.subr.bf16.mxu0 %v4065
    %6477 = vmatpush1.bf16.msra.mxu0 %v4064
    %6478 = vmatprep.subr.bf16.mxu0 %v4057
    %6479 = vmatpush1.bf16.msra.mxu0 %v4056
    %6480 = vmatprep.subr.bf16.mxu0 %v4049
    %6481 = vmatpush1.bf16.msra.mxu0 %v4048
    %6482 = vmatprep.subr.bf16.mxu0 %v4041
    %6483 = vmatpush1.bf16.msra.mxu0 %v4040
    %6484 = vmatprep.subr.bf16.mxu0 %v4033
    %6485 = vmatpush1.bf16.msra.mxu0 %v4032
    %6486 = vmatprep.subr.bf16.mxu0 %v4025
    %6487 = vmatpush1.bf16.msra.mxu0 %v4024
    %6488 = vmatprep.subr.bf16.mxu0 %v4017
    %6489 = vmatpush1.bf16.msra.mxu0 %v4016
    %6490 = vmatprep.subr.bf16.mxu0 %v4137
    %6491 = vmatpush2.bf16.msra.mxu0 %v4136
    %6492 = vmatprep.subr.bf16.mxu0 %v4129
    %6493 = vmatpush2.bf16.msra.mxu0 %v4128
    %6494 = vmatprep.subr.bf16.mxu0 %v4121
    %6495 = vmatpush2.bf16.msra.mxu0 %v4120
    %6496 = vmatprep.subr.bf16.mxu0 %v4113
    %6497 = vmatpush2.bf16.msra.mxu0 %v4112
    %6498 = vmatprep.subr.bf16.mxu0 %v4105
    %6499 = vmatpush2.bf16.msra.mxu0 %v4104
    %6500 = vmatprep.subr.bf16.mxu0 %v4097
    %6501 = vmatpush2.bf16.msra.mxu0 %v4096
    %6502 = vmatprep.subr.bf16.mxu0 %v4089
    %6503 = vmatpush2.bf16.msra.mxu0 %v4088
    %6504 = vmatprep.subr.bf16.mxu0 %v4081
    %6505 = vmatpush2.bf16.msra.mxu0 %v4080
    %6506 = vmatprep.mubr.bf16.mxu0 %v102
    %6507 = vmatmul.mubr.bf16.gmra.mxu0 %v101
    %v6508 = vpop.f32.mrf.mxu0
    %v6509 = vadd.f32 %v6468, %v6508
    %v6510 = vpop.f32.mrf.mxu0
    %v6511 = vadd.f32 %v6470, %v6510
    %v6512 = vpop.f32.mrf.mxu0
    %v6513 = vpop.f32.mrf.mxu0
    %6514 = vdwg.mxu0
    %6515 = vmatprep.subr.bf16.mxu0 %v4201
    %6516 = vmatpush1.bf16.msra.mxu0 %v4200
    %6517 = vmatprep.subr.bf16.mxu0 %v4193
    %6518 = vmatpush1.bf16.msra.mxu0 %v4192
    %6519 = vmatprep.subr.bf16.mxu0 %v4185
    %6520 = vmatpush1.bf16.msra.mxu0 %v4184
    %6521 = vmatprep.subr.bf16.mxu0 %v4177
    %6522 = vmatpush1.bf16.msra.mxu0 %v4176
    %6523 = vmatprep.subr.bf16.mxu0 %v4169
    %6524 = vmatpush1.bf16.msra.mxu0 %v4168
    %6525 = vmatprep.subr.bf16.mxu0 %v4161
    %6526 = vmatpush1.bf16.msra.mxu0 %v4160
    %6527 = vmatprep.subr.bf16.mxu0 %v4153
    %6528 = vmatpush1.bf16.msra.mxu0 %v4152
    %6529 = vmatprep.subr.bf16.mxu0 %v4145
    %6530 = vmatpush1.bf16.msra.mxu0 %v4144
    %6531 = vmatprep.subr.bf16.mxu0 %v4265
    %6532 = vmatpush2.bf16.msra.mxu0 %v4264
    %6533 = vmatprep.subr.bf16.mxu0 %v4257
    %6534 = vmatpush2.bf16.msra.mxu0 %v4256
    %6535 = vmatprep.subr.bf16.mxu0 %v4249
    %6536 = vmatpush2.bf16.msra.mxu0 %v4248
    %6537 = vmatprep.subr.bf16.mxu0 %v4241
    %6538 = vmatpush2.bf16.msra.mxu0 %v4240
    %6539 = vmatprep.subr.bf16.mxu0 %v4233
    %6540 = vmatpush2.bf16.msra.mxu0 %v4232
    %6541 = vmatprep.subr.bf16.mxu0 %v4225
    %6542 = vmatpush2.bf16.msra.mxu0 %v4224
    %6543 = vmatprep.subr.bf16.mxu0 %v4217
    %6544 = vmatpush2.bf16.msra.mxu0 %v4216
    %6545 = vmatprep.subr.bf16.mxu0 %v4209
    %6546 = vmatpush2.bf16.msra.mxu0 %v4208
    %6547 = vmatprep.mubr.bf16.mxu0 %v104
    %6548 = vmatmul.mubr.bf16.gmra.mxu0 %v103
    %v6549 = vpop.f32.mrf.mxu0
    %v6550 = vadd.f32 %v6509, %v6549
    %v6551 = vpop.f32.mrf.mxu0
    %v6552 = vadd.f32 %v6511, %v6551
    %v6553 = vpop.f32.mrf.mxu0
    %v6554 = vpop.f32.mrf.mxu0
    %6555 = vdwg.mxu0
    %6556 = vmatprep.subr.bf16.mxu0 %v4329
    %6557 = vmatpush1.bf16.msra.mxu0 %v4328
    %6558 = vmatprep.subr.bf16.mxu0 %v4321
    %6559 = vmatpush1.bf16.msra.mxu0 %v4320
    %6560 = vmatprep.subr.bf16.mxu0 %v4313
    %6561 = vmatpush1.bf16.msra.mxu0 %v4312
    %6562 = vmatprep.subr.bf16.mxu0 %v4305
    %6563 = vmatpush1.bf16.msra.mxu0 %v4304
    %6564 = vmatprep.subr.bf16.mxu0 %v4297
    %6565 = vmatpush1.bf16.msra.mxu0 %v4296
    %6566 = vmatprep.subr.bf16.mxu0 %v4289
    %6567 = vmatpush1.bf16.msra.mxu0 %v4288
    %6568 = vmatprep.subr.bf16.mxu0 %v4281
    %6569 = vmatpush1.bf16.msra.mxu0 %v4280
    %6570 = vmatprep.subr.bf16.mxu0 %v4273
    %6571 = vmatpush1.bf16.msra.mxu0 %v4272
    %6572 = vmatprep.subr.bf16.mxu0 %v4393
    %6573 = vmatpush2.bf16.msra.mxu0 %v4392
    %6574 = vmatprep.subr.bf16.mxu0 %v4385
    %6575 = vmatpush2.bf16.msra.mxu0 %v4384
    %6576 = vmatprep.subr.bf16.mxu0 %v4377
    %6577 = vmatpush2.bf16.msra.mxu0 %v4376
    %6578 = vmatprep.subr.bf16.mxu0 %v4369
    %6579 = vmatpush2.bf16.msra.mxu0 %v4368
    %6580 = vmatprep.subr.bf16.mxu0 %v4361
    %6581 = vmatpush2.bf16.msra.mxu0 %v4360
    %6582 = vmatprep.subr.bf16.mxu0 %v4353
    %6583 = vmatpush2.bf16.msra.mxu0 %v4352
    %6584 = vmatprep.subr.bf16.mxu0 %v4345
    %6585 = vmatpush2.bf16.msra.mxu0 %v4344
    %6586 = vmatprep.subr.bf16.mxu0 %v4337
    %6587 = vmatpush2.bf16.msra.mxu0 %v4336
    %6588 = vmatprep.mubr.bf16.mxu0 %v106
    %6589 = vmatmul.mubr.bf16.gmra.mxu0 %v105
    %v6590 = vpop.f32.mrf.mxu0
    %v6591 = vadd.f32 %v6550, %v6590
    %v6592 = vpop.f32.mrf.mxu0
    %v6593 = vadd.f32 %v6552, %v6592
    %v6594 = vpop.f32.mrf.mxu0
    %v6595 = vpop.f32.mrf.mxu0
    %6596 = vdwg.mxu0
    %6597 = vmatprep.subr.bf16.mxu0 %v4457
    %6598 = vmatpush1.bf16.msra.mxu0 %v4456
    %6599 = vmatprep.subr.bf16.mxu0 %v4449
    %6600 = vmatpush1.bf16.msra.mxu0 %v4448
    %6601 = vmatprep.subr.bf16.mxu0 %v4441
    %6602 = vmatpush1.bf16.msra.mxu0 %v4440
    %6603 = vmatprep.subr.bf16.mxu0 %v4433
    %6604 = vmatpush1.bf16.msra.mxu0 %v4432
    %6605 = vmatprep.subr.bf16.mxu0 %v4425
    %6606 = vmatpush1.bf16.msra.mxu0 %v4424
    %6607 = vmatprep.subr.bf16.mxu0 %v4417
    %6608 = vmatpush1.bf16.msra.mxu0 %v4416
    %6609 = vmatprep.subr.bf16.mxu0 %v4409
    %6610 = vmatpush1.bf16.msra.mxu0 %v4408
    %6611 = vmatprep.subr.bf16.mxu0 %v4401
    %6612 = vmatpush1.bf16.msra.mxu0 %v4400
    %6613 = vmatprep.subr.bf16.mxu0 %v4521
    %6614 = vmatpush2.bf16.msra.mxu0 %v4520
    %6615 = vmatprep.subr.bf16.mxu0 %v4513
    %6616 = vmatpush2.bf16.msra.mxu0 %v4512
    %6617 = vmatprep.subr.bf16.mxu0 %v4505
    %6618 = vmatpush2.bf16.msra.mxu0 %v4504
    %6619 = vmatprep.subr.bf16.mxu0 %v4497
    %6620 = vmatpush2.bf16.msra.mxu0 %v4496
    %6621 = vmatprep.subr.bf16.mxu0 %v4489
    %6622 = vmatpush2.bf16.msra.mxu0 %v4488
    %6623 = vmatprep.subr.bf16.mxu0 %v4481
    %6624 = vmatpush2.bf16.msra.mxu0 %v4480
    %6625 = vmatprep.subr.bf16.mxu0 %v4473
    %6626 = vmatpush2.bf16.msra.mxu0 %v4472
    %6627 = vmatprep.subr.bf16.mxu0 %v4465
    %6628 = vmatpush2.bf16.msra.mxu0 %v4464
    %6629 = vmatprep.mubr.bf16.mxu0 %v108
    %6630 = vmatmul.mubr.bf16.gmra.mxu0 %v107
    %v6631 = vpop.f32.mrf.mxu0
    %v6632 = vadd.f32 %v6591, %v6631
    %v6633 = vpop.f32.mrf.mxu0
    %v6634 = vadd.f32 %v6593, %v6633
    %v6635 = vpop.f32.mrf.mxu0
    %v6636 = vpop.f32.mrf.mxu0
    %6637 = vdwg.mxu0
    %6638 = vmatprep.subr.bf16.mxu0 %v4585
    %6639 = vmatpush1.bf16.msra.mxu0 %v4584
    %6640 = vmatprep.subr.bf16.mxu0 %v4577
    %6641 = vmatpush1.bf16.msra.mxu0 %v4576
    %6642 = vmatprep.subr.bf16.mxu0 %v4569
    %6643 = vmatpush1.bf16.msra.mxu0 %v4568
    %6644 = vmatprep.subr.bf16.mxu0 %v4561
    %6645 = vmatpush1.bf16.msra.mxu0 %v4560
    %6646 = vmatprep.subr.bf16.mxu0 %v4553
    %6647 = vmatpush1.bf16.msra.mxu0 %v4552
    %6648 = vmatprep.subr.bf16.mxu0 %v4545
    %6649 = vmatpush1.bf16.msra.mxu0 %v4544
    %6650 = vmatprep.subr.bf16.mxu0 %v4537
    %6651 = vmatpush1.bf16.msra.mxu0 %v4536
    %6652 = vmatprep.subr.bf16.mxu0 %v4529
    %6653 = vmatpush1.bf16.msra.mxu0 %v4528
    %6654 = vmatprep.subr.bf16.mxu0 %v4649
    %6655 = vmatpush2.bf16.msra.mxu0 %v4648
    %6656 = vmatprep.subr.bf16.mxu0 %v4641
    %6657 = vmatpush2.bf16.msra.mxu0 %v4640
    %6658 = vmatprep.subr.bf16.mxu0 %v4633
    %6659 = vmatpush2.bf16.msra.mxu0 %v4632
    %6660 = vmatprep.subr.bf16.mxu0 %v4625
    %6661 = vmatpush2.bf16.msra.mxu0 %v4624
    %6662 = vmatprep.subr.bf16.mxu0 %v4617
    %6663 = vmatpush2.bf16.msra.mxu0 %v4616
    %6664 = vmatprep.subr.bf16.mxu0 %v4609
    %6665 = vmatpush2.bf16.msra.mxu0 %v4608
    %6666 = vmatprep.subr.bf16.mxu0 %v4601
    %6667 = vmatpush2.bf16.msra.mxu0 %v4600
    %6668 = vmatprep.subr.bf16.mxu0 %v4593
    %6669 = vmatpush2.bf16.msra.mxu0 %v4592
    %6670 = vmatprep.mubr.bf16.mxu0 %v110
    %6671 = vmatmul.mubr.bf16.gmra.mxu0 %v109
    %v6672 = vpop.f32.mrf.mxu0
    %v6673 = vadd.f32 %v6632, %v6672
    %v6674 = vpop.f32.mrf.mxu0
    %v6675 = vadd.f32 %v6634, %v6674
    %v6676 = vpop.f32.mrf.mxu0
    %v6677 = vpop.f32.mrf.mxu0
    %6678 = vdwg.mxu0
    %6679 = vmatprep.subr.bf16.mxu0 %v4713
    %6680 = vmatpush1.bf16.msra.mxu0 %v4712
    %6681 = vmatprep.subr.bf16.mxu0 %v4705
    %6682 = vmatpush1.bf16.msra.mxu0 %v4704
    %6683 = vmatprep.subr.bf16.mxu0 %v4697
    %6684 = vmatpush1.bf16.msra.mxu0 %v4696
    %6685 = vmatprep.subr.bf16.mxu0 %v4689
    %6686 = vmatpush1.bf16.msra.mxu0 %v4688
    %6687 = vmatprep.subr.bf16.mxu0 %v4681
    %6688 = vmatpush1.bf16.msra.mxu0 %v4680
    %6689 = vmatprep.subr.bf16.mxu0 %v4673
    %6690 = vmatpush1.bf16.msra.mxu0 %v4672
    %6691 = vmatprep.subr.bf16.mxu0 %v4665
    %6692 = vmatpush1.bf16.msra.mxu0 %v4664
    %6693 = vmatprep.subr.bf16.mxu0 %v4657
    %6694 = vmatpush1.bf16.msra.mxu0 %v4656
    %6695 = vmatprep.subr.bf16.mxu0 %v4777
    %6696 = vmatpush2.bf16.msra.mxu0 %v4776
    %6697 = vmatprep.subr.bf16.mxu0 %v4769
    %6698 = vmatpush2.bf16.msra.mxu0 %v4768
    %6699 = vmatprep.subr.bf16.mxu0 %v4761
    %6700 = vmatpush2.bf16.msra.mxu0 %v4760
    %6701 = vmatprep.subr.bf16.mxu0 %v4753
    %6702 = vmatpush2.bf16.msra.mxu0 %v4752
    %6703 = vmatprep.subr.bf16.mxu0 %v4745
    %6704 = vmatpush2.bf16.msra.mxu0 %v4744
    %6705 = vmatprep.subr.bf16.mxu0 %v4737
    %6706 = vmatpush2.bf16.msra.mxu0 %v4736
    %6707 = vmatprep.subr.bf16.mxu0 %v4729
    %6708 = vmatpush2.bf16.msra.mxu0 %v4728
    %6709 = vmatprep.subr.bf16.mxu0 %v4721
    %6710 = vmatpush2.bf16.msra.mxu0 %v4720
    %6711 = vmatprep.mubr.bf16.mxu0 %v112
    %6712 = vmatmul.mubr.bf16.gmra.mxu0 %v111
    %v6713 = vpop.f32.mrf.mxu0
    %v6714 = vadd.f32 %v6673, %v6713
    %v6715 = vpop.f32.mrf.mxu0
    %v6716 = vadd.f32 %v6675, %v6715
    %v6717 = vpop.f32.mrf.mxu0
    %v6718 = vpop.f32.mrf.mxu0
    %6719 = vdwg.mxu0
    %6720 = vmatprep.subr.bf16.mxu0 0
    %6721 = vmatpush1.bf16.msra.mxu0 0
    %6722 = vmatprep.subr.bf16.mxu0 0
    %6723 = vmatpush1.bf16.msra.mxu0 0
    %6724 = vmatprep.subr.bf16.mxu0 0
    %6725 = vmatpush1.bf16.msra.mxu0 0
    %6726 = vmatprep.subr.bf16.mxu0 %v5769
    %6727 = vmatpush1.bf16.msra.mxu0 %v5766
    %6728 = vmatprep.subr.bf16.mxu0 %v4809
    %6729 = vmatpush1.bf16.msra.mxu0 %v4808
    %6730 = vmatprep.subr.bf16.mxu0 %v4801
    %6731 = vmatpush1.bf16.msra.mxu0 %v4800
    %6732 = vmatprep.subr.bf16.mxu0 %v4793
    %6733 = vmatpush1.bf16.msra.mxu0 %v4792
    %6734 = vmatprep.subr.bf16.mxu0 %v4785
    %6735 = vmatpush1.bf16.msra.mxu0 %v4784
    %6736 = vmatprep.subr.bf16.mxu0 0
    %6737 = vmatpush2.bf16.msra.mxu0 0
    %6738 = vmatprep.subr.bf16.mxu0 0
    %6739 = vmatpush2.bf16.msra.mxu0 0
    %6740 = vmatprep.subr.bf16.mxu0 0
    %6741 = vmatpush2.bf16.msra.mxu0 0
    %6742 = vmatprep.subr.bf16.mxu0 0
    %6743 = vmatpush2.bf16.msra.mxu0 0
    %6744 = vmatprep.subr.bf16.mxu0 0
    %6745 = vmatpush2.bf16.msra.mxu0 0
    %6746 = vmatprep.subr.bf16.mxu0 0
    %6747 = vmatpush2.bf16.msra.mxu0 0
    %6748 = vmatprep.subr.bf16.mxu0 0
    %6749 = vmatpush2.bf16.msra.mxu0 0
    %6750 = vmatprep.subr.bf16.mxu0 0
    %6751 = vmatpush2.bf16.msra.mxu0 0
    %6752 = vmatprep.mubr.bf16.mxu0 0
    %6753 = vmatmul.mubr.bf16.gmra.mxu0 %v5750
    %v6754 = vpop.f32.mrf.mxu0
    %v6755 = vadd.f32 %v6714, %v6754
    %v6756 = vpop.f32.mrf.mxu0
    %v6757 = vadd.f32 %v6716, %v6756
    %v6758 = vpop.f32.mrf.mxu0
    %v6759 = vpop.f32.mrf.mxu0
    %6760 = vdwg.mxu0
    %6761 = vmatprep.subr.bf16.mxu0 %v3947
    %6762 = vmatpush1.bf16.msra.mxu0 %v3946
    %6763 = vmatprep.subr.bf16.mxu0 %v3939
    %6764 = vmatpush1.bf16.msra.mxu0 %v3938
    %6765 = vmatprep.subr.bf16.mxu0 %v3931
    %6766 = vmatpush1.bf16.msra.mxu0 %v3930
    %6767 = vmatprep.subr.bf16.mxu0 %v3923
    %6768 = vmatpush1.bf16.msra.mxu0 %v3922
    %6769 = vmatprep.subr.bf16.mxu0 %v3915
    %6770 = vmatpush1.bf16.msra.mxu0 %v3914
    %6771 = vmatprep.subr.bf16.mxu0 %v3907
    %6772 = vmatpush1.bf16.msra.mxu0 %v3906
    %6773 = vmatprep.subr.bf16.mxu0 %v3899
    %6774 = vmatpush1.bf16.msra.mxu0 %v3898
    %6775 = vmatprep.subr.bf16.mxu0 %v3891
    %6776 = vmatpush1.bf16.msra.mxu0 %v3890
    %6777 = vmatprep.subr.bf16.mxu0 %v4011
    %6778 = vmatpush2.bf16.msra.mxu0 %v4010
    %6779 = vmatprep.subr.bf16.mxu0 %v4003
    %6780 = vmatpush2.bf16.msra.mxu0 %v4002
    %6781 = vmatprep.subr.bf16.mxu0 %v3995
    %6782 = vmatpush2.bf16.msra.mxu0 %v3994
    %6783 = vmatprep.subr.bf16.mxu0 %v3987
    %6784 = vmatpush2.bf16.msra.mxu0 %v3986
    %6785 = vmatprep.subr.bf16.mxu0 %v3979
    %6786 = vmatpush2.bf16.msra.mxu0 %v3978
    %6787 = vmatprep.subr.bf16.mxu0 %v3971
    %6788 = vmatpush2.bf16.msra.mxu0 %v3970
    %6789 = vmatprep.subr.bf16.mxu0 %v3963
    %6790 = vmatpush2.bf16.msra.mxu0 %v3962
    %6791 = vmatprep.subr.bf16.mxu0 %v3955
    %6792 = vmatpush2.bf16.msra.mxu0 %v3954
    %6793 = vmatprep.mubr.bf16.mxu0 %v100
    %6794 = vmatmul.mubr.bf16.gmra.mxu0 %v99
    %v6795 = vpop.f32.mrf.mxu0
    %v6796 = vadd.f32 %v1075, %v6795
    %v6797 = vpop.f32.mrf.mxu0
    %v6798 = vadd.f32 %v1079, %v6797
    %v6799 = vpop.f32.mrf.mxu0
    %v6800 = vpop.f32.mrf.mxu0
    %6801 = vdwg.mxu0
    %6802 = vmatprep.subr.bf16.mxu0 %v4075
    %6803 = vmatpush1.bf16.msra.mxu0 %v4074
    %6804 = vmatprep.subr.bf16.mxu0 %v4067
    %6805 = vmatpush1.bf16.msra.mxu0 %v4066
    %6806 = vmatprep.subr.bf16.mxu0 %v4059
    %6807 = vmatpush1.bf16.msra.mxu0 %v4058
    %6808 = vmatprep.subr.bf16.mxu0 %v4051
    %6809 = vmatpush1.bf16.msra.mxu0 %v4050
    %6810 = vmatprep.subr.bf16.mxu0 %v4043
    %6811 = vmatpush1.bf16.msra.mxu0 %v4042
    %6812 = vmatprep.subr.bf16.mxu0 %v4035
    %6813 = vmatpush1.bf16.msra.mxu0 %v4034
    %6814 = vmatprep.subr.bf16.mxu0 %v4027
    %6815 = vmatpush1.bf16.msra.mxu0 %v4026
    %6816 = vmatprep.subr.bf16.mxu0 %v4019
    %6817 = vmatpush1.bf16.msra.mxu0 %v4018
    %6818 = vmatprep.subr.bf16.mxu0 %v4139
    %6819 = vmatpush2.bf16.msra.mxu0 %v4138
    %6820 = vmatprep.subr.bf16.mxu0 %v4131
    %6821 = vmatpush2.bf16.msra.mxu0 %v4130
    %6822 = vmatprep.subr.bf16.mxu0 %v4123
    %6823 = vmatpush2.bf16.msra.mxu0 %v4122
    %6824 = vmatprep.subr.bf16.mxu0 %v4115
    %6825 = vmatpush2.bf16.msra.mxu0 %v4114
    %6826 = vmatprep.subr.bf16.mxu0 %v4107
    %6827 = vmatpush2.bf16.msra.mxu0 %v4106
    %6828 = vmatprep.subr.bf16.mxu0 %v4099
    %6829 = vmatpush2.bf16.msra.mxu0 %v4098
    %6830 = vmatprep.subr.bf16.mxu0 %v4091
    %6831 = vmatpush2.bf16.msra.mxu0 %v4090
    %6832 = vmatprep.subr.bf16.mxu0 %v4083
    %6833 = vmatpush2.bf16.msra.mxu0 %v4082
    %6834 = vmatprep.mubr.bf16.mxu0 %v102
    %6835 = vmatmul.mubr.bf16.gmra.mxu0 %v101
    %v6836 = vpop.f32.mrf.mxu0
    %v6837 = vadd.f32 %v6796, %v6836
    %v6838 = vpop.f32.mrf.mxu0
    %v6839 = vadd.f32 %v6798, %v6838
    %v6840 = vpop.f32.mrf.mxu0
    %v6841 = vpop.f32.mrf.mxu0
    %6842 = vdwg.mxu0
    %6843 = vmatprep.subr.bf16.mxu0 %v4203
    %6844 = vmatpush1.bf16.msra.mxu0 %v4202
    %6845 = vmatprep.subr.bf16.mxu0 %v4195
    %6846 = vmatpush1.bf16.msra.mxu0 %v4194
    %6847 = vmatprep.subr.bf16.mxu0 %v4187
    %6848 = vmatpush1.bf16.msra.mxu0 %v4186
    %6849 = vmatprep.subr.bf16.mxu0 %v4179
    %6850 = vmatpush1.bf16.msra.mxu0 %v4178
    %6851 = vmatprep.subr.bf16.mxu0 %v4171
    %6852 = vmatpush1.bf16.msra.mxu0 %v4170
    %6853 = vmatprep.subr.bf16.mxu0 %v4163
    %6854 = vmatpush1.bf16.msra.mxu0 %v4162
    %6855 = vmatprep.subr.bf16.mxu0 %v4155
    %6856 = vmatpush1.bf16.msra.mxu0 %v4154
    %6857 = vmatprep.subr.bf16.mxu0 %v4147
    %6858 = vmatpush1.bf16.msra.mxu0 %v4146
    %6859 = vmatprep.subr.bf16.mxu0 %v4267
    %6860 = vmatpush2.bf16.msra.mxu0 %v4266
    %6861 = vmatprep.subr.bf16.mxu0 %v4259
    %6862 = vmatpush2.bf16.msra.mxu0 %v4258
    %6863 = vmatprep.subr.bf16.mxu0 %v4251
    %6864 = vmatpush2.bf16.msra.mxu0 %v4250
    %6865 = vmatprep.subr.bf16.mxu0 %v4243
    %6866 = vmatpush2.bf16.msra.mxu0 %v4242
    %6867 = vmatprep.subr.bf16.mxu0 %v4235
    %6868 = vmatpush2.bf16.msra.mxu0 %v4234
    %6869 = vmatprep.subr.bf16.mxu0 %v4227
    %6870 = vmatpush2.bf16.msra.mxu0 %v4226
    %6871 = vmatprep.subr.bf16.mxu0 %v4219
    %6872 = vmatpush2.bf16.msra.mxu0 %v4218
    %6873 = vmatprep.subr.bf16.mxu0 %v4211
    %6874 = vmatpush2.bf16.msra.mxu0 %v4210
    %6875 = vmatprep.mubr.bf16.mxu0 %v104
    %6876 = vmatmul.mubr.bf16.gmra.mxu0 %v103
    %v6877 = vpop.f32.mrf.mxu0
    %v6878 = vadd.f32 %v6837, %v6877
    %v6879 = vpop.f32.mrf.mxu0
    %v6880 = vadd.f32 %v6839, %v6879
    %v6881 = vpop.f32.mrf.mxu0
    %v6882 = vpop.f32.mrf.mxu0
    %6883 = vdwg.mxu0
    %6884 = vmatprep.subr.bf16.mxu0 %v4331
    %6885 = vmatpush1.bf16.msra.mxu0 %v4330
    %6886 = vmatprep.subr.bf16.mxu0 %v4323
    %6887 = vmatpush1.bf16.msra.mxu0 %v4322
    %6888 = vmatprep.subr.bf16.mxu0 %v4315
    %6889 = vmatpush1.bf16.msra.mxu0 %v4314
    %6890 = vmatprep.subr.bf16.mxu0 %v4307
    %6891 = vmatpush1.bf16.msra.mxu0 %v4306
    %6892 = vmatprep.subr.bf16.mxu0 %v4299
    %6893 = vmatpush1.bf16.msra.mxu0 %v4298
    %6894 = vmatprep.subr.bf16.mxu0 %v4291
    %6895 = vmatpush1.bf16.msra.mxu0 %v4290
    %6896 = vmatprep.subr.bf16.mxu0 %v4283
    %6897 = vmatpush1.bf16.msra.mxu0 %v4282
    %6898 = vmatprep.subr.bf16.mxu0 %v4275
    %6899 = vmatpush1.bf16.msra.mxu0 %v4274
    %6900 = vmatprep.subr.bf16.mxu0 %v4395
    %6901 = vmatpush2.bf16.msra.mxu0 %v4394
    %6902 = vmatprep.subr.bf16.mxu0 %v4387
    %6903 = vmatpush2.bf16.msra.mxu0 %v4386
    %6904 = vmatprep.subr.bf16.mxu0 %v4379
    %6905 = vmatpush2.bf16.msra.mxu0 %v4378
    %6906 = vmatprep.subr.bf16.mxu0 %v4371
    %6907 = vmatpush2.bf16.msra.mxu0 %v4370
    %6908 = vmatprep.subr.bf16.mxu0 %v4363
    %6909 = vmatpush2.bf16.msra.mxu0 %v4362
    %6910 = vmatprep.subr.bf16.mxu0 %v4355
    %6911 = vmatpush2.bf16.msra.mxu0 %v4354
    %6912 = vmatprep.subr.bf16.mxu0 %v4347
    %6913 = vmatpush2.bf16.msra.mxu0 %v4346
    %6914 = vmatprep.subr.bf16.mxu0 %v4339
    %6915 = vmatpush2.bf16.msra.mxu0 %v4338
    %6916 = vmatprep.mubr.bf16.mxu0 %v106
    %6917 = vmatmul.mubr.bf16.gmra.mxu0 %v105
    %v6918 = vpop.f32.mrf.mxu0
    %v6919 = vadd.f32 %v6878, %v6918
    %v6920 = vpop.f32.mrf.mxu0
    %v6921 = vadd.f32 %v6880, %v6920
    %v6922 = vpop.f32.mrf.mxu0
    %v6923 = vpop.f32.mrf.mxu0
    %6924 = vdwg.mxu0
    %6925 = vmatprep.subr.bf16.mxu0 %v4459
    %6926 = vmatpush1.bf16.msra.mxu0 %v4458
    %6927 = vmatprep.subr.bf16.mxu0 %v4451
    %6928 = vmatpush1.bf16.msra.mxu0 %v4450
    %6929 = vmatprep.subr.bf16.mxu0 %v4443
    %6930 = vmatpush1.bf16.msra.mxu0 %v4442
    %6931 = vmatprep.subr.bf16.mxu0 %v4435
    %6932 = vmatpush1.bf16.msra.mxu0 %v4434
    %6933 = vmatprep.subr.bf16.mxu0 %v4427
    %6934 = vmatpush1.bf16.msra.mxu0 %v4426
    %6935 = vmatprep.subr.bf16.mxu0 %v4419
    %6936 = vmatpush1.bf16.msra.mxu0 %v4418
    %6937 = vmatprep.subr.bf16.mxu0 %v4411
    %6938 = vmatpush1.bf16.msra.mxu0 %v4410
    %6939 = vmatprep.subr.bf16.mxu0 %v4403
    %6940 = vmatpush1.bf16.msra.mxu0 %v4402
    %6941 = vmatprep.subr.bf16.mxu0 %v4523
    %6942 = vmatpush2.bf16.msra.mxu0 %v4522
    %6943 = vmatprep.subr.bf16.mxu0 %v4515
    %6944 = vmatpush2.bf16.msra.mxu0 %v4514
    %6945 = vmatprep.subr.bf16.mxu0 %v4507
    %6946 = vmatpush2.bf16.msra.mxu0 %v4506
    %6947 = vmatprep.subr.bf16.mxu0 %v4499
    %6948 = vmatpush2.bf16.msra.mxu0 %v4498
    %6949 = vmatprep.subr.bf16.mxu0 %v4491
    %6950 = vmatpush2.bf16.msra.mxu0 %v4490
    %6951 = vmatprep.subr.bf16.mxu0 %v4483
    %6952 = vmatpush2.bf16.msra.mxu0 %v4482
    %6953 = vmatprep.subr.bf16.mxu0 %v4475
    %6954 = vmatpush2.bf16.msra.mxu0 %v4474
    %6955 = vmatprep.subr.bf16.mxu0 %v4467
    %6956 = vmatpush2.bf16.msra.mxu0 %v4466
    %6957 = vmatprep.mubr.bf16.mxu0 %v108
    %6958 = vmatmul.mubr.bf16.gmra.mxu0 %v107
    %v6959 = vpop.f32.mrf.mxu0
    %v6960 = vadd.f32 %v6919, %v6959
    %v6961 = vpop.f32.mrf.mxu0
    %v6962 = vadd.f32 %v6921, %v6961
    %v6963 = vpop.f32.mrf.mxu0
    %v6964 = vpop.f32.mrf.mxu0
    %6965 = vdwg.mxu0
    %6966 = vmatprep.subr.bf16.mxu0 %v4587
    %6967 = vmatpush1.bf16.msra.mxu0 %v4586
    %6968 = vmatprep.subr.bf16.mxu0 %v4579
    %6969 = vmatpush1.bf16.msra.mxu0 %v4578
    %6970 = vmatprep.subr.bf16.mxu0 %v4571
    %6971 = vmatpush1.bf16.msra.mxu0 %v4570
    %6972 = vmatprep.subr.bf16.mxu0 %v4563
    %6973 = vmatpush1.bf16.msra.mxu0 %v4562
    %6974 = vmatprep.subr.bf16.mxu0 %v4555
    %6975 = vmatpush1.bf16.msra.mxu0 %v4554
    %6976 = vmatprep.subr.bf16.mxu0 %v4547
    %6977 = vmatpush1.bf16.msra.mxu0 %v4546
    %6978 = vmatprep.subr.bf16.mxu0 %v4539
    %6979 = vmatpush1.bf16.msra.mxu0 %v4538
    %6980 = vmatprep.subr.bf16.mxu0 %v4531
    %6981 = vmatpush1.bf16.msra.mxu0 %v4530
    %6982 = vmatprep.subr.bf16.mxu0 %v4651
    %6983 = vmatpush2.bf16.msra.mxu0 %v4650
    %6984 = vmatprep.subr.bf16.mxu0 %v4643
    %6985 = vmatpush2.bf16.msra.mxu0 %v4642
    %6986 = vmatprep.subr.bf16.mxu0 %v4635
    %6987 = vmatpush2.bf16.msra.mxu0 %v4634
    %6988 = vmatprep.subr.bf16.mxu0 %v4627
    %6989 = vmatpush2.bf16.msra.mxu0 %v4626
    %6990 = vmatprep.subr.bf16.mxu0 %v4619
    %6991 = vmatpush2.bf16.msra.mxu0 %v4618
    %6992 = vmatprep.subr.bf16.mxu0 %v4611
    %6993 = vmatpush2.bf16.msra.mxu0 %v4610
    %6994 = vmatprep.subr.bf16.mxu0 %v4603
    %6995 = vmatpush2.bf16.msra.mxu0 %v4602
    %6996 = vmatprep.subr.bf16.mxu0 %v4595
    %6997 = vmatpush2.bf16.msra.mxu0 %v4594
    %6998 = vmatprep.mubr.bf16.mxu0 %v110
    %6999 = vmatmul.mubr.bf16.gmra.mxu0 %v109
    %v7000 = vpop.f32.mrf.mxu0
    %v7001 = vadd.f32 %v6960, %v7000
    %v7002 = vpop.f32.mrf.mxu0
    %v7003 = vadd.f32 %v6962, %v7002
    %v7004 = vpop.f32.mrf.mxu0
    %v7005 = vpop.f32.mrf.mxu0
    %7006 = vdwg.mxu0
    %7007 = vmatprep.subr.bf16.mxu0 %v4715
    %7008 = vmatpush1.bf16.msra.mxu0 %v4714
    %7009 = vmatprep.subr.bf16.mxu0 %v4707
    %7010 = vmatpush1.bf16.msra.mxu0 %v4706
    %7011 = vmatprep.subr.bf16.mxu0 %v4699
    %7012 = vmatpush1.bf16.msra.mxu0 %v4698
    %7013 = vmatprep.subr.bf16.mxu0 %v4691
    %7014 = vmatpush1.bf16.msra.mxu0 %v4690
    %7015 = vmatprep.subr.bf16.mxu0 %v4683
    %7016 = vmatpush1.bf16.msra.mxu0 %v4682
    %7017 = vmatprep.subr.bf16.mxu0 %v4675
    %7018 = vmatpush1.bf16.msra.mxu0 %v4674
    %7019 = vmatprep.subr.bf16.mxu0 %v4667
    %7020 = vmatpush1.bf16.msra.mxu0 %v4666
    %7021 = vmatprep.subr.bf16.mxu0 %v4659
    %7022 = vmatpush1.bf16.msra.mxu0 %v4658
    %7023 = vmatprep.subr.bf16.mxu0 %v4779
    %7024 = vmatpush2.bf16.msra.mxu0 %v4778
    %7025 = vmatprep.subr.bf16.mxu0 %v4771
    %7026 = vmatpush2.bf16.msra.mxu0 %v4770
    %7027 = vmatprep.subr.bf16.mxu0 %v4763
    %7028 = vmatpush2.bf16.msra.mxu0 %v4762
    %7029 = vmatprep.subr.bf16.mxu0 %v4755
    %7030 = vmatpush2.bf16.msra.mxu0 %v4754
    %7031 = vmatprep.subr.bf16.mxu0 %v4747
    %7032 = vmatpush2.bf16.msra.mxu0 %v4746
    %7033 = vmatprep.subr.bf16.mxu0 %v4739
    %7034 = vmatpush2.bf16.msra.mxu0 %v4738
    %7035 = vmatprep.subr.bf16.mxu0 %v4731
    %7036 = vmatpush2.bf16.msra.mxu0 %v4730
    %7037 = vmatprep.subr.bf16.mxu0 %v4723
    %7038 = vmatpush2.bf16.msra.mxu0 %v4722
    %7039 = vmatprep.mubr.bf16.mxu0 %v112
    %7040 = vmatmul.mubr.bf16.gmra.mxu0 %v111
    %v7041 = vpop.f32.mrf.mxu0
    %v7042 = vadd.f32 %v7001, %v7041
    %v7043 = vpop.f32.mrf.mxu0
    %v7044 = vadd.f32 %v7003, %v7043
    %v7045 = vpop.f32.mrf.mxu0
    %v7046 = vpop.f32.mrf.mxu0
    %7047 = vdwg.mxu0
    %7048 = vmatprep.subr.bf16.mxu0 0
    %7049 = vmatpush1.bf16.msra.mxu0 0
    %7050 = vmatprep.subr.bf16.mxu0 0
    %7051 = vmatpush1.bf16.msra.mxu0 0
    %7052 = vmatprep.subr.bf16.mxu0 0
    %7053 = vmatpush1.bf16.msra.mxu0 0
    %7054 = vmatprep.subr.bf16.mxu0 %v5775
    %7055 = vmatpush1.bf16.msra.mxu0 %v5772
    %7056 = vmatprep.subr.bf16.mxu0 %v4811
    %7057 = vmatpush1.bf16.msra.mxu0 %v4810
    %7058 = vmatprep.subr.bf16.mxu0 %v4803
    %7059 = vmatpush1.bf16.msra.mxu0 %v4802
    %7060 = vmatprep.subr.bf16.mxu0 %v4795
    %7061 = vmatpush1.bf16.msra.mxu0 %v4794
    %7062 = vmatprep.subr.bf16.mxu0 %v4787
    %7063 = vmatpush1.bf16.msra.mxu0 %v4786
    %7064 = vmatprep.subr.bf16.mxu0 0
    %7065 = vmatpush2.bf16.msra.mxu0 0
    %7066 = vmatprep.subr.bf16.mxu0 0
    %7067 = vmatpush2.bf16.msra.mxu0 0
    %7068 = vmatprep.subr.bf16.mxu0 0
    %7069 = vmatpush2.bf16.msra.mxu0 0
    %7070 = vmatprep.subr.bf16.mxu0 0
    %7071 = vmatpush2.bf16.msra.mxu0 0
    %7072 = vmatprep.subr.bf16.mxu0 0
    %7073 = vmatpush2.bf16.msra.mxu0 0
    %7074 = vmatprep.subr.bf16.mxu0 0
    %7075 = vmatpush2.bf16.msra.mxu0 0
    %7076 = vmatprep.subr.bf16.mxu0 0
    %7077 = vmatpush2.bf16.msra.mxu0 0
    %7078 = vmatprep.subr.bf16.mxu0 0
    %7079 = vmatpush2.bf16.msra.mxu0 0
    %7080 = vmatprep.mubr.bf16.mxu0 0
    %7081 = vmatmul.mubr.bf16.gmra.mxu0 %v5750
    %v7082 = vpop.f32.mrf.mxu0
    %v7083 = vadd.f32 %v7042, %v7082
    %v7084 = vpop.f32.mrf.mxu0
    %v7085 = vadd.f32 %v7044, %v7084
    %v7086 = vpop.f32.mrf.mxu0
    %v7087 = vpop.f32.mrf.mxu0
    %7088 = vdwg.mxu0
    %vm7089 = vcmp.gt.f32.partialorder %v6099, 0.0
    %vm7090 = vcmp.gt.f32.partialorder %v6101, 0.0
    %vm7091 = vcmp.gt.f32.partialorder %v6427, 0.0
    %vm7092 = vcmp.gt.f32.partialorder %v6429, 0.0
    %vm7093 = vcmp.gt.f32.partialorder %v6755, 0.0
    %vm7094 = vcmp.gt.f32.partialorder %v6757, 0.0
    %vm7095 = vcmp.gt.f32.partialorder %v7083, 0.0
    %vm7096 = vcmp.gt.f32.partialorder %v7085, 0.0
    %v7097 = vmul.f32 %v6099, 0.01
    %v7098 = vmul.f32 %v6101, 0.01
    %v7099 = vmul.f32 %v6427, 0.01
    %v7100 = vmul.f32 %v6429, 0.01
    %v7101 = vmul.f32 %v6755, 0.01
    %v7102 = vmul.f32 %v6757, 0.01
    %v7103 = vmul.f32 %v7083, 0.01
    %v7104 = vmul.f32 %v7085, 0.01
    %v7105 = vsel %vm7089, %v6099, %v7097
    %v7106 = vsel %vm7090, %v6101, %v7098
    %v7107 = vsel %vm7091, %v6427, %v7099
    %v7108 = vsel %vm7092, %v6429, %v7100
    %v7109 = vsel %vm7093, %v6755, %v7101
    %v7110 = vsel %vm7094, %v6757, %v7102
    %v7111 = vsel %vm7095, %v7083, %v7103
    %v7112 = vsel %vm7096, %v7085, %v7104
    %v7113 = vpack.c.bf16 %v7105, %v7105
    %v7114 = vpack.c.bf16 %v7106, %v7106
    %v7115 = vpack.c.bf16 %v7107, %v7107
    %v7116 = vpack.c.bf16 %v7108, %v7108
    %v7117 = vpack.c.bf16 %v7109, %v7109
    %v7118 = vpack.c.bf16 %v7110, %v7110
    %v7119 = vpack.c.bf16 %v7111, %v7111
    %v7120 = vpack.c.bf16 %v7112, %v7112
    %v7121 = vld [vmem:[#allocation8] sm:$0xf]
    %v7122 = vld [vmem:[#allocation8 + $0x4] sm:$0xf]
    %v7123 = vld [vmem:[#allocation8 + $0x8] sm:$0xf]
    %v7124 = vld [vmem:[#allocation8 + $0xc] sm:$0xf]
    %v7125 = vld [vmem:[#allocation8 + $0x10] sm:$0xf]
    %v7126 = vld [vmem:[#allocation8 + $0x14] sm:$0xf]
    %v7127 = vld [vmem:[#allocation8 + $0x18] sm:$0xf]
    %v7128 = vld [vmem:[#allocation8 + $0x1c] sm:$0xf]
    %v7129 = vld [vmem:[#allocation8 + $0x20] sm:$0xf]
    %v7130 = vld [vmem:[#allocation8 + $0x24] sm:$0xf]
    %v7131 = vld [vmem:[#allocation8 + $0x28] sm:$0xf]
    %v7132 = vld [vmem:[#allocation8 + $0x2c] sm:$0xf]
    %v7133 = vld [vmem:[#allocation8 + $0x30] sm:$0xf]
    %v7134 = vld [vmem:[#allocation8 + $0x34] sm:$0xf]
    %v7135 = vld [vmem:[#allocation8 + $0x38] sm:$0xf]
    %v7136 = vld [vmem:[#allocation8 + $0x3c] sm:$0xf]
    %v7137 = vld [vmem:[#allocation8 + $0x40] sm:$0xf]
    %v7138 = vld [vmem:[#allocation8 + $0x44] sm:$0xf]
    %v7139 = vld [vmem:[#allocation8 + $0x48] sm:$0xf]
    %v7140 = vld [vmem:[#allocation8 + $0x4c] sm:$0xf]
    %v7141 = vld [vmem:[#allocation8 + $0x50] sm:$0xf]
    %v7142 = vld [vmem:[#allocation8 + $0x54] sm:$0xf]
    %v7143 = vld [vmem:[#allocation8 + $0x58] sm:$0xf]
    %v7144 = vld [vmem:[#allocation8 + $0x5c] sm:$0xf]
    %v7145 = vld [vmem:[#allocation8 + $0x60] sm:$0xf]
    %v7146 = vld [vmem:[#allocation8 + $0x64] sm:$0xf]
    %v7147 = vld [vmem:[#allocation8 + $0x68] sm:$0xf]
    %v7148 = vld [vmem:[#allocation8 + $0x6c] sm:$0xf]
    %v7149 = vld [vmem:[#allocation8 + $0x70] sm:$0xf]
    %v7150 = vld [vmem:[#allocation8 + $0x74] sm:$0xf]
    %v7151 = vld [vmem:[#allocation8 + $0x78] sm:$0xf]
    %v7152 = vld [vmem:[#allocation8 + $0x7c] sm:$0xf]
    %v7153 = vld [vmem:[#allocation8 + $0x80] sm:$0xf]
    %v7154 = vld [vmem:[#allocation8 + $0x84] sm:$0xf]
    %v7155 = vld [vmem:[#allocation8 + $0x88] sm:$0xf]
    %v7156 = vld [vmem:[#allocation8 + $0x8c] sm:$0xf]
    %v7157 = vld [vmem:[#allocation8 + $0x90] sm:$0xf]
    %v7158 = vld [vmem:[#allocation8 + $0x94] sm:$0xf]
    %v7159 = vld [vmem:[#allocation8 + $0x98] sm:$0xf]
    %v7160 = vld [vmem:[#allocation8 + $0x9c] sm:$0xf]
    %v7161 = vld [vmem:[#allocation8 + $0xa0] sm:$0xf]
    %v7162 = vld [vmem:[#allocation8 + $0xa4] sm:$0xf]
    %v7163 = vld [vmem:[#allocation8 + $0xa8] sm:$0xf]
    %v7164 = vld [vmem:[#allocation8 + $0xac] sm:$0xf]
    %v7165 = vld [vmem:[#allocation8 + $0xb0] sm:$0xf]
    %v7166 = vld [vmem:[#allocation8 + $0xb4] sm:$0xf]
    %v7167 = vld [vmem:[#allocation8 + $0xb8] sm:$0xf]
    %v7168 = vld [vmem:[#allocation8 + $0xbc] sm:$0xf]
    %v7169 = vld [vmem:[#allocation8 + $0xc0] sm:$0xf]
    %v7170 = vld [vmem:[#allocation8 + $0xc4] sm:$0xf]
    %v7171 = vld [vmem:[#allocation8 + $0xc8] sm:$0xf]
    %v7172 = vld [vmem:[#allocation8 + $0xcc] sm:$0xf]
    %v7173 = vld [vmem:[#allocation8 + $0xd0] sm:$0xf]
    %v7174 = vld [vmem:[#allocation8 + $0xd4] sm:$0xf]
    %v7175 = vld [vmem:[#allocation8 + $0xd8] sm:$0xf]
    %v7176 = vld [vmem:[#allocation8 + $0xdc] sm:$0xf]
    %v7177 = vld [vmem:[#allocation8 + $0xe0] sm:$0xf]
    %v7178 = vld [vmem:[#allocation8 + $0xe4] sm:$0xf]
    %v7179 = vld [vmem:[#allocation8 + $0xe8] sm:$0xf]
    %v7180 = vld [vmem:[#allocation8 + $0xec] sm:$0xf]
    %v7181 = vld [vmem:[#allocation8 + $0xf0] sm:$0xf]
    %v7182 = vld [vmem:[#allocation8 + $0xf4] sm:$0xf]
    %v7183 = vld [vmem:[#allocation8 + $0xf8] sm:$0xf]
    %v7184 = vld [vmem:[#allocation8 + $0xfc] sm:$0xf]
    %v7185 = vld [vmem:[#allocation8 + $0x100] sm:$0xf]
    %v7186 = vld [vmem:[#allocation8 + $0x104] sm:$0xf]
    %v7187 = vld [vmem:[#allocation8 + $0x108] sm:$0xf]
    %v7188 = vld [vmem:[#allocation8 + $0x10c] sm:$0xf]
    %v7189 = vld [vmem:[#allocation8 + $0x110] sm:$0xf]
    %v7190 = vld [vmem:[#allocation8 + $0x114] sm:$0xf]
    %v7191 = vld [vmem:[#allocation8 + $0x118] sm:$0xf]
    %v7192 = vld [vmem:[#allocation8 + $0x11c] sm:$0xf]
    %v7193 = vld [vmem:[#allocation8 + $0x120] sm:$0xf]
    %v7194 = vld [vmem:[#allocation8 + $0x124] sm:$0xf]
    %v7195 = vld [vmem:[#allocation8 + $0x128] sm:$0xf]
    %v7196 = vld [vmem:[#allocation8 + $0x12c] sm:$0xf]
    %v7197 = vld [vmem:[#allocation8 + $0x130] sm:$0xf]
    %v7198 = vld [vmem:[#allocation8 + $0x134] sm:$0xf]
    %v7199 = vld [vmem:[#allocation8 + $0x138] sm:$0xf]
    %v7200 = vld [vmem:[#allocation8 + $0x13c] sm:$0xf]
    %v7201 = vld [vmem:[#allocation8 + $0x140] sm:$0xf]
    %v7202 = vld [vmem:[#allocation8 + $0x144] sm:$0xf]
    %v7203 = vld [vmem:[#allocation8 + $0x148] sm:$0xf]
    %v7204 = vld [vmem:[#allocation8 + $0x14c] sm:$0xf]
    %v7205 = vld [vmem:[#allocation8 + $0x150] sm:$0xf]
    %v7206 = vld [vmem:[#allocation8 + $0x154] sm:$0xf]
    %v7207 = vld [vmem:[#allocation8 + $0x158] sm:$0xf]
    %v7208 = vld [vmem:[#allocation8 + $0x15c] sm:$0xf]
    %v7209 = vld [vmem:[#allocation8 + $0x160] sm:$0xf]
    %v7210 = vld [vmem:[#allocation8 + $0x164] sm:$0xf]
    %v7211 = vld [vmem:[#allocation8 + $0x168] sm:$0xf]
    %v7212 = vld [vmem:[#allocation8 + $0x16c] sm:$0xf]
    %v7213 = vld [vmem:[#allocation8 + $0x170] sm:$0xf]
    %v7214 = vld [vmem:[#allocation8 + $0x174] sm:$0xf]
    %v7215 = vld [vmem:[#allocation8 + $0x178] sm:$0xf]
    %v7216 = vld [vmem:[#allocation8 + $0x17c] sm:$0xf]
    %v7217 = vld [vmem:[#allocation8 + $0x180] sm:$0xf]
    %v7218 = vld [vmem:[#allocation8 + $0x184] sm:$0xf]
    %v7219 = vld [vmem:[#allocation8 + $0x188] sm:$0xf]
    %v7220 = vld [vmem:[#allocation8 + $0x18c] sm:$0xf]
    %v7221 = vld [vmem:[#allocation8 + $0x190] sm:$0xf]
    %v7222 = vld [vmem:[#allocation8 + $0x194] sm:$0xf]
    %v7223 = vld [vmem:[#allocation8 + $0x198] sm:$0xf]
    %v7224 = vld [vmem:[#allocation8 + $0x19c] sm:$0xf]
    %v7225 = vld [vmem:[#allocation8 + $0x1a0] sm:$0xf]
    %v7226 = vld [vmem:[#allocation8 + $0x1a4] sm:$0xf]
    %v7227 = vld [vmem:[#allocation8 + $0x1a8] sm:$0xf]
    %v7228 = vld [vmem:[#allocation8 + $0x1ac] sm:$0xf]
    %v7229 = vld [vmem:[#allocation8 + $0x1b0] sm:$0xf]
    %v7230 = vld [vmem:[#allocation8 + $0x1b4] sm:$0xf]
    %v7231 = vld [vmem:[#allocation8 + $0x1b8] sm:$0xf]
    %v7232 = vld [vmem:[#allocation8 + $0x1bc] sm:$0xf]
    %v7233 = vld [vmem:[#allocation8 + $0x1c0] sm:$0xf]
    %v7234 = vld [vmem:[#allocation8 + $0x1c4] sm:$0xf]
    %v7235 = vld [vmem:[#allocation8 + $0x1c8] sm:$0xf]
    %v7236 = vld [vmem:[#allocation8 + $0x1cc] sm:$0xf]
    %v7237 = vld [vmem:[#allocation8 + $0x1d0] sm:$0xf]
    %v7238 = vld [vmem:[#allocation8 + $0x1d4] sm:$0xf]
    %v7239 = vld [vmem:[#allocation8 + $0x1d8] sm:$0xf]
    %v7240 = vld [vmem:[#allocation8 + $0x1dc] sm:$0xf]
    %v7241 = vld [vmem:[#allocation8 + $0x1e0] sm:$0xf]
    %v7242 = vld [vmem:[#allocation8 + $0x1e4] sm:$0xf]
    %v7243 = vld [vmem:[#allocation8 + $0x1e8] sm:$0xf]
    %v7244 = vld [vmem:[#allocation8 + $0x1ec] sm:$0xf]
    %v7245 = vld [vmem:[#allocation8 + $0x1f0] sm:$0xf]
    %v7246 = vld [vmem:[#allocation8 + $0x1f4] sm:$0xf]
    %v7247 = vld [vmem:[#allocation8 + $0x1f8] sm:$0xf]
    %v7248 = vld [vmem:[#allocation8 + $0x1fc] sm:$0xf]
    %v7249 = vld [vmem:[#allocation10] sm:$0x1]
    %v7251 = vlaneseq
    %v7252 = vshrl.u32 %v7251, 7
    %v7253 = vsub.s32 0, %v7252
    %v7254 = vrot.slane %v7249, %v7253
    %v7384 = vunpack.c.l.b16 %v7121
    %v7385 = vunpack.c.l.b16 %v7122
    %v7386 = vunpack.c.l.b16 %v7123
    %v7387 = vunpack.c.l.b16 %v7124
    %v7388 = vunpack.c.l.b16 %v7125
    %v7389 = vunpack.c.l.b16 %v7126
    %v7390 = vunpack.c.l.b16 %v7127
    %v7391 = vunpack.c.l.b16 %v7128
    %v7392 = vunpack.c.l.b16 %v7129
    %v7393 = vunpack.c.l.b16 %v7130
    %v7394 = vunpack.c.l.b16 %v7131
    %v7395 = vunpack.c.l.b16 %v7132
    %v7396 = vunpack.c.l.b16 %v7133
    %v7397 = vunpack.c.l.b16 %v7134
    %v7398 = vunpack.c.l.b16 %v7135
    %v7399 = vunpack.c.l.b16 %v7136
    %v7400 = vunpack.c.l.b16 %v7137
    %v7401 = vunpack.c.l.b16 %v7138
    %v7402 = vunpack.c.l.b16 %v7139
    %v7403 = vunpack.c.l.b16 %v7140
    %v7404 = vunpack.c.l.b16 %v7141
    %v7405 = vunpack.c.l.b16 %v7142
    %v7406 = vunpack.c.l.b16 %v7143
    %v7407 = vunpack.c.l.b16 %v7144
    %v7408 = vunpack.c.l.b16 %v7145
    %v7409 = vunpack.c.l.b16 %v7146
    %v7410 = vunpack.c.l.b16 %v7147
    %v7411 = vunpack.c.l.b16 %v7148
    %v7412 = vunpack.c.l.b16 %v7149
    %v7413 = vunpack.c.l.b16 %v7150
    %v7414 = vunpack.c.l.b16 %v7151
    %v7415 = vunpack.c.l.b16 %v7152
    %v7416 = vunpack.c.l.b16 %v7153
    %v7417 = vunpack.c.l.b16 %v7154
    %v7418 = vunpack.c.l.b16 %v7155
    %v7419 = vunpack.c.l.b16 %v7156
    %v7420 = vunpack.c.l.b16 %v7157
    %v7421 = vunpack.c.l.b16 %v7158
    %v7422 = vunpack.c.l.b16 %v7159
    %v7423 = vunpack.c.l.b16 %v7160
    %v7424 = vunpack.c.l.b16 %v7161
    %v7425 = vunpack.c.l.b16 %v7162
    %v7426 = vunpack.c.l.b16 %v7163
    %v7427 = vunpack.c.l.b16 %v7164
    %v7428 = vunpack.c.l.b16 %v7165
    %v7429 = vunpack.c.l.b16 %v7166
    %v7430 = vunpack.c.l.b16 %v7167
    %v7431 = vunpack.c.l.b16 %v7168
    %v7432 = vunpack.c.l.b16 %v7169
    %v7433 = vunpack.c.l.b16 %v7170
    %v7434 = vunpack.c.l.b16 %v7171
    %v7435 = vunpack.c.l.b16 %v7172
    %v7436 = vunpack.c.l.b16 %v7173
    %v7437 = vunpack.c.l.b16 %v7174
    %v7438 = vunpack.c.l.b16 %v7175
    %v7439 = vunpack.c.l.b16 %v7176
    %v7440 = vunpack.c.l.b16 %v7177
    %v7441 = vunpack.c.l.b16 %v7178
    %v7442 = vunpack.c.l.b16 %v7179
    %v7443 = vunpack.c.l.b16 %v7180
    %v7444 = vunpack.c.l.b16 %v7181
    %v7445 = vunpack.c.l.b16 %v7182
    %v7446 = vunpack.c.l.b16 %v7183
    %v7447 = vunpack.c.l.b16 %v7184
    %v7448 = vunpack.c.l.b16 %v7185
    %v7449 = vunpack.c.l.b16 %v7186
    %v7450 = vunpack.c.l.b16 %v7187
    %v7451 = vunpack.c.l.b16 %v7188
    %v7452 = vunpack.c.l.b16 %v7189
    %v7453 = vunpack.c.l.b16 %v7190
    %v7454 = vunpack.c.l.b16 %v7191
    %v7455 = vunpack.c.l.b16 %v7192
    %v7456 = vunpack.c.l.b16 %v7193
    %v7457 = vunpack.c.l.b16 %v7194
    %v7458 = vunpack.c.l.b16 %v7195
    %v7459 = vunpack.c.l.b16 %v7196
    %v7460 = vunpack.c.l.b16 %v7197
    %v7461 = vunpack.c.l.b16 %v7198
    %v7462 = vunpack.c.l.b16 %v7199
    %v7463 = vunpack.c.l.b16 %v7200
    %v7464 = vunpack.c.l.b16 %v7201
    %v7465 = vunpack.c.l.b16 %v7202
    %v7466 = vunpack.c.l.b16 %v7203
    %v7467 = vunpack.c.l.b16 %v7204
    %v7468 = vunpack.c.l.b16 %v7205
    %v7469 = vunpack.c.l.b16 %v7206
    %v7470 = vunpack.c.l.b16 %v7207
    %v7471 = vunpack.c.l.b16 %v7208
    %v7472 = vunpack.c.l.b16 %v7209
    %v7473 = vunpack.c.l.b16 %v7210
    %v7474 = vunpack.c.l.b16 %v7211
    %v7475 = vunpack.c.l.b16 %v7212
    %v7476 = vunpack.c.l.b16 %v7213
    %v7477 = vunpack.c.l.b16 %v7214
    %v7478 = vunpack.c.l.b16 %v7215
    %v7479 = vunpack.c.l.b16 %v7216
    %v7480 = vunpack.c.l.b16 %v7217
    %v7481 = vunpack.c.l.b16 %v7218
    %v7482 = vunpack.c.l.b16 %v7219
    %v7483 = vunpack.c.l.b16 %v7220
    %v7484 = vunpack.c.l.b16 %v7221
    %v7485 = vunpack.c.l.b16 %v7222
    %v7486 = vunpack.c.l.b16 %v7223
    %v7487 = vunpack.c.l.b16 %v7224
    %v7488 = vunpack.c.l.b16 %v7225
    %v7489 = vunpack.c.l.b16 %v7226
    %v7490 = vunpack.c.l.b16 %v7227
    %v7491 = vunpack.c.l.b16 %v7228
    %v7492 = vunpack.c.l.b16 %v7229
    %v7493 = vunpack.c.l.b16 %v7230
    %v7494 = vunpack.c.l.b16 %v7231
    %v7495 = vunpack.c.l.b16 %v7232
    %v7496 = vunpack.c.l.b16 %v7233
    %v7497 = vunpack.c.l.b16 %v7234
    %v7498 = vunpack.c.l.b16 %v7235
    %v7499 = vunpack.c.l.b16 %v7236
    %v7500 = vunpack.c.l.b16 %v7237
    %v7501 = vunpack.c.l.b16 %v7238
    %v7502 = vunpack.c.l.b16 %v7239
    %v7503 = vunpack.c.l.b16 %v7240
    %v7504 = vunpack.c.l.b16 %v7241
    %v7505 = vunpack.c.l.b16 %v7242
    %v7506 = vunpack.c.l.b16 %v7243
    %v7507 = vunpack.c.l.b16 %v7244
    %v7508 = vunpack.c.l.b16 %v7245
    %v7509 = vunpack.c.l.b16 %v7246
    %v7510 = vunpack.c.l.b16 %v7247
    %v7511 = vunpack.c.l.b16 %v7248
    %v7512 = vpack.c.b16 %v7385, %v7384
    %v7513 = vpack.c.b16 %v7387, %v7386
    %v7514 = vpack.c.b16 %v7389, %v7388
    %v7515 = vpack.c.b16 %v7391, %v7390
    %v7516 = vpack.c.b16 %v7393, %v7392
    %v7517 = vpack.c.b16 %v7395, %v7394
    %v7518 = vpack.c.b16 %v7397, %v7396
    %v7519 = vpack.c.b16 %v7399, %v7398
    %v7520 = vpack.c.b16 %v7401, %v7400
    %v7521 = vpack.c.b16 %v7403, %v7402
    %v7522 = vpack.c.b16 %v7405, %v7404
    %v7523 = vpack.c.b16 %v7407, %v7406
    %v7524 = vpack.c.b16 %v7409, %v7408
    %v7525 = vpack.c.b16 %v7411, %v7410
    %v7526 = vpack.c.b16 %v7413, %v7412
    %v7527 = vpack.c.b16 %v7415, %v7414
    %v7528 = vpack.c.b16 %v7417, %v7416
    %v7529 = vpack.c.b16 %v7419, %v7418
    %v7530 = vpack.c.b16 %v7421, %v7420
    %v7531 = vpack.c.b16 %v7423, %v7422
    %v7532 = vpack.c.b16 %v7425, %v7424
    %v7533 = vpack.c.b16 %v7427, %v7426
    %v7534 = vpack.c.b16 %v7429, %v7428
    %v7535 = vpack.c.b16 %v7431, %v7430
    %v7536 = vpack.c.b16 %v7433, %v7432
    %v7537 = vpack.c.b16 %v7435, %v7434
    %v7538 = vpack.c.b16 %v7437, %v7436
    %v7539 = vpack.c.b16 %v7439, %v7438
    %v7540 = vpack.c.b16 %v7441, %v7440
    %v7541 = vpack.c.b16 %v7443, %v7442
    %v7542 = vpack.c.b16 %v7445, %v7444
    %v7543 = vpack.c.b16 %v7447, %v7446
    %v7544 = vpack.c.b16 %v7449, %v7448
    %v7545 = vpack.c.b16 %v7451, %v7450
    %v7546 = vpack.c.b16 %v7453, %v7452
    %v7547 = vpack.c.b16 %v7455, %v7454
    %v7548 = vpack.c.b16 %v7457, %v7456
    %v7549 = vpack.c.b16 %v7459, %v7458
    %v7550 = vpack.c.b16 %v7461, %v7460
    %v7551 = vpack.c.b16 %v7463, %v7462
    %v7552 = vpack.c.b16 %v7465, %v7464
    %v7553 = vpack.c.b16 %v7467, %v7466
    %v7554 = vpack.c.b16 %v7469, %v7468
    %v7555 = vpack.c.b16 %v7471, %v7470
    %v7556 = vpack.c.b16 %v7473, %v7472
    %v7557 = vpack.c.b16 %v7475, %v7474
    %v7558 = vpack.c.b16 %v7477, %v7476
    %v7559 = vpack.c.b16 %v7479, %v7478
    %v7560 = vpack.c.b16 %v7481, %v7480
    %v7561 = vpack.c.b16 %v7483, %v7482
    %v7562 = vpack.c.b16 %v7485, %v7484
    %v7563 = vpack.c.b16 %v7487, %v7486
    %v7564 = vpack.c.b16 %v7489, %v7488
    %v7565 = vpack.c.b16 %v7491, %v7490
    %v7566 = vpack.c.b16 %v7493, %v7492
    %v7567 = vpack.c.b16 %v7495, %v7494
    %v7568 = vpack.c.b16 %v7497, %v7496
    %v7569 = vpack.c.b16 %v7499, %v7498
    %v7570 = vpack.c.b16 %v7501, %v7500
    %v7571 = vpack.c.b16 %v7503, %v7502
    %v7572 = vpack.c.b16 %v7505, %v7504
    %v7573 = vpack.c.b16 %v7507, %v7506
    %v7574 = vpack.c.b16 %v7509, %v7508
    %v7575 = vpack.c.b16 %v7511, %v7510
    %7640 = vmatprep.subr.bf16.mxu0 0
    %7641 = vmatpush1.bf16.msra.mxu0 %v7519
    %7642 = vmatprep.subr.bf16.mxu0 0
    %7643 = vmatpush1.bf16.msra.mxu0 %v7518
    %7644 = vmatprep.subr.bf16.mxu0 0
    %7645 = vmatpush1.bf16.msra.mxu0 %v7517
    %7646 = vmatprep.subr.bf16.mxu0 0
    %7647 = vmatpush1.bf16.msra.mxu0 %v7516
    %7648 = vmatprep.subr.bf16.mxu0 0
    %7649 = vmatpush1.bf16.msra.mxu0 %v7515
    %7650 = vmatprep.subr.bf16.mxu0 0
    %7651 = vmatpush1.bf16.msra.mxu0 %v7514
    %7652 = vmatprep.subr.bf16.mxu0 0
    %7653 = vmatpush1.bf16.msra.mxu0 %v7513
    %7654 = vmatprep.subr.bf16.mxu0 0
    %7655 = vmatpush1.bf16.msra.mxu0 %v7512
    %7656 = vmatprep.subr.bf16.mxu0 0
    %7657 = vmatpush2.bf16.msra.mxu0 %v7527
    %7658 = vmatprep.subr.bf16.mxu0 0
    %7659 = vmatpush2.bf16.msra.mxu0 %v7526
    %7660 = vmatprep.subr.bf16.mxu0 0
    %7661 = vmatpush2.bf16.msra.mxu0 %v7525
    %7662 = vmatprep.subr.bf16.mxu0 0
    %7663 = vmatpush2.bf16.msra.mxu0 %v7524
    %7664 = vmatprep.subr.bf16.mxu0 0
    %7665 = vmatpush2.bf16.msra.mxu0 %v7523
    %7666 = vmatprep.subr.bf16.mxu0 0
    %7667 = vmatpush2.bf16.msra.mxu0 %v7522
    %7668 = vmatprep.subr.bf16.mxu0 0
    %7669 = vmatpush2.bf16.msra.mxu0 %v7521
    %7670 = vmatprep.subr.bf16.mxu0 0
    %7671 = vmatpush2.bf16.msra.mxu0 %v7520
    %7672 = vmatprep.mubr.bf16.mxu0 %v7114
    %7673 = vmatmul.mubr.bf16.gmra.mxu0 %v7113
    %v7674 = vpop.f32.mrf.mxu0
    %v7675 = vadd.f32 %v7254, %v7674
    %v7676 = vpop.f32.mrf.mxu0
    %v7677 = vpop.f32.mrf.mxu0
    %v7678 = vpop.f32.mrf.mxu0
    %7679 = vdwg.mxu0
    %7680 = vmatprep.subr.bf16.mxu0 0
    %7681 = vmatpush1.bf16.msra.mxu0 %v7535
    %7682 = vmatprep.subr.bf16.mxu0 0
    %7683 = vmatpush1.bf16.msra.mxu0 %v7534
    %7684 = vmatprep.subr.bf16.mxu0 0
    %7685 = vmatpush1.bf16.msra.mxu0 %v7533
    %7686 = vmatprep.subr.bf16.mxu0 0
    %7687 = vmatpush1.bf16.msra.mxu0 %v7532
    %7688 = vmatprep.subr.bf16.mxu0 0
    %7689 = vmatpush1.bf16.msra.mxu0 %v7531
    %7690 = vmatprep.subr.bf16.mxu0 0
    %7691 = vmatpush1.bf16.msra.mxu0 %v7530
    %7692 = vmatprep.subr.bf16.mxu0 0
    %7693 = vmatpush1.bf16.msra.mxu0 %v7529
    %7694 = vmatprep.subr.bf16.mxu0 0
    %7695 = vmatpush1.bf16.msra.mxu0 %v7528
    %7696 = vmatprep.subr.bf16.mxu0 0
    %7697 = vmatpush2.bf16.msra.mxu0 %v7543
    %7698 = vmatprep.subr.bf16.mxu0 0
    %7699 = vmatpush2.bf16.msra.mxu0 %v7542
    %7700 = vmatprep.subr.bf16.mxu0 0
    %7701 = vmatpush2.bf16.msra.mxu0 %v7541
    %7702 = vmatprep.subr.bf16.mxu0 0
    %7703 = vmatpush2.bf16.msra.mxu0 %v7540
    %7704 = vmatprep.subr.bf16.mxu0 0
    %7705 = vmatpush2.bf16.msra.mxu0 %v7539
    %7706 = vmatprep.subr.bf16.mxu0 0
    %7707 = vmatpush2.bf16.msra.mxu0 %v7538
    %7708 = vmatprep.subr.bf16.mxu0 0
    %7709 = vmatpush2.bf16.msra.mxu0 %v7537
    %7710 = vmatprep.subr.bf16.mxu0 0
    %7711 = vmatpush2.bf16.msra.mxu0 %v7536
    %7712 = vmatprep.mubr.bf16.mxu0 %v7116
    %7713 = vmatmul.mubr.bf16.gmra.mxu0 %v7115
    %v7714 = vpop.f32.mrf.mxu0
    %v7715 = vadd.f32 %v7675, %v7714
    %v7716 = vpop.f32.mrf.mxu0
    %v7717 = vpop.f32.mrf.mxu0
    %v7718 = vpop.f32.mrf.mxu0
    %7719 = vdwg.mxu0
    %7720 = vmatprep.subr.bf16.mxu0 0
    %7721 = vmatpush1.bf16.msra.mxu0 %v7551
    %7722 = vmatprep.subr.bf16.mxu0 0
    %7723 = vmatpush1.bf16.msra.mxu0 %v7550
    %7724 = vmatprep.subr.bf16.mxu0 0
    %7725 = vmatpush1.bf16.msra.mxu0 %v7549
    %7726 = vmatprep.subr.bf16.mxu0 0
    %7727 = vmatpush1.bf16.msra.mxu0 %v7548
    %7728 = vmatprep.subr.bf16.mxu0 0
    %7729 = vmatpush1.bf16.msra.mxu0 %v7547
    %7730 = vmatprep.subr.bf16.mxu0 0
    %7731 = vmatpush1.bf16.msra.mxu0 %v7546
    %7732 = vmatprep.subr.bf16.mxu0 0
    %7733 = vmatpush1.bf16.msra.mxu0 %v7545
    %7734 = vmatprep.subr.bf16.mxu0 0
    %7735 = vmatpush1.bf16.msra.mxu0 %v7544
    %7736 = vmatprep.subr.bf16.mxu0 0
    %7737 = vmatpush2.bf16.msra.mxu0 %v7559
    %7738 = vmatprep.subr.bf16.mxu0 0
    %7739 = vmatpush2.bf16.msra.mxu0 %v7558
    %7740 = vmatprep.subr.bf16.mxu0 0
    %7741 = vmatpush2.bf16.msra.mxu0 %v7557
    %7742 = vmatprep.subr.bf16.mxu0 0
    %7743 = vmatpush2.bf16.msra.mxu0 %v7556
    %7744 = vmatprep.subr.bf16.mxu0 0
    %7745 = vmatpush2.bf16.msra.mxu0 %v7555
    %7746 = vmatprep.subr.bf16.mxu0 0
    %7747 = vmatpush2.bf16.msra.mxu0 %v7554
    %7748 = vmatprep.subr.bf16.mxu0 0
    %7749 = vmatpush2.bf16.msra.mxu0 %v7553
    %7750 = vmatprep.subr.bf16.mxu0 0
    %7751 = vmatpush2.bf16.msra.mxu0 %v7552
    %7752 = vmatprep.mubr.bf16.mxu0 %v7118
    %7753 = vmatmul.mubr.bf16.gmra.mxu0 %v7117
    %v7754 = vpop.f32.mrf.mxu0
    %v7755 = vadd.f32 %v7715, %v7754
    %v7756 = vpop.f32.mrf.mxu0
    %v7757 = vpop.f32.mrf.mxu0
    %v7758 = vpop.f32.mrf.mxu0
    %7759 = vdwg.mxu0
    %7760 = vmatprep.subr.bf16.mxu0 0
    %7761 = vmatpush1.bf16.msra.mxu0 %v7567
    %7762 = vmatprep.subr.bf16.mxu0 0
    %7763 = vmatpush1.bf16.msra.mxu0 %v7566
    %7764 = vmatprep.subr.bf16.mxu0 0
    %7765 = vmatpush1.bf16.msra.mxu0 %v7565
    %7766 = vmatprep.subr.bf16.mxu0 0
    %7767 = vmatpush1.bf16.msra.mxu0 %v7564
    %7768 = vmatprep.subr.bf16.mxu0 0
    %7769 = vmatpush1.bf16.msra.mxu0 %v7563
    %7770 = vmatprep.subr.bf16.mxu0 0
    %7771 = vmatpush1.bf16.msra.mxu0 %v7562
    %7772 = vmatprep.subr.bf16.mxu0 0
    %7773 = vmatpush1.bf16.msra.mxu0 %v7561
    %7774 = vmatprep.subr.bf16.mxu0 0
    %7775 = vmatpush1.bf16.msra.mxu0 %v7560
    %7776 = vmatprep.subr.bf16.mxu0 0
    %7777 = vmatpush2.bf16.msra.mxu0 %v7575
    %7778 = vmatprep.subr.bf16.mxu0 0
    %7779 = vmatpush2.bf16.msra.mxu0 %v7574
    %7780 = vmatprep.subr.bf16.mxu0 0
    %7781 = vmatpush2.bf16.msra.mxu0 %v7573
    %7782 = vmatprep.subr.bf16.mxu0 0
    %7783 = vmatpush2.bf16.msra.mxu0 %v7572
    %7784 = vmatprep.subr.bf16.mxu0 0
    %7785 = vmatpush2.bf16.msra.mxu0 %v7571
    %7786 = vmatprep.subr.bf16.mxu0 0
    %7787 = vmatpush2.bf16.msra.mxu0 %v7570
    %7788 = vmatprep.subr.bf16.mxu0 0
    %7789 = vmatpush2.bf16.msra.mxu0 %v7569
    %7790 = vmatprep.subr.bf16.mxu0 0
    %7791 = vmatpush2.bf16.msra.mxu0 %v7568
    %7792 = vmatprep.mubr.bf16.mxu0 %v7120
    %7793 = vmatmul.mubr.bf16.gmra.mxu0 %v7119
    %v7794 = vpop.f32.mrf.mxu0
    %v7795 = vadd.f32 %v7755, %v7794
    %v7796 = vpop.f32.mrf.mxu0
    %v7797 = vpop.f32.mrf.mxu0
    %v7798 = vpop.f32.mrf.mxu0
    %7799 = vdwg.mxu0
    %vm7800 = vcmp.gt.f32.partialorder %v7795, 0.0
    %v7801 = vmul.f32 %v7795, 0.01
    %v7802 = vsel %vm7800, %v7795, %v7801
    %7803 = vst [vmem:[#allocation11] sm:$0xff] %v7802
    // Predicated region
    $region42: #{tpu_custom_call.1} parent=1 // pred_check
      _
    $region43: #{tpu_custom_call.1} parent=1 // pred_check_branch
      %7805 = sbr.rel (0) target = $region45
    $region44: #{tpu_custom_call.1} parent=1 // pred_region
      %s7807 = ssub.s32 128, 128
      %7808 = vsyncadd [#allocation4], %s7807
      %s7810 = sshll.u32 [#allocation11], 4
      %s7811 = int_to_ptr.vmem [resolvable:$true] %s7810
      %7813 = dma.vmem_to_hbm [thread:$0]  %s7811, 128, %s5, [#allocation4]
    $region45: #{tpu_custom_call.1} parent=1 // pred_fallthru
      _
    // Predicated region
    $region46: #{tpu_custom_call.1} parent=1 // pred_check
      _
    $region47: #{tpu_custom_call.1} parent=1 // pred_check_branch
      %7815 = sbr.rel (0) target = $region49
    $region48: #{tpu_custom_call.1} parent=1 // pred_region
      %7816 = dma.done [#allocation4], 128
    $region49: #{tpu_custom_call.1} parent=1 // pred_fallthru
      _
    %7817 = vsyncpa [#allocation3], 1
    %7818 = vsyncpa [#allocation6], 1
    %7819 = vsyncpa [#allocation9], 1
    %7820 = vsyncpa [#allocation4], 1

</llo_original>
